<compile_context>
chip_gen: v5e
topology: v5e:2x2
jax: 0.10.0
libtpu: 0.0.40
codegen_flags: <defaults>
</compile_context>

<pallas_src>
import math

import jax
import jax.numpy as jnp
from jax.experimental import pallas as pl
from jax.experimental.pallas import tpu as pltpu


_EPI_SUB_N = 128   # rows per GRU-epilogue sub-tile (keeps live state small)
_LANE = 128


def _round_up(x, m):
    return (x + m - 1) // m * m


def _pick_tile(total, want):
    """Largest multiple of 128 that divides `total` and is <= `want`."""
    t = min(want, total)
    t = max((t // _LANE) * _LANE, _LANE)
    while total % t != 0:
        t -= _LANE
    return t


def _vmem_capacity_bytes():
    try:
        return int(pltpu.get_tpu_info().vmem_capacity_bytes)
    except Exception:
        return 64 << 20   # conservative fallback (v7x has 64 MiB per TensorCore)


def _pad_gate_matrix(w, rows_p, Hp):
    """Pad a [rows, 3H] GRU weight/bias to [rows_p, 3*Hp]; each (r, z, n) gate
    block is zero-padded and re-aligned to a multiple-of-128 boundary."""
    rows, three_h = w.shape
    H = three_h // 3
    out = jnp.zeros((rows_p, 3 * Hp), w.dtype)
    for g in range(3):
        out = out.at[:rows, g * Hp:g * Hp + H].set(w[:, g * H:(g + 1) * H])
    return out


# ----------------------------------------------------------------------------
# Shared GRU epilogue (one row sub-tile).
# ----------------------------------------------------------------------------
def _gru_seq_sum(res_list, w_ih, w_hh, b_ih, b_hh):
    """GRU (PyTorch gate order r, z, n) over the K-step diffusion sequence of one
    row sub-tile; returns sum_k h_k  (== torch.sum(gru_output, dim=1)).

    res_list: K arrays [n, Dp] f32, res_k = adj_k @ x for this sub-tile (NOT cumulative).
    w_ih: [Dp, 3*Hp] bf16, w_hh: [Hp, 3*Hp] bf16, b_ih / b_hh: [1, 3*Hp] f32.
    """
    K = len(res_list)
    n = res_list[0].shape[0]
    Hp = w_hh.shape[0]

    # hx_k = relu(res_0 + ... + res_k).  The input projection gi_k does not depend
    # on the recurrent state, so batch all K steps into one tall MXU op.
    hx = []
    cum = res_list[0]
    hx.append(jnp.maximum(cum, 0.0))
    for k in range(1, K):
        cum = cum + res_list[k]
        hx.append(jnp.maximum(cum, 0.0))
    hx_all = jnp.concatenate(hx, axis=0).astype(jnp.bfloat16)            # [K*n, Dp]
    gi_all = jnp.dot(hx_all, w_ih, preferred_element_type=jnp.float32) + b_ih

    h = jnp.zeros((n, Hp), jnp.float32)
    acc = jnp.zeros((n, Hp), jnp.float32)
    for k in range(K):
        gi = gi_all[k * n:(k + 1) * n, :]
        gh = jnp.dot(h.astype(jnp.bfloat16), w_hh,
                     preferred_element_type=jnp.float32) + b_hh          # (1,3Hp) bias: sublane bcast
        r = jax.nn.sigmoid(gi[:, 0:Hp] + gh[:, 0:Hp])
        z = jax.nn.sigmoid(gi[:, Hp:2 * Hp] + gh[:, Hp:2 * Hp])
        ng = jnp.tanh(gi[:, 2 * Hp:3 * Hp] + r * gh[:, 2 * Hp:3 * Hp])
        h = (1.0 - z) * ng + z * h
        acc = acc + h
    return acc


# ----------------------------------------------------------------------------
# Path 1: fully fused CDN (adjacency + activations resident in VMEM).
# ----------------------------------------------------------------------------
def _cdn_fused_kernel(adj_hbm, x0_hbm, w_ih_ref, w_hh_ref, b_ih_ref, b_hh_ref,
                      out_ref, adj_vmem, act_in, act_out):
    layer = pl.program_id(0)
    n_layers = pl.num_programs(0)
    K = adj_vmem.shape[0]
    Np = adj_vmem.shape[1]

    # One-time prime: adjacency + initial features into resident VMEM scratch.
    @pl.when(layer == 0)
    def _prime():
        pltpu.sync_copy(adj_hbm, adj_vmem)
        pltpu.sync_copy(x0_hbm, act_in)

    w_ih = w_ih_ref[0]          # [Fp, 3*Fp] bf16 (this layer's weights)
    w_hh = w_hh_ref[0]
    b_ih = b_ih_ref[0]          # [1, 3*Fp] f32
    b_hh = b_hh_ref[0]

    @pl.loop(0, Np // _EPI_SUB_N)
    def _row_tile(s):
        r0 = pl.multiple_of(s * _EPI_SUB_N, _EPI_SUB_N)
        x_in = act_in[...]                                               # [Np, Fp] bf16
        res_list = [
            jnp.dot(adj_vmem[k, pl.ds(r0, _EPI_SUB_N), :], x_in,
                    preferred_element_type=jnp.float32)
            for k in range(K)
        ]
        acc = _gru_seq_sum(res_list, w_ih, w_hh, b_ih, b_hh)             # [sub, Fp] f32
        act_out[pl.ds(r0, _EPI_SUB_N), :] = acc.astype(jnp.bfloat16)

        @pl.when(layer == n_layers - 1)
        def _final():
            out_ref[pl.ds(r0, _EPI_SUB_N), :] = acc

    # This layer's output becomes the next layer's input (cheap VMEM->VMEM move).
    act_in[...] = act_out[...]


def _fused_vmem_bytes(K, Np, Fp):
    adj = K * Np * Np * 2                       # resident adjacency (bf16, single copy)
    act = 2 * Np * Fp * 2                       # ping/pong activations (bf16)
    out = 2 * Np * Fp * 4                       # output block (f32, double-buffered)
    wts = 2 * 2 * Fp * 3 * Fp * 2               # w_ih + w_hh (bf16, double-buffered)
    bias = 2 * 2 * 3 * Fp * 4
    tmp = (K * _EPI_SUB_N * 3 * Fp * 4          # gi_all
           + K * _EPI_SUB_N * Fp * (4 + 2)      # cumulative hx (f32) + hx_all (bf16)
           + 10 * _EPI_SUB_N * Fp * 4)          # gates / h / acc
    return adj + act + out + wts + bias + tmp


def _cdn_fused(x, adj, params, *, vmem_cap):
    N, D = x.shape
    K = adj.shape[0]
    n_layers = len(params)
    out_dim = params[-1][1].shape[0]

    dims = [D] + [p[1].shape[0] for p in params]
    Fp = _round_up(max(dims), _LANE)            # common padded feature width
    Np = _round_up(N, _EPI_SUB_N)

    # Stacked, gate-aligned, bf16 per-layer weights (biases stay f32).
    w_ih_all = jnp.stack(
        [_pad_gate_matrix(p[0], Fp, Fp).astype(jnp.bfloat16) for p in params])
    w_hh_all = jnp.stack(
        [_pad_gate_matrix(p[1], Fp, Fp).astype(jnp.bfloat16) for p in params])
    b_ih_all = jnp.stack([_pad_gate_matrix(p[2], 1, Fp) for p in params])
    b_hh_all = jnp.stack([_pad_gate_matrix(p[3], 1, Fp) for p in params])

    adj_p = (jnp.zeros((K, Np, Np), jnp.bfloat16)
             .at[:, :N, :N].set(adj.astype(jnp.bfloat16)))
    x0_p = (jnp.zeros((Np, Fp), jnp.bfloat16)
            .at[:N, :D].set(x.astype(jnp.bfloat16)))

    vmem_limit = int(min(max(_fused_vmem_bytes(K, Np, Fp) + (6 << 20), 32 << 20),
                         int(0.75 * vmem_cap)))

    out = pl.pallas_call(
        _cdn_fused_kernel,
        out_shape=jax.ShapeDtypeStruct((Np, Fp), jnp.float32),
        grid_spec=pltpu.PrefetchScalarGridSpec(
            num_scalar_prefetch=0,
            grid=(n_layers,),
            in_specs=[
                pl.BlockSpec(memory_space=pl.ANY),                    # adj (stays in HBM)
                pl.BlockSpec(memory_space=pl.ANY),                    # x0  (stays in HBM)
                pl.BlockSpec((1, Fp, 3 * Fp), lambda l: (l, 0, 0)),   # w_ih[l]
                pl.BlockSpec((1, Fp, 3 * Fp), lambda l: (l, 0, 0)),   # w_hh[l]
                pl.BlockSpec((1, 1, 3 * Fp), lambda l: (l, 0, 0)),    # b_ih[l]
                pl.BlockSpec((1, 1, 3 * Fp), lambda l: (l, 0, 0)),    # b_hh[l]
            ],
            out_specs=pl.BlockSpec((Np, Fp), lambda l: (0, 0)),
            scratch_shapes=[
                pltpu.VMEM((K, Np, Np), jnp.bfloat16),   # resident adjacency
                pltpu.VMEM((Np, Fp), jnp.bfloat16),      # activation (layer input)
                pltpu.VMEM((Np, Fp), jnp.bfloat16),      # activation (layer output)
            ],
        ),
        compiler_params=pltpu.CompilerParams(
            # Layers are strictly sequential; the whole grid runs on one core
            # because the inter-layer activation lives in per-core scratch.
            dimension_semantics=("arbitrary",),
            vmem_limit_bytes=vmem_limit,
        ),
    )(adj_p, x0_p, w_ih_all, w_hh_all, b_ih_all, b_hh_all)

    return out[:N, :out_dim]


# ----------------------------------------------------------------------------
# Path 2: streaming fallback (one pallas_call per layer, adjacency from HBM).
# ----------------------------------------------------------------------------
def _stream_layer_kernel(adj_ref, x_ref, w_ih_ref, w_hh_ref, b_ih_ref, b_hh_ref,
                         out_ref, res_ref):
    # grid = (row tiles, contraction chunks).  The contraction axis MUST stay the
    # innermost ("arbitrary") grid axis: res_ref accumulates across it and is
    # re-initialised at c == 0 / consumed at c == last for every row tile.
    K = adj_ref.shape[0]
    tile_n = adj_ref.shape[1]
    tile_c = adj_ref.shape[2]
    c = pl.program_id(1)

    @pl.when(c == 0)
    def _init():
        res_ref[...] = jnp.zeros_like(res_ref)

    # K partial diffusion matmuls for this contraction chunk (bf16 in, f32 acc).
    c0 = pl.multiple_of(c * tile_c, tile_c)
    x_chunk = x_ref[pl.ds(c0, tile_c), :]              # x is VMEM-resident; slice it
    for k in range(K):
        res_ref[k] = res_ref[k] + jnp.dot(adj_ref[k], x_chunk,
                                          preferred_element_type=jnp.float32)

    @pl.when(c == pl.num_programs(1) - 1)
    def _epilogue():
        w_ih = w_ih_ref[...]
        w_hh = w_hh_ref[...]
        b_ih = b_ih_ref[...]
        b_hh = b_hh_ref[...]
        # Row sub-tiling keeps the GRU recurrence's live state small; the
        # sub-tile count is tiny so a static unrolled loop is fine here.
        for s in range(tile_n // _EPI_SUB_N):
            r0 = s * _EPI_SUB_N
            res_list = [res_ref[k, r0:r0 + _EPI_SUB_N, :] for k in range(K)]
            acc = _gru_seq_sum(res_list, w_ih, w_hh, b_ih, b_hh)
            out_ref[r0:r0 + _EPI_SUB_N, :] = acc


def _core_diffusion_streaming(x, adj_p, layer_params, *, tile_n, tile_c, vmem_cap):
    """One CoreDiffusion layer, adjacency streamed from HBM per layer."""
    w_ih, w_hh, b_ih, b_hh = layer_params
    N, D = x.shape
    K, Np, _ = adj_p.shape
    H = w_hh.shape[0]
    Dp = _round_up(D, _LANE)
    Hp = _round_up(H, _LANE)

    assert Np % tile_n == 0 and Np % tile_c == 0
    assert tile_n % _EPI_SUB_N == 0

    x_p = (jnp.zeros((Np, Dp), jnp.bfloat16)
           .at[:N, :D].set(x.astype(jnp.bfloat16)))
    w_ih_p = _pad_gate_matrix(w_ih, Dp, Hp).astype(jnp.bfloat16)
    w_hh_p = _pad_gate_matrix(w_hh, Hp, Hp).astype(jnp.bfloat16)
    b_ih_p = _pad_gate_matrix(b_ih, 1, Hp)
    b_hh_p = _pad_gate_matrix(b_hh, 1, Hp)

    grid = (Np // tile_n, Np // tile_c)

    budget = (2 * K * tile_n * tile_c * 2        # adj blocks (bf16, double-buffered)
              + 2 * Np * Dp * 2                  # resident x (bf16)
              + 2 * (Dp + Hp) * 3 * Hp * 2       # GRU weights (bf16)
              + 4 * 3 * Hp * 4                   # biases (f32)
              + 2 * tile_n * Hp * 4              # output tile (f32)
              + K * tile_n * Dp * 4              # res scratch (f32)
              + K * _EPI_SUB_N * (3 * Hp + Dp) * 4
              + 10 * _EPI_SUB_N * Hp * 4)        # epilogue temporaries
    vmem_limit = int(min(max(budget + (6 << 20), 32 << 20), int(0.75 * vmem_cap)))

    out = pl.pallas_call(
        _stream_layer_kernel,
        out_shape=jax.ShapeDtypeStruct((Np, Hp), jnp.float32),
        grid_spec=pltpu.PrefetchScalarGridSpec(
            num_scalar_prefetch=0,
            grid=grid,
            in_specs=[
                pl.BlockSpec((K, tile_n, tile_c), lambda i, c: (0, i, c)),  # adj
                pl.BlockSpec((Np, Dp), lambda i, c: (0, 0)),       # x (resident)
                pl.BlockSpec((Dp, 3 * Hp), lambda i, c: (0, 0)),   # W_ih^T
                pl.BlockSpec((Hp, 3 * Hp), lambda i, c: (0, 0)),   # W_hh^T
                pl.BlockSpec((1, 3 * Hp), lambda i, c: (0, 0)),    # b_ih
                pl.BlockSpec((1, 3 * Hp), lambda i, c: (0, 0)),    # b_hh
            ],
            out_specs=pl.BlockSpec((tile_n, Hp), lambda i, c: (i, 0)),
            scratch_shapes=[
                pltpu.VMEM((K, tile_n, Dp), jnp.float32),  # per-core partial res
            ],
        ),
        compiler_params=pltpu.CompilerParams(
            dimension_semantics=("parallel", "arbitrary"),
            vmem_limit_bytes=vmem_limit,
        ),
    )(adj_p, x_p, w_ih_p, w_hh_p, b_ih_p, b_hh_p)

    return out[:N, :H]


# ----------------------------------------------------------------------------
# Top-level CDN forward.
# ----------------------------------------------------------------------------
def cdn_forward(x, adj, params, *, tile_n=512, tile_c=1024, force_streaming=False):
    """CDN forward.  x: [N, D] f32, adj: [K, N, N] f32 -> [N, output_dim] f32."""
    N = x.shape[0]
    K = adj.shape[0]
    vmem_cap = _vmem_capacity_bytes()

    # Fused path whenever the adjacency (+activations) fits in VMEM; gate on the
    # actual capacity (64 MiB/TC on v7x, 128 MiB on v5e/v6e).
    dims = [x.shape[1]] + [p[1].shape[0] for p in params]
    Fp = _round_up(max(dims), _LANE)
    Np_f = _round_up(N, _EPI_SUB_N)
    fused_fits = (_fused_vmem_bytes(K, Np_f, Fp) + (6 << 20)
                  <= int(0.65 * vmem_cap))

    if fused_fits and not force_streaming:
        return _cdn_fused(x, adj, params, vmem_cap=vmem_cap)

    # Streaming fallback: pad/cast the adjacency once, re-stream it per layer.
    Np = _round_up(N, _LANE)
    tile_n = _pick_tile(Np, tile_n)
    tile_c = _pick_tile(Np, tile_c)
    adj_p = (jnp.zeros((K, Np, Np), jnp.bfloat16)
             .at[:, :N, :N].set(adj.astype(jnp.bfloat16)))
    h = x
    for layer_params in params:
        h = _core_diffusion_streaming(h, adj_p, layer_params,
                                      tile_n=tile_n, tile_c=tile_c,
                                      vmem_cap=vmem_cap)
    return h


# ----------------------------------------------------------------------------
# Parameter init (matches PyTorch nn.GRU default init range; weights stored
# pre-transposed: [D_in, 3H] / [H, 3H], gate order r, z, n).
# ----------------------------------------------------------------------------
def init_cdn_params(key, input_dim, hidden_dim, output_dim, diffusion_num, bias=True):
    if diffusion_num == 1:
        dims = [(input_dim, output_dim)]
    elif diffusion_num > 1:
        dims = ([(input_dim, hidden_dim)]
                + [(hidden_dim, hidden_dim)] * (diffusion_num - 2)
                + [(hidden_dim, output_dim)])
    else:
        raise ValueError('number of layers should be positive!')

    params = []
    for (din, dout) in dims:
        key, k1, k2, k3, k4 = jax.random.split(key, 5)
        bound = 1.0 / math.sqrt(dout)
        w_ih = jax.random.uniform(k1, (din, 3 * dout), jnp.float32, -bound, bound)
        w_hh = jax.random.uniform(k2, (dout, 3 * dout), jnp.float32, -bound, bound)
        if bias:
            b_ih = jax.random.uniform(k3, (1, 3 * dout), jnp.float32, -bound, bound)
            b_hh = jax.random.uniform(k4, (1, 3 * dout), jnp.float32, -bound, bound)
        else:
            b_ih = jnp.zeros((1, 3 * dout), jnp.float32)
            b_hh = jnp.zeros((1, 3 * dout), jnp.float32)
        params.append((w_ih, w_hh, b_ih, b_hh))
    return params


# ----------------------------------------------------------------------------
# Pure-JAX reference (mirrors the kernel's precision scheme: bf16 adjacency,
# activations and weights feeding the MXU, f32 accumulation and gate math).
# ----------------------------------------------------------------------------
def _reference_core_diffusion(x, adj, params):
    w_ih, w_hh, b_ih, b_hh = params
    H = w_hh.shape[0]
    K = adj.shape[0]
    N = x.shape[0]
    adj_bf = adj.astype(jnp.bfloat16)
    x_bf = x.astype(jnp.bfloat16)
    w_ih_bf = w_ih.astype(jnp.bfloat16)
    w_hh_bf = w_hh.astype(jnp.bfloat16)
    res = jnp.zeros((N, x.shape[1]), jnp.float32)
    h = jnp.zeros((N, H), jnp.float32)
    out = jnp.zeros((N, H), jnp.float32)
    for k in range(K):
        res = res + jnp.dot(adj_bf[k], x_bf, preferred_element_type=jnp.float32)
        hx = jnp.maximum(res, 0.0).astype(jnp.bfloat16)
        gi = jnp.dot(hx, w_ih_bf, preferred_element_type=jnp.float32) + b_ih
        gh = jnp.dot(h.astype(jnp.bfloat16), w_hh_bf,
                     preferred_element_type=jnp.float32) + b_hh
        r = jax.nn.sigmoid(gi[:, 0:H] + gh[:, 0:H])
        z = jax.nn.sigmoid(gi[:, H:2 * H] + gh[:, H:2 * H])
        n = jnp.tanh(gi[:, 2 * H:3 * H] + r * gh[:, 2 * H:3 * H])
        h = (1.0 - z) * n + z * h
        out = out + h
    return out


def _reference_cdn(x, adj, params):
    for p in params:
        x = _reference_core_diffusion(x, adj, p)
    return x


if __name__ == "__main__":
    # Small but tiling-meaningful setup: 512 nodes, 3 k-core adjacencies,
    # 3 diffusion layers (input->hidden, hidden->hidden, hidden->output).
    N = 512
    K = 3
    input_dim = 64
    hidden_dim = 128
    output_dim = 128
    diffusion_num = 3

    key = jax.random.PRNGKey(0)
    kx, kadj, kparams = jax.random.split(key, 3)

    x = jax.random.normal(kx, (N, input_dim), jnp.float32)
    # Dense (0/0.1) adjacency matrices standing in for the sparse k-core adjs.
    adj = (jax.random.uniform(kadj, (K, N, N), jnp.float32) < 0.05).astype(jnp.float32) * 0.1

    params = init_cdn_params(kparams, input_dim, hidden_dim, output_dim,
                             diffusion_num, bias=True)

    ref = jax.block_until_ready(_reference_cdn(x, adj, params))

    # Primary (fused, adjacency VMEM-resident) path.
    out_fused = jax.block_until_ready(cdn_forward(x, adj, params))
    assert out_fused.shape == (N, output_dim)
    err_f = float(jnp.max(jnp.abs(out_fused - ref)))
    assert jnp.allclose(out_fused, ref, rtol=1e-2, atol=1e-2), \
        f"fused path mismatch vs reference (max abs err {err_f})"

    # Streaming fallback path (used for graphs whose adjacency exceeds VMEM).
    out_stream = jax.block_until_ready(
        cdn_forward(x, adj, params, force_streaming=True))
    assert out_stream.shape == (N, output_dim)
    err_s = float(jnp.max(jnp.abs(out_stream - ref)))
    assert jnp.allclose(out_stream, ref, rtol=1e-2, atol=1e-2), \
        f"streaming path mismatch vs reference (max abs err {err_s})"

    print("KERNEL_OK")
</pallas_src>

<mosaic_0001>
module attributes {stable_mosaic.version = 11 : i64} {
  func.func @_cdn_fused_kernel(%arg0: i32, %arg1: memref<3x512x512xbf16, #tpu.memory_space<any>>, %arg2: memref<512x128xbf16, #tpu.memory_space<any>>, %arg3: memref<1x128x384xbf16, #tpu.memory_space<vmem>>, %arg4: memref<1x128x384xbf16, #tpu.memory_space<vmem>>, %arg5: memref<1x1x384xf32, #tpu.memory_space<vmem>>, %arg6: memref<1x1x384xf32, #tpu.memory_space<vmem>>, %arg7: memref<512x128xf32, #tpu.memory_space<vmem>>, %arg8: memref<3x512x512xbf16, #tpu.memory_space<vmem>>, %arg9: memref<512x128xbf16, #tpu.memory_space<vmem>>, %arg10: memref<512x128xbf16, #tpu.memory_space<vmem>>) attributes {dimension_semantics = [#tpu.dimension_semantics<arbitrary>], iteration_bounds = array<i64: 3>, scalar_prefetch = 0 : i64, scratch_operands = 3 : i64, tpu.core_type = #tpu.core_type<tc>, window_params = [{}, {}, {transform_indices = @transform_2, window_bounds = array<i64: 1, 128, 384>}, {transform_indices = @transform_3, window_bounds = array<i64: 1, 128, 384>}, {transform_indices = @transform_4, window_bounds = array<i64: 1, 1, 384>}, {transform_indices = @transform_5, window_bounds = array<i64: 1, 1, 384>}, {pipeline_mode = #tpu.pipeline_mode<synchronous>, transform_indices = @transform_6, window_bounds = array<i64: 512, 128>}]} {
    %c0_i32 = arith.constant 0 : i32
    %0 = arith.cmpi eq, %arg0, %c0_i32 : i32
    %1 = arith.extui %0 : i1 to i32
    %c0_i32_0 = arith.constant 0 : i32
    %2 = arith.cmpi ne, %1, %c0_i32_0 : i32
    scf.if %2 {
      "tpu.region"() ({
        %14 = tpu.sem_alloc : memref<!tpu.dma_semaphore, #tpu.memory_space<semaphore_mem>>
        tpu.enqueue_dma source(%arg1 : memref<3x512x512xbf16, #tpu.memory_space<any>>) target(%arg8 : memref<3x512x512xbf16, #tpu.memory_space<vmem>>) target_semaphore(%14 : memref<!tpu.dma_semaphore, #tpu.memory_space<semaphore_mem>>)
        tpu.wait_dma2 semaphore(%14 : memref<!tpu.dma_semaphore, #tpu.memory_space<semaphore_mem>>) src(%arg1 : memref<3x512x512xbf16, #tpu.memory_space<any>>) dst(%arg8 : memref<3x512x512xbf16, #tpu.memory_space<vmem>>)
        tpu.yield
      }) : () -> ()
      "tpu.region"() ({
        %14 = tpu.sem_alloc : memref<!tpu.dma_semaphore, #tpu.memory_space<semaphore_mem>>
        tpu.enqueue_dma source(%arg2 : memref<512x128xbf16, #tpu.memory_space<any>>) target(%arg9 : memref<512x128xbf16, #tpu.memory_space<vmem>>) target_semaphore(%14 : memref<!tpu.dma_semaphore, #tpu.memory_space<semaphore_mem>>)
        tpu.wait_dma2 semaphore(%14 : memref<!tpu.dma_semaphore, #tpu.memory_space<semaphore_mem>>) src(%arg2 : memref<512x128xbf16, #tpu.memory_space<any>>) dst(%arg9 : memref<512x128xbf16, #tpu.memory_space<vmem>>)
        tpu.yield
      }) : () -> ()
    } else {
    }
    %c0 = arith.constant 0 : index
    %c0_1 = arith.constant 0 : index
    %c0_2 = arith.constant 0 : index
    %3 = vector.load %arg3[%c0, %c0_1, %c0_2] : memref<1x128x384xbf16, #tpu.memory_space<vmem>>, vector<1x128x384xbf16>
    %4 = vector.shape_cast %3 : vector<1x128x384xbf16> to vector<128x384xbf16>
    %c0_3 = arith.constant 0 : index
    %c0_4 = arith.constant 0 : index
    %c0_5 = arith.constant 0 : index
    %5 = vector.load %arg4[%c0_3, %c0_4, %c0_5] : memref<1x128x384xbf16, #tpu.memory_space<vmem>>, vector<1x128x384xbf16>
    %6 = vector.shape_cast %5 : vector<1x128x384xbf16> to vector<128x384xbf16>
    %c0_6 = arith.constant 0 : index
    %c0_7 = arith.constant 0 : index
    %c0_8 = arith.constant 0 : index
    %7 = vector.load %arg5[%c0_6, %c0_7, %c0_8] : memref<1x1x384xf32, #tpu.memory_space<vmem>>, vector<1x1x384xf32>
    %8 = vector.shape_cast %7 : vector<1x1x384xf32> to vector<1x384xf32>
    %c0_9 = arith.constant 0 : index
    %c0_10 = arith.constant 0 : index
    %c0_11 = arith.constant 0 : index
    %9 = vector.load %arg6[%c0_9, %c0_10, %c0_11] : memref<1x1x384xf32, #tpu.memory_space<vmem>>, vector<1x1x384xf32>
    %10 = vector.shape_cast %9 : vector<1x1x384xf32> to vector<1x384xf32>
    %c0_i32_12 = arith.constant 0 : i32
    %c4_i32 = arith.constant 4 : i32
    %11 = arith.addi %c0_i32_12, %c4_i32 : i32
    %c1_i32 = arith.constant 1 : i32
    scf.for %arg11 = %c0_i32_12 to %11 step %c1_i32  : i32 {
      %c1_i32_18 = arith.constant 1 : i32
      %14 = arith.muli %arg11, %c1_i32_18 : i32
      %c0_i32_19 = arith.constant 0 : i32
      %15 = arith.addi %c0_i32_19, %14 : i32
      %c128_i32 = arith.constant 128 : i32
      %16 = arith.muli %15, %c128_i32 : i32
      %17 = tpu.assume_multiple %16, 128 : i32
      %c0_20 = arith.constant 0 : index
      %c0_21 = arith.constant 0 : index
      %18 = vector.load %arg9[%c0_20, %c0_21] : memref<512x128xbf16, #tpu.memory_space<vmem>>, vector<512x128xbf16>
      %c0_22 = arith.constant 0 : index
      %19 = arith.index_cast %17 : i32 to index
      %c0_23 = arith.constant 0 : index
      %20 = vector.load %arg8[%c0_22, %19, %c0_23] : memref<3x512x512xbf16, #tpu.memory_space<vmem>>, vector<1x128x512xbf16>
      %21 = vector.shape_cast %20 : vector<1x128x512xbf16> to vector<128x512xbf16>
      %cst = arith.constant dense<0.000000e+00> : vector<128x128xf32>
      %22 = tpu.matmul %21, %18, %cst {dimension_numbers = #tpu.dot_dimension_numbers<[1], [0], [0], [1], [0, 0, 1, 1], [], []>} : vector<128x512xbf16>, vector<512x128xbf16>, vector<128x128xf32> -> vector<128x128xf32>
      %c1 = arith.constant 1 : index
      %23 = arith.index_cast %17 : i32 to index
      %c0_24 = arith.constant 0 : index
      %24 = vector.load %arg8[%c1, %23, %c0_24] : memref<3x512x512xbf16, #tpu.memory_space<vmem>>, vector<1x128x512xbf16>
      %25 = vector.shape_cast %24 : vector<1x128x512xbf16> to vector<128x512xbf16>
      %cst_25 = arith.constant dense<0.000000e+00> : vector<128x128xf32>
      %26 = tpu.matmul %25, %18, %cst_25 {dimension_numbers = #tpu.dot_dimension_numbers<[1], [0], [0], [1], [0, 0, 1, 1], [], []>} : vector<128x512xbf16>, vector<512x128xbf16>, vector<128x128xf32> -> vector<128x128xf32>
      %c2 = arith.constant 2 : index
      %27 = arith.index_cast %17 : i32 to index
      %c0_26 = arith.constant 0 : index
      %28 = vector.load %arg8[%c2, %27, %c0_26] : memref<3x512x512xbf16, #tpu.memory_space<vmem>>, vector<1x128x512xbf16>
      %29 = vector.shape_cast %28 : vector<1x128x512xbf16> to vector<128x512xbf16>
      %cst_27 = arith.constant dense<0.000000e+00> : vector<128x128xf32>
      %30 = tpu.matmul %29, %18, %cst_27 {dimension_numbers = #tpu.dot_dimension_numbers<[1], [0], [0], [1], [0, 0, 1, 1], [], []>} : vector<128x512xbf16>, vector<512x128xbf16>, vector<128x128xf32> -> vector<128x128xf32>
      %cst_28 = arith.constant 0.000000e+00 : f32
      %31 = vector.broadcast %cst_28 : f32 to vector<128x128xf32>
      %32 = arith.maximumf %22, %31 : vector<128x128xf32>
      %33 = arith.addf %22, %26 : vector<128x128xf32>
      %cst_29 = arith.constant 0.000000e+00 : f32
      %34 = vector.broadcast %cst_29 : f32 to vector<128x128xf32>
      %35 = arith.maximumf %33, %34 : vector<128x128xf32>
      %36 = arith.addf %33, %30 : vector<128x128xf32>
      %cst_30 = arith.constant 0.000000e+00 : f32
      %37 = vector.broadcast %cst_30 : f32 to vector<128x128xf32>
      %38 = arith.maximumf %36, %37 : vector<128x128xf32>
      %39 = tpu.concatenate %32, %35, %38 in 0 : vector<128x128xf32>, vector<128x128xf32>, vector<128x128xf32> -> vector<384x128xf32>
      %40 = arith.truncf %39 : vector<384x128xf32> to vector<384x128xbf16>
      %cst_31 = arith.constant dense<0.000000e+00> : vector<384x384xf32>
      %41 = tpu.matmul %40, %4, %cst_31 {dimension_numbers = #tpu.dot_dimension_numbers<[1], [0], [0], [1], [0, 0, 1, 1], [], []>} : vector<384x128xbf16>, vector<128x384xbf16>, vector<384x384xf32> -> vector<384x384xf32>
      %42 = vector.broadcast %8 : vector<1x384xf32> to vector<384x384xf32>
      %43 = arith.addf %41, %42 : vector<384x384xf32>
      %cst_32 = arith.constant 0.000000e+00 : f32
      %44 = vector.broadcast %cst_32 : f32 to vector<128x128xf32>
      %cst_33 = arith.constant 0.000000e+00 : f32
      %45 = vector.broadcast %cst_33 : f32 to vector<128x128xf32>
      %46 = vector.extract_strided_slice %43 {offsets = [0, 0], sizes = [128, 384], strides = [1, 1]} : vector<384x384xf32> to vector<128x384xf32>
      %47 = arith.truncf %44 : vector<128x128xf32> to vector<128x128xbf16>
      %cst_34 = arith.constant dense<0.000000e+00> : vector<128x384xf32>
      %48 = tpu.matmul %47, %6, %cst_34 {dimension_numbers = #tpu.dot_dimension_numbers<[1], [0], [0], [1], [0, 0, 1, 1], [], []>} : vector<128x128xbf16>, vector<128x384xbf16>, vector<128x384xf32> -> vector<128x384xf32>
      %49 = vector.broadcast %10 : vector<1x384xf32> to vector<128x384xf32>
      %50 = arith.addf %48, %49 : vector<128x384xf32>
      %51 = vector.extract_strided_slice %46 {offsets = [0, 0], sizes = [128, 128], strides = [1, 1]} : vector<128x384xf32> to vector<128x128xf32>
      %52 = vector.extract_strided_slice %50 {offsets = [0, 0], sizes = [128, 128], strides = [1, 1]} : vector<128x384xf32> to vector<128x128xf32>
      %53 = arith.addf %51, %52 : vector<128x128xf32>
      %54 = arith.negf %53 : vector<128x128xf32>
      %55 = math.exp %54 : vector<128x128xf32>
      %cst_35 = arith.constant 1.000000e+00 : f32
      %56 = vector.broadcast %cst_35 : f32 to vector<128x128xf32>
      %57 = arith.addf %56, %55 : vector<128x128xf32>
      %58 = arith.divf %56, %57 : vector<128x128xf32>
      %59 = vector.extract_strided_slice %46 {offsets = [0, 128], sizes = [128, 128], strides = [1, 1]} : vector<128x384xf32> to vector<128x128xf32>
      %60 = vector.extract_strided_slice %50 {offsets = [0, 128], sizes = [128, 128], strides = [1, 1]} : vector<128x384xf32> to vector<128x128xf32>
      %61 = arith.addf %59, %60 : vector<128x128xf32>
      %62 = arith.negf %61 : vector<128x128xf32>
      %63 = math.exp %62 : vector<128x128xf32>
      %cst_36 = arith.constant 1.000000e+00 : f32
      %64 = vector.broadcast %cst_36 : f32 to vector<128x128xf32>
      %65 = arith.addf %64, %63 : vector<128x128xf32>
      %66 = arith.divf %64, %65 : vector<128x128xf32>
      %67 = vector.extract_strided_slice %46 {offsets = [0, 256], sizes = [128, 128], strides = [1, 1]} : vector<128x384xf32> to vector<128x128xf32>
      %68 = vector.extract_strided_slice %50 {offsets = [0, 256], sizes = [128, 128], strides = [1, 1]} : vector<128x384xf32> to vector<128x128xf32>
      %69 = arith.mulf %58, %68 : vector<128x128xf32>
      %70 = arith.addf %67, %69 : vector<128x128xf32>
      %71 = math.tanh %70 : vector<128x128xf32>
      %cst_37 = arith.constant 1.000000e+00 : f32
      %72 = vector.broadcast %cst_37 : f32 to vector<128x128xf32>
      %73 = arith.subf %72, %66 : vector<128x128xf32>
      %74 = arith.mulf %73, %71 : vector<128x128xf32>
      %75 = arith.mulf %66, %44 : vector<128x128xf32>
      %76 = arith.addf %74, %75 : vector<128x128xf32>
      %77 = arith.addf %45, %76 : vector<128x128xf32>
      %78 = vector.extract_strided_slice %43 {offsets = [128, 0], sizes = [128, 384], strides = [1, 1]} : vector<384x384xf32> to vector<128x384xf32>
      %79 = arith.truncf %76 : vector<128x128xf32> to vector<128x128xbf16>
      %cst_38 = arith.constant dense<0.000000e+00> : vector<128x384xf32>
      %80 = tpu.matmul %79, %6, %cst_38 {dimension_numbers = #tpu.dot_dimension_numbers<[1], [0], [0], [1], [0, 0, 1, 1], [], []>} : vector<128x128xbf16>, vector<128x384xbf16>, vector<128x384xf32> -> vector<128x384xf32>
      %81 = vector.broadcast %10 : vector<1x384xf32> to vector<128x384xf32>
      %82 = arith.addf %80, %81 : vector<128x384xf32>
      %83 = vector.extract_strided_slice %78 {offsets = [0, 0], sizes = [128, 128], strides = [1, 1]} : vector<128x384xf32> to vector<128x128xf32>
      %84 = vector.extract_strided_slice %82 {offsets = [0, 0], sizes = [128, 128], strides = [1, 1]} : vector<128x384xf32> to vector<128x128xf32>
      %85 = arith.addf %83, %84 : vector<128x128xf32>
      %86 = arith.negf %85 : vector<128x128xf32>
      %87 = math.exp %86 : vector<128x128xf32>
      %cst_39 = arith.constant 1.000000e+00 : f32
      %88 = vector.broadcast %cst_39 : f32 to vector<128x128xf32>
      %89 = arith.addf %88, %87 : vector<128x128xf32>
      %90 = arith.divf %88, %89 : vector<128x128xf32>
      %91 = vector.extract_strided_slice %78 {offsets = [0, 128], sizes = [128, 128], strides = [1, 1]} : vector<128x384xf32> to vector<128x128xf32>
      %92 = vector.extract_strided_slice %82 {offsets = [0, 128], sizes = [128, 128], strides = [1, 1]} : vector<128x384xf32> to vector<128x128xf32>
      %93 = arith.addf %91, %92 : vector<128x128xf32>
      %94 = arith.negf %93 : vector<128x128xf32>
      %95 = math.exp %94 : vector<128x128xf32>
      %cst_40 = arith.constant 1.000000e+00 : f32
      %96 = vector.broadcast %cst_40 : f32 to vector<128x128xf32>
      %97 = arith.addf %96, %95 : vector<128x128xf32>
      %98 = arith.divf %96, %97 : vector<128x128xf32>
      %99 = vector.extract_strided_slice %78 {offsets = [0, 256], sizes = [128, 128], strides = [1, 1]} : vector<128x384xf32> to vector<128x128xf32>
      %100 = vector.extract_strided_slice %82 {offsets = [0, 256], sizes = [128, 128], strides = [1, 1]} : vector<128x384xf32> to vector<128x128xf32>
      %101 = arith.mulf %90, %100 : vector<128x128xf32>
      %102 = arith.addf %99, %101 : vector<128x128xf32>
      %103 = math.tanh %102 : vector<128x128xf32>
      %cst_41 = arith.constant 1.000000e+00 : f32
      %104 = vector.broadcast %cst_41 : f32 to vector<128x128xf32>
      %105 = arith.subf %104, %98 : vector<128x128xf32>
      %106 = arith.mulf %105, %103 : vector<128x128xf32>
      %107 = arith.mulf %98, %76 : vector<128x128xf32>
      %108 = arith.addf %106, %107 : vector<128x128xf32>
      %109 = arith.addf %77, %108 : vector<128x128xf32>
      %110 = vector.extract_strided_slice %43 {offsets = [256, 0], sizes = [128, 384], strides = [1, 1]} : vector<384x384xf32> to vector<128x384xf32>
      %111 = arith.truncf %108 : vector<128x128xf32> to vector<128x128xbf16>
      %cst_42 = arith.constant dense<0.000000e+00> : vector<128x384xf32>
      %112 = tpu.matmul %111, %6, %cst_42 {dimension_numbers = #tpu.dot_dimension_numbers<[1], [0], [0], [1], [0, 0, 1, 1], [], []>} : vector<128x128xbf16>, vector<128x384xbf16>, vector<128x384xf32> -> vector<128x384xf32>
      %113 = vector.broadcast %10 : vector<1x384xf32> to vector<128x384xf32>
      %114 = arith.addf %112, %113 : vector<128x384xf32>
      %115 = vector.extract_strided_slice %110 {offsets = [0, 0], sizes = [128, 128], strides = [1, 1]} : vector<128x384xf32> to vector<128x128xf32>
      %116 = vector.extract_strided_slice %114 {offsets = [0, 0], sizes = [128, 128], strides = [1, 1]} : vector<128x384xf32> to vector<128x128xf32>
      %117 = arith.addf %115, %116 : vector<128x128xf32>
      %118 = arith.negf %117 : vector<128x128xf32>
      %119 = math.exp %118 : vector<128x128xf32>
      %cst_43 = arith.constant 1.000000e+00 : f32
      %120 = vector.broadcast %cst_43 : f32 to vector<128x128xf32>
      %121 = arith.addf %120, %119 : vector<128x128xf32>
      %122 = arith.divf %120, %121 : vector<128x128xf32>
      %123 = vector.extract_strided_slice %110 {offsets = [0, 128], sizes = [128, 128], strides = [1, 1]} : vector<128x384xf32> to vector<128x128xf32>
      %124 = vector.extract_strided_slice %114 {offsets = [0, 128], sizes = [128, 128], strides = [1, 1]} : vector<128x384xf32> to vector<128x128xf32>
      %125 = arith.addf %123, %124 : vector<128x128xf32>
      %126 = arith.negf %125 : vector<128x128xf32>
      %127 = math.exp %126 : vector<128x128xf32>
      %cst_44 = arith.constant 1.000000e+00 : f32
      %128 = vector.broadcast %cst_44 : f32 to vector<128x128xf32>
      %129 = arith.addf %128, %127 : vector<128x128xf32>
      %130 = arith.divf %128, %129 : vector<128x128xf32>
      %131 = vector.extract_strided_slice %110 {offsets = [0, 256], sizes = [128, 128], strides = [1, 1]} : vector<128x384xf32> to vector<128x128xf32>
      %132 = vector.extract_strided_slice %114 {offsets = [0, 256], sizes = [128, 128], strides = [1, 1]} : vector<128x384xf32> to vector<128x128xf32>
      %133 = arith.mulf %122, %132 : vector<128x128xf32>
      %134 = arith.addf %131, %133 : vector<128x128xf32>
      %135 = math.tanh %134 : vector<128x128xf32>
      %cst_45 = arith.constant 1.000000e+00 : f32
      %136 = vector.broadcast %cst_45 : f32 to vector<128x128xf32>
      %137 = arith.subf %136, %130 : vector<128x128xf32>
      %138 = arith.mulf %137, %135 : vector<128x128xf32>
      %139 = arith.mulf %130, %108 : vector<128x128xf32>
      %140 = arith.addf %138, %139 : vector<128x128xf32>
      %141 = arith.addf %109, %140 : vector<128x128xf32>
      %142 = arith.truncf %141 : vector<128x128xf32> to vector<128x128xbf16>
      %143 = arith.index_cast %17 : i32 to index
      %c0_46 = arith.constant 0 : index
      %144 = vector.load %arg10[%143, %c0_46] : memref<512x128xbf16, #tpu.memory_space<vmem>>, vector<128x128xbf16>
      tpu.vector_store %arg10[%143, %c0_46], %142 {strides = array<i32>} : memref<512x128xbf16, #tpu.memory_space<vmem>>, vector<128x128xbf16>,
      %c2_i32 = arith.constant 2 : i32
      %145 = arith.cmpi eq, %arg0, %c2_i32 : i32
      %146 = arith.extui %145 : i1 to i32
      %c0_i32_47 = arith.constant 0 : i32
      %147 = arith.cmpi ne, %146, %c0_i32_47 : i32
      scf.if %147 {
        %148 = arith.index_cast %17 : i32 to index
        %c0_48 = arith.constant 0 : index
        %149 = vector.load %arg7[%148, %c0_48] : memref<512x128xf32, #tpu.memory_space<vmem>>, vector<128x128xf32>
        tpu.vector_store %arg7[%148, %c0_48], %141 {strides = array<i32>} : memref<512x128xf32, #tpu.memory_space<vmem>>, vector<128x128xf32>,
      } else {
      }
    }
    %c4_i32_13 = arith.constant 4 : i32
    %c0_14 = arith.constant 0 : index
    %c0_15 = arith.constant 0 : index
    %12 = vector.load %arg10[%c0_14, %c0_15] : memref<512x128xbf16, #tpu.memory_space<vmem>>, vector<512x128xbf16>
    %c0_16 = arith.constant 0 : index
    %c0_17 = arith.constant 0 : index
    %13 = vector.load %arg9[%c0_16, %c0_17] : memref<512x128xbf16, #tpu.memory_space<vmem>>, vector<512x128xbf16>
    tpu.vector_store %arg9[%c0_16, %c0_17], %12 {strides = array<i32>} : memref<512x128xbf16, #tpu.memory_space<vmem>>, vector<512x128xbf16>,
    return
  }
  func.func @transform_2(%arg0: i32) -> (i32, i32, i32) {
    %c0_i32 = arith.constant 0 : i32
    %c0_i32_0 = arith.constant 0 : i32
    %c0_i32_1 = arith.constant 0 : i32
    return %arg0, %c0_i32, %c0_i32_0 : i32, i32, i32
  }
  func.func @transform_3(%arg0: i32) -> (i32, i32, i32) {
    %c0_i32 = arith.constant 0 : i32
    %c0_i32_0 = arith.constant 0 : i32
    %c0_i32_1 = arith.constant 0 : i32
    return %arg0, %c0_i32, %c0_i32_0 : i32, i32, i32
  }
  func.func @transform_4(%arg0: i32) -> (i32, i32, i32) {
    %c0_i32 = arith.constant 0 : i32
    %c0_i32_0 = arith.constant 0 : i32
    %c0_i32_1 = arith.constant 0 : i32
    return %arg0, %c0_i32, %c0_i32_0 : i32, i32, i32
  }
  func.func @transform_5(%arg0: i32) -> (i32, i32, i32) {
    %c0_i32 = arith.constant 0 : i32
    %c0_i32_0 = arith.constant 0 : i32
    %c0_i32_1 = arith.constant 0 : i32
    return %arg0, %c0_i32, %c0_i32_0 : i32, i32, i32
  }
  func.func @transform_6(%arg0: i32) -> (i32, i32) {
    %c0_i32 = arith.constant 0 : i32
    %c0_i32_0 = arith.constant 0 : i32
    %c0_i32_1 = arith.constant 0 : i32
    return %c0_i32, %c0_i32_0 : i32, i32
  }
}

</mosaic_0001>

<llo_original>
// kernel: tpu_custom_call.1
$region0: #{tpu_custom_call.1}
  #allocation0 [shape = 'u32[]', space=smem, size = 0x4, offset = 0x4, fixed_abs, tag = 'smem constant byte address 0x4 - core index']
  #allocation1 [shape = 'u32[72,128]{1,0:T(1,128)}', space=vmem, size = 0x9000, scoped, tag = 'internal scratch']
  #allocation2 [shape = 'bf16[3,512,512]{2,1,0:T(8,128)(2,1)}', space=vmem, size = 0x180000, scoped, tag = 'scratch operand']
  #allocation3 [shape = 'bf16[512,128]{1,0:T(8,128)(2,1)}', space=vmem, size = 0x20000, scoped, tag = 'scratch operand']
  #allocation4 [shape = 'bf16[512,128]{1,0:T(8,128)(2,1)}', space=vmem, size = 0x20000, scoped, tag = 'scratch operand']
  #allocation15 [shape = 's32[]', space=sflag, size = 0x4, offset = 0, fixed_abs, tag = 'sflag constant byte address 0x0 - dummy sync flag']
  #allocation16 [shape = 's32[]', space=sflag, size = 0x4, offset = 0, fixed_abs, tag = 'sflag constant byte address 0x0 - dummy sync flag']
  #allocation17 [shape = 'u32[]', space=smem, size = 0x4, offset = 0x44, fixed_abs, tag = 'smem constant byte address 0x44 - assertion arg 0']
  #allocation18 [shape = 'u32[]', space=smem, size = 0x4, offset = 0x48, fixed_abs, tag = 'smem constant byte address 0x48 - assertion arg 1']
  #allocation20 [shape = 's32[]', space=sflag, size = 0x4, offset = 0, fixed_abs, tag = 'sflag constant byte address 0x0 - dummy sync flag']
  #allocation21 [shape = 's32[]', space=sflag, size = 0x4, offset = 0, fixed_abs, tag = 'sflag constant byte address 0x0 - dummy sync flag']
  %s0 = inlined_call_operand.hbm [shape: bf16[3,512,512], index: 0, kind: input, shape index: {}]
  %s1 = inlined_call_operand.hbm [shape: bf16[512,128], index: 1, kind: input, shape index: {}]
  %s2 = inlined_call_operand.hbm [shape: bf16[3,128,384], index: 2, kind: input, shape index: {}]
  %s3 = inlined_call_operand.hbm [shape: bf16[3,128,384], index: 3, kind: input, shape index: {}]
  %s4 = inlined_call_operand.hbm [shape: f32[3,1,384], index: 4, kind: input, shape index: {}]
  %s5 = inlined_call_operand.hbm [shape: f32[3,1,384], index: 5, kind: input, shape index: {}]
  %s6 = inlined_call_operand.hbm [shape: f32[512,128], index: 6, kind: output, shape index: {}]
  %s7 = sld [smem:[#allocation0]]
  $region90: #{tpu_custom_call.1} parent=0
    _
  %s9 = ssub.s32 1, %s7
  %s10 = scalar_select 0, %s9, %s7
  $region1: #{tpu_custom_call.1} parent=0
    #allocation5 [shape = 'u8[196608]{0}', space=vmem, size = 0x30000, scoped, tag = 'input window, operand 2']
    #allocation6 [shape = 's32[2]{0}', space=sflag, size = 0x8, scoped, tag = 'scoped memory for tpu_custom_call.1']
    #allocation7 [shape = 's32[2]{0}', space=sflag, size = 0x8, scoped, tag = 'scoped memory for tpu_custom_call.1']
    #allocation8 [shape = 'u8[196608]{0}', space=vmem, size = 0x30000, scoped, tag = 'input window, operand 3']
    #allocation9 [shape = 's32[2]{0}', space=sflag, size = 0x8, scoped, tag = 'scoped memory for tpu_custom_call.1']
    #allocation10 [shape = 'u8[3072]{0}', space=vmem, size = 0xc00, scoped, tag = 'input window, operand 4']
    #allocation11 [shape = 'u8[3072]{0}', space=vmem, size = 0xc00, scoped, tag = 'input window, operand 5']
    #allocation12 [shape = 's32[2]{0}', space=sflag, size = 0x8, scoped, tag = 'scoped memory for tpu_custom_call.1']
    #allocation13 [shape = 'u8[262144]{0}', space=vmem, size = 0x40000, scoped, tag = 'output window, operand 0, single buffered']
    %11 = vsyncpa [#allocation6], 0
    %s12 = scalar_lea.sflag [#allocation6], 1
    %13 = vsyncpa %s12, 0
    %14 = vsyncpa [#allocation9], 0
    %s15 = scalar_lea.sflag [#allocation9], 1
    %16 = vsyncpa %s15, 0
    %17 = vsyncpa [#allocation12], 0
    %s18 = scalar_lea.sflag [#allocation12], 1
    %19 = vsyncpa %s18, 0
    %20 = vsyncpa [#allocation7], 0
    loop: start=0, step=1, limit=5
    $region2: #{tpu_custom_call.1} parent=1 // loop_pre_header
      _
    $region3: #{tpu_custom_call.1} parent=1 // loop_header
      %s22 = sphi 0, %s26
      %p23 = scmp.ge.s32.totalorder %s22, 5
      %s32 = sphi 0, %s34
      %s35 = sphi 0, %s32
      %s36 = sphi 0, %s35
      %s52 = sphi 0, %s36
      %s58 = sphi 0, %s60
      %s61 = sphi 0, %s58
      %s62 = sphi 0, %s61
      %s78 = sphi 0, %s62
      %s84 = sphi 0, %s86
      %s87 = sphi 0, %s84
      %s88 = sphi 0, %s87
      %s104 = sphi 0, %s88
      %s110 = sphi 0, %s112
      %s113 = sphi 0, %s110
      %s114 = sphi 0, %s113
      %s130 = sphi 0, %s114
      %s134 = sphi 0, %s134
      %s136 = sphi 0, %s134
      %s137 = sphi 0, %s136
      %s151 = sphi 0, %s137
    $region4: #{tpu_custom_call.1} parent=1 // loop_header_branch
      %25 = sbr.rel (%p23) target = $region8
    $region5: #{tpu_custom_call.1} parent=1 // loop_body
      %s27 = ssub.s32 %s22, 1
      %s28 = ssub.s32 %s22, 2
      %s29 = sadd.s32 %s22, 1
      %s30 = ssub.s32 %s22, %s29
      %p31 = scmp.eq.s32.totalorder %s30, 0
      %s33 = sadd.s32 %s32, 1
      %s34 = scalar_select %p31, %s32, %s33
      %p37 = pneg %p31
      %p38 = scmp.eq.s32.totalorder %s22, 2
      %p39 = por %p37, %p38
      %p40 = scmp.ne.s32.totalorder %s32, %s35
      %p41 = scmp.eq.s32.totalorder %s22, 0
      %p42 = por %p40, %p41
      %p43 = scmp.ne.s32.totalorder %s32, %s35
      %p44 = scmp.eq.s32.totalorder %s27, 2
      %p45 = por %p43, %p44
      %p46 = scmp.ne.s32.totalorder %s35, %s36
      %p47 = scmp.eq.s32.totalorder %s27, 0
      %p48 = por %p46, %p47
      %p49 = scmp.ne.s32.totalorder %s35, %s36
      %p50 = scmp.eq.s32.totalorder %s28, 2
      %p51 = por %p49, %p50
      %p53 = scmp.ne.s32.totalorder %s36, %s52
      %p54 = scmp.eq.s32.totalorder %s28, 0
      %p55 = por %p53, %p54
      %s56 = ssub.s32 %s22, %s29
      %p57 = scmp.eq.s32.totalorder %s56, 0
      %s59 = sadd.s32 %s58, 1
      %s60 = scalar_select %p57, %s58, %s59
      %p63 = pneg %p57
      %p64 = scmp.eq.s32.totalorder %s22, 2
      %p65 = por %p63, %p64
      %p66 = scmp.ne.s32.totalorder %s58, %s61
      %p67 = scmp.eq.s32.totalorder %s22, 0
      %p68 = por %p66, %p67
      %p69 = scmp.ne.s32.totalorder %s58, %s61
      %p70 = scmp.eq.s32.totalorder %s27, 2
      %p71 = por %p69, %p70
      %p72 = scmp.ne.s32.totalorder %s61, %s62
      %p73 = scmp.eq.s32.totalorder %s27, 0
      %p74 = por %p72, %p73
      %p75 = scmp.ne.s32.totalorder %s61, %s62
      %p76 = scmp.eq.s32.totalorder %s28, 2
      %p77 = por %p75, %p76
      %p79 = scmp.ne.s32.totalorder %s62, %s78
      %p80 = scmp.eq.s32.totalorder %s28, 0
      %p81 = por %p79, %p80
      %s82 = ssub.s32 %s22, %s29
      %p83 = scmp.eq.s32.totalorder %s82, 0
      %s85 = sadd.s32 %s84, 1
      %s86 = scalar_select %p83, %s84, %s85
      %p89 = pneg %p83
      %p90 = scmp.eq.s32.totalorder %s22, 2
      %p91 = por %p89, %p90
      %p92 = scmp.ne.s32.totalorder %s84, %s87
      %p93 = scmp.eq.s32.totalorder %s22, 0
      %p94 = por %p92, %p93
      %p95 = scmp.ne.s32.totalorder %s84, %s87
      %p96 = scmp.eq.s32.totalorder %s27, 2
      %p97 = por %p95, %p96
      %p98 = scmp.ne.s32.totalorder %s87, %s88
      %p99 = scmp.eq.s32.totalorder %s27, 0
      %p100 = por %p98, %p99
      %p101 = scmp.ne.s32.totalorder %s87, %s88
      %p102 = scmp.eq.s32.totalorder %s28, 2
      %p103 = por %p101, %p102
      %p105 = scmp.ne.s32.totalorder %s88, %s104
      %p106 = scmp.eq.s32.totalorder %s28, 0
      %p107 = por %p105, %p106
      %s108 = ssub.s32 %s22, %s29
      %p109 = scmp.eq.s32.totalorder %s108, 0
      %s111 = sadd.s32 %s110, 1
      %s112 = scalar_select %p109, %s110, %s111
      %p115 = pneg %p109
      %p116 = scmp.eq.s32.totalorder %s22, 2
      %p117 = por %p115, %p116
      %p118 = scmp.ne.s32.totalorder %s110, %s113
      %p119 = scmp.eq.s32.totalorder %s22, 0
      %p120 = por %p118, %p119
      %p121 = scmp.ne.s32.totalorder %s110, %s113
      %p122 = scmp.eq.s32.totalorder %s27, 2
      %p123 = por %p121, %p122
      %p124 = scmp.ne.s32.totalorder %s113, %s114
      %p125 = scmp.eq.s32.totalorder %s27, 0
      %p126 = por %p124, %p125
      %p127 = scmp.ne.s32.totalorder %s113, %s114
      %p128 = scmp.eq.s32.totalorder %s28, 2
      %p129 = por %p127, %p128
      %p131 = scmp.ne.s32.totalorder %s114, %s130
      %p132 = scmp.eq.s32.totalorder %s28, 0
      %p133 = por %p131, %p132
      %s135 = sadd.s32 %s134, 1
      %p138 = scmp.eq.s32.totalorder %s22, 2
      %p139 = scmp.ne.s32.totalorder %s134, %s136
      %p140 = scmp.eq.s32.totalorder %s22, 0
      %p141 = por %p139, %p140
      %p142 = scmp.ne.s32.totalorder %s134, %s136
      %p143 = scmp.eq.s32.totalorder %s27, 2
      %p144 = por %p142, %p143
      %p145 = scmp.ne.s32.totalorder %s136, %s137
      %p146 = scmp.eq.s32.totalorder %s27, 0
      %p147 = por %p145, %p146
      %p148 = scmp.ne.s32.totalorder %s136, %s137
      %p149 = scmp.eq.s32.totalorder %s28, 2
      %p150 = por %p148, %p149
      %p152 = scmp.ne.s32.totalorder %s137, %s151
      %p153 = scmp.eq.s32.totalorder %s28, 0
      %p154 = por %p152, %p153
      %p155 = scmp.le.s32.totalorder 1, %s22
      %p156 = scmp.lt.s32.totalorder %s22, 4
      %p157 = pnand %p155, %p156
      %p158 = pneg %p157
      // Predicated region
      $region9: #{tpu_custom_call.1} parent=5 // pred_check
        _
      $region10: #{tpu_custom_call.1} parent=5 // pred_check_branch
        %160 = sbr.rel (%p157) target = $region12
      $region11: #{tpu_custom_call.1} parent=5 // pred_region
        %s161 = ssub.s32 %s22, 1
      $region12: #{tpu_custom_call.1} parent=5 // pred_fallthru
        _
      %p162 = scmp.lt.s32.totalorder %s22, 3
      // Predicated region
      $region13: #{tpu_custom_call.1} parent=5 // pred_check
        %p163 = pneg %p162
      $region14: #{tpu_custom_call.1} parent=5 // pred_check_branch
        %165 = sbr.rel (%p163) target = $region16
      $region15: #{tpu_custom_call.1} parent=5 // pred_region
        // Predicated region
        $region17: #{tpu_custom_call.1} parent=15 // pred_check
          %p166 = pneg %p42
        $region18: #{tpu_custom_call.1} parent=15 // pred_check_branch
          %168 = sbr.rel (%p166) target = $region20
        $region19: #{tpu_custom_call.1} parent=15 // pred_region
          %s169 = sand.u32 %s32, 1
          %s170 = scalar_lea.sflag [#allocation6], %s169
          %s171 = sand.u32 %s32, 1
          %s172 = smul.addr %s171, 192
          %s173 = scalar_lea.vmem [#allocation5], %s172
          %175 = vsyncadd %s170, 0
          %s176 = smul.addr %s22, 48
          %s177 = smul.addr %s176, 4
          %s178 = scalar_lea.hbm %s2, %s177
          %s179 = sshll.u32 %s178, 4
          %s180 = int_to_ptr.hbm [resolvable:$true] %s179
          %s181 = sshll.u32 %s173, 4
          %s182 = int_to_ptr.vmem [resolvable:$true] %s181
          %187 = dma.hbm_to_vmem [thread:$0]  %s180, 3072, %s182, %s170, 192, 192, 12
        $region20: #{tpu_custom_call.1} parent=15 // pred_fallthru
          _
        // Predicated region
        $region21: #{tpu_custom_call.1} parent=15 // pred_check
          %p188 = pneg %p68
        $region22: #{tpu_custom_call.1} parent=15 // pred_check_branch
          %190 = sbr.rel (%p188) target = $region24
        $region23: #{tpu_custom_call.1} parent=15 // pred_region
          %s191 = sand.u32 %s22, 1
          %s192 = scalar_lea.sflag [#allocation9], %s191
          %s193 = sand.u32 %s58, 1
          %s194 = smul.addr %s193, 192
          %s195 = scalar_lea.vmem [#allocation8], %s194
          %197 = vsyncadd %s192, 0
          %s198 = smul.addr %s22, 48
          %s199 = smul.addr %s198, 4
          %s200 = scalar_lea.hbm %s3, %s199
          %s201 = sshll.u32 %s200, 4
          %s202 = int_to_ptr.hbm [resolvable:$true] %s201
          %s203 = sshll.u32 %s195, 4
          %s204 = int_to_ptr.vmem [resolvable:$true] %s203
          %209 = dma.hbm_to_vmem [thread:$0]  %s202, 3072, %s204, %s192, 192, 192, 12
        $region24: #{tpu_custom_call.1} parent=15 // pred_fallthru
          _
        // Predicated region
        $region25: #{tpu_custom_call.1} parent=15 // pred_check
          %p210 = pneg %p94
        $region26: #{tpu_custom_call.1} parent=15 // pred_check_branch
          %212 = sbr.rel (%p210) target = $region28
        $region27: #{tpu_custom_call.1} parent=15 // pred_region
          %s213 = sand.u32 %s22, 1
          %s214 = scalar_lea.sflag [#allocation9], %s213
          %s215 = sand.u32 %s84, 1
          %s216 = smul.addr %s215, 3
          %s217 = scalar_lea.vmem [#allocation10], %s216
          %219 = vsyncadd %s214, 0
          %s220 = smul.addr %s22, 3
          %s221 = scalar_lea.hbm %s4, %s220
          %s223 = sshll.u32 %s221, 4
          %s224 = int_to_ptr.hbm [resolvable:$true] %s223
          %s225 = sshll.u32 %s217, 4
          %s226 = int_to_ptr.vmem [resolvable:$true] %s225
          %228 = dma.hbm_to_vmem [thread:$0]  %s224, 48, %s226, %s214
        $region28: #{tpu_custom_call.1} parent=15 // pred_fallthru
          _
        // Predicated region
        $region29: #{tpu_custom_call.1} parent=15 // pred_check
          %p229 = pneg %p120
        $region30: #{tpu_custom_call.1} parent=15 // pred_check_branch
          %231 = sbr.rel (%p229) target = $region32
        $region31: #{tpu_custom_call.1} parent=15 // pred_region
          %s232 = sand.u32 %s110, 1
          %s233 = scalar_lea.sflag [#allocation12], %s232
          %s234 = sand.u32 %s110, 1
          %s235 = smul.addr %s234, 3
          %s236 = scalar_lea.vmem [#allocation11], %s235
          %238 = vsyncadd %s233, 0
          %s239 = smul.addr %s22, 3
          %s240 = scalar_lea.hbm %s5, %s239
          %s242 = sshll.u32 %s240, 4
          %s243 = int_to_ptr.hbm [resolvable:$true] %s242
          %s244 = sshll.u32 %s236, 4
          %s245 = int_to_ptr.vmem [resolvable:$true] %s244
          %247 = dma.hbm_to_vmem [thread:$0]  %s243, 48, %s245, %s233
        $region32: #{tpu_custom_call.1} parent=15 // pred_fallthru
          _
      $region16: #{tpu_custom_call.1} parent=5 // pred_fallthru
        _
      %p248 = scmp.le.s32.totalorder 1, %s22
      %p249 = scmp.lt.s32.totalorder %s22, 4
      %p250 = pnand %p248, %p249
      %p251 = pneg %p250
      // Predicated region
      $region33: #{tpu_custom_call.1} parent=5 // pred_check
        _
      $region34: #{tpu_custom_call.1} parent=5 // pred_check_branch
        %253 = sbr.rel (%p250) target = $region36
      $region35: #{tpu_custom_call.1} parent=5 // pred_region
        %s254 = ssub.s32 %s22, 1
        %s255 = sand.u32 %s35, 1
        %s256 = scalar_lea.sflag [#allocation6], %s255
        %s257 = sand.u32 %s35, 1
        %s258 = smul.addr %s257, 192
        %s259 = scalar_lea.vmem [#allocation5], %s258
        // Predicated region
        $region37: #{tpu_custom_call.1} parent=35 // pred_check
          %p260 = pneg %p48
        $region38: #{tpu_custom_call.1} parent=35 // pred_check_branch
          %262 = sbr.rel (%p260) target = $region40
        $region39: #{tpu_custom_call.1} parent=35 // pred_region
          %264 = dma.done %s256, 3072
        $region40: #{tpu_custom_call.1} parent=35 // pred_fallthru
          _
        %s265 = sand.u32 %s27, 1
        %s266 = scalar_lea.sflag [#allocation9], %s265
        %s267 = sand.u32 %s61, 1
        %s268 = smul.addr %s267, 192
        %s269 = scalar_lea.vmem [#allocation8], %s268
        // Predicated region
        $region41: #{tpu_custom_call.1} parent=35 // pred_check
          %p270 = pneg %p74
        $region42: #{tpu_custom_call.1} parent=35 // pred_check_branch
          %272 = sbr.rel (%p270) target = $region44
        $region43: #{tpu_custom_call.1} parent=35 // pred_region
          %274 = dma.done %s266, 3072
        $region44: #{tpu_custom_call.1} parent=35 // pred_fallthru
          _
        %s275 = sand.u32 %s27, 1
        %s276 = scalar_lea.sflag [#allocation9], %s275
        %s277 = sand.u32 %s87, 1
        %s278 = smul.addr %s277, 3
        %s279 = scalar_lea.vmem [#allocation10], %s278
        // Predicated region
        $region45: #{tpu_custom_call.1} parent=35 // pred_check
          %p280 = pneg %p100
        $region46: #{tpu_custom_call.1} parent=35 // pred_check_branch
          %282 = sbr.rel (%p280) target = $region48
        $region47: #{tpu_custom_call.1} parent=35 // pred_region
          %284 = dma.done %s276, 48
        $region48: #{tpu_custom_call.1} parent=35 // pred_fallthru
          _
        %s285 = sand.u32 %s113, 1
        %s286 = scalar_lea.sflag [#allocation12], %s285
        %s287 = sand.u32 %s113, 1
        %s288 = smul.addr %s287, 3
        %s289 = scalar_lea.vmem [#allocation11], %s288
        // Predicated region
        $region49: #{tpu_custom_call.1} parent=35 // pred_check
          %p290 = pneg %p126
        $region50: #{tpu_custom_call.1} parent=35 // pred_check_branch
          %292 = sbr.rel (%p290) target = $region52
        $region51: #{tpu_custom_call.1} parent=35 // pred_region
          %294 = dma.done %s286, 48
        $region52: #{tpu_custom_call.1} parent=35 // pred_fallthru
          _
        %s295 = sand.u32 %s35, 1
        %s296 = scalar_lea.sflag [#allocation6], %s295
        %s297 = sand.u32 %s35, 1
        %s298 = smul.addr %s297, 192
        %s299 = scalar_lea.vmem [#allocation5], %s298
        %p300 = pneg %p48
        %p301 = pneg %p45
        %s302 = sand.u32 %s27, 1
        %s303 = scalar_lea.sflag [#allocation9], %s302
        %s304 = sand.u32 %s61, 1
        %s305 = smul.addr %s304, 192
        %s306 = scalar_lea.vmem [#allocation8], %s305
        %p307 = pneg %p74
        %p308 = pneg %p71
        %s309 = sand.u32 %s27, 1
        %s310 = scalar_lea.sflag [#allocation9], %s309
        %s311 = sand.u32 %s87, 1
        %s312 = smul.addr %s311, 3
        %s313 = scalar_lea.vmem [#allocation10], %s312
        %p314 = pneg %p100
        %p315 = pneg %p97
        %s316 = sand.u32 %s113, 1
        %s317 = scalar_lea.sflag [#allocation12], %s316
        %s318 = sand.u32 %s113, 1
        %s319 = smul.addr %s318, 3
        %s320 = scalar_lea.vmem [#allocation11], %s319
        %p321 = pneg %p126
        %p322 = pneg %p123
        %p323 = pneg %p147
        %p324 = pneg %p144
        %p326 = scmp.eq.s32.totalorder %s27, 0
        // Predicated region
        $region53: #{tpu_custom_call.1} parent=35 // pred_check
          %p327 = pneg %p326
        $region54: #{tpu_custom_call.1} parent=35 // pred_check_branch
          %329 = sbr.rel (%p327) target = $region56
        $region55: #{tpu_custom_call.1} parent=35 // pred_region
          $region57: #{tpu_custom_call.1} parent=55
            #allocation14 [shape = 's32[1]{0}', space=sflag, size = 0x4, scoped, tag = 'scoped memory for tpu_custom_call.1']
            // Predicated region
            $region58: #{tpu_custom_call.1} parent=57 // pred_check
              _
            $region59: #{tpu_custom_call.1} parent=57 // pred_check_branch
              %331 = sbr.rel target = $region61
            $region60: #{tpu_custom_call.1} parent=57 // pred_region
              %332 = sst [smem:[#allocation17]] [#allocation16]
              %333 = sst [smem:[#allocation18]] [#allocation15]
            $region61: #{tpu_custom_call.1} parent=57 // pred_fallthru
              _
            %335 = shalt.err (0)
            %s337 = sshll.u32 %s0, 4
            %s338 = int_to_ptr.hbm [resolvable:$true] %s337
            %s339 = sshll.u32 [#allocation2], 4
            %s340 = int_to_ptr.vmem [resolvable:$true] %s339
            %342 = dma.hbm_to_vmem [thread:$0]  %s338, 49152, %s340, [#allocation14]
            %s343 = smul.u32 4, 3
            %s344 = smul.u32 %s343, 64
            %s345 = smul.u32 %s344, 4
            %s346 = sshll.u32 %s345, 4
            %347 = dma.done [#allocation14], %s346
          $region62: #{tpu_custom_call.1} parent=55
            #allocation19 [shape = 's32[1]{0}', space=sflag, size = 0x4, scoped, tag = 'scoped memory for tpu_custom_call.1']
            // Predicated region
            $region63: #{tpu_custom_call.1} parent=62 // pred_check
              _
            $region64: #{tpu_custom_call.1} parent=62 // pred_check_branch
              %349 = sbr.rel target = $region66
            $region65: #{tpu_custom_call.1} parent=62 // pred_region
              %350 = sst [smem:[#allocation17]] [#allocation21]
              %351 = sst [smem:[#allocation18]] [#allocation20]
            $region66: #{tpu_custom_call.1} parent=62 // pred_fallthru
              _
            %353 = shalt.err (0)
            %s355 = sshll.u32 %s1, 4
            %s356 = int_to_ptr.hbm [resolvable:$true] %s355
            %s357 = sshll.u32 [#allocation3], 4
            %s358 = int_to_ptr.vmem [resolvable:$true] %s357
            %360 = dma.hbm_to_vmem [thread:$0]  %s356, 4096, %s358, [#allocation19]
            %s361 = smul.u32 4, 64
            %s362 = smul.u32 %s361, 1
            %s363 = sshll.u32 %s362, 4
            %364 = dma.done [#allocation19], %s363
        $region56: #{tpu_custom_call.1} parent=35 // pred_fallthru
          _
        %v365 = vld [vmem:[%s259] sm:$0xff]
        %v366 = vld [vmem:[%s259 + $0x8] sm:$0xf]
        %v367 = vld [vmem:[%s259 + $0xc] sm:$0xff]
        %v368 = vld [vmem:[%s259 + $0x14] sm:$0xf]
        %v369 = vld [vmem:[%s259 + $0x18] sm:$0xff]
        %v370 = vld [vmem:[%s259 + $0x20] sm:$0xf]
        %v371 = vld [vmem:[%s259 + $0x24] sm:$0xff]
        %v372 = vld [vmem:[%s259 + $0x2c] sm:$0xf]
        %v373 = vld [vmem:[%s259 + $0x30] sm:$0xff]
        %v374 = vld [vmem:[%s259 + $0x38] sm:$0xf]
        %v375 = vld [vmem:[%s259 + $0x3c] sm:$0xff]
        %v376 = vld [vmem:[%s259 + $0x44] sm:$0xf]
        %v377 = vld [vmem:[%s259 + $0x48] sm:$0xff]
        %v378 = vld [vmem:[%s259 + $0x50] sm:$0xf]
        %v379 = vld [vmem:[%s259 + $0x54] sm:$0xff]
        %v380 = vld [vmem:[%s259 + $0x5c] sm:$0xf]
        %v381 = vld [vmem:[%s259 + $0x60] sm:$0xff]
        %v382 = vld [vmem:[%s259 + $0x68] sm:$0xf]
        %v383 = vld [vmem:[%s259 + $0x6c] sm:$0xff]
        %v384 = vld [vmem:[%s259 + $0x74] sm:$0xf]
        %v385 = vld [vmem:[%s259 + $0x78] sm:$0xff]
        %v386 = vld [vmem:[%s259 + $0x80] sm:$0xf]
        %v387 = vld [vmem:[%s259 + $0x84] sm:$0xff]
        %v388 = vld [vmem:[%s259 + $0x8c] sm:$0xf]
        %v389 = vld [vmem:[%s259 + $0x90] sm:$0xff]
        %v390 = vld [vmem:[%s259 + $0x98] sm:$0xf]
        %v391 = vld [vmem:[%s259 + $0x9c] sm:$0xff]
        %v392 = vld [vmem:[%s259 + $0xa4] sm:$0xf]
        %v393 = vld [vmem:[%s259 + $0xa8] sm:$0xff]
        %v394 = vld [vmem:[%s259 + $0xb0] sm:$0xf]
        %v395 = vld [vmem:[%s259 + $0xb4] sm:$0xff]
        %v396 = vld [vmem:[%s259 + $0xbc] sm:$0xf]
        %v397 = vld [vmem:[%s269] sm:$0xff]
        %v398 = vld [vmem:[%s269 + $0x8] sm:$0xf]
        %v399 = vld [vmem:[%s269 + $0xc] sm:$0xff]
        %v400 = vld [vmem:[%s269 + $0x14] sm:$0xf]
        %v401 = vld [vmem:[%s269 + $0x18] sm:$0xff]
        %v402 = vld [vmem:[%s269 + $0x20] sm:$0xf]
        %v403 = vld [vmem:[%s269 + $0x24] sm:$0xff]
        %v404 = vld [vmem:[%s269 + $0x2c] sm:$0xf]
        %v405 = vld [vmem:[%s269 + $0x30] sm:$0xff]
        %v406 = vld [vmem:[%s269 + $0x38] sm:$0xf]
        %v407 = vld [vmem:[%s269 + $0x3c] sm:$0xff]
        %v408 = vld [vmem:[%s269 + $0x44] sm:$0xf]
        %v409 = vld [vmem:[%s269 + $0x48] sm:$0xff]
        %v410 = vld [vmem:[%s269 + $0x50] sm:$0xf]
        %v411 = vld [vmem:[%s269 + $0x54] sm:$0xff]
        %v412 = vld [vmem:[%s269 + $0x5c] sm:$0xf]
        %v413 = vld [vmem:[%s269 + $0x60] sm:$0xff]
        %v414 = vld [vmem:[%s269 + $0x68] sm:$0xf]
        %v415 = vld [vmem:[%s269 + $0x6c] sm:$0xff]
        %v416 = vld [vmem:[%s269 + $0x74] sm:$0xf]
        %v417 = vld [vmem:[%s269 + $0x78] sm:$0xff]
        %v418 = vld [vmem:[%s269 + $0x80] sm:$0xf]
        %v419 = vld [vmem:[%s269 + $0x84] sm:$0xff]
        %v420 = vld [vmem:[%s269 + $0x8c] sm:$0xf]
        %v421 = vld [vmem:[%s269 + $0x90] sm:$0xff]
        %v422 = vld [vmem:[%s269 + $0x98] sm:$0xf]
        %v423 = vld [vmem:[%s269 + $0x9c] sm:$0xff]
        %v424 = vld [vmem:[%s269 + $0xa4] sm:$0xf]
        %v425 = vld [vmem:[%s269 + $0xa8] sm:$0xff]
        %v426 = vld [vmem:[%s269 + $0xb0] sm:$0xf]
        %v427 = vld [vmem:[%s269 + $0xb4] sm:$0xff]
        %v428 = vld [vmem:[%s269 + $0xbc] sm:$0xf]
        %v429 = vld [vmem:[%s279] sm:$0x7]
        %v430 = vld [vmem:[%s289] sm:$0x7]
        loop: start=0, step=1, limit=4
        $region67: #{tpu_custom_call.1} parent=35 // loop_pre_header
          _
        $region68: #{tpu_custom_call.1} parent=35 // loop_header
          %s432 = sphi 0, %s436
          %p433 = scmp.ge.s32.totalorder %s432, 4
        $region69: #{tpu_custom_call.1} parent=35 // loop_header_branch
          %435 = sbr.rel (%p433) target = $region73
        $region70: #{tpu_custom_call.1} parent=35 // loop_body
          %s437 = smul.u32 %s432, 128
          %v438 = vld [vmem:[#allocation3] sm:$0xf]
          %v439 = vld [vmem:[#allocation3 + $0x4] sm:$0xf]
          %v440 = vld [vmem:[#allocation3 + $0x8] sm:$0xf]
          %v441 = vld [vmem:[#allocation3 + $0xc] sm:$0xf]
          %v442 = vld [vmem:[#allocation3 + $0x10] sm:$0xf]
          %v443 = vld [vmem:[#allocation3 + $0x14] sm:$0xf]
          %v444 = vld [vmem:[#allocation3 + $0x18] sm:$0xf]
          %v445 = vld [vmem:[#allocation3 + $0x1c] sm:$0xf]
          %v446 = vld [vmem:[#allocation3 + $0x20] sm:$0xf]
          %v447 = vld [vmem:[#allocation3 + $0x24] sm:$0xf]
          %v448 = vld [vmem:[#allocation3 + $0x28] sm:$0xf]
          %v449 = vld [vmem:[#allocation3 + $0x2c] sm:$0xf]
          %v450 = vld [vmem:[#allocation3 + $0x30] sm:$0xf]
          %v451 = vld [vmem:[#allocation3 + $0x34] sm:$0xf]
          %v452 = vld [vmem:[#allocation3 + $0x38] sm:$0xf]
          %v453 = vld [vmem:[#allocation3 + $0x3c] sm:$0xf]
          %v454 = vld [vmem:[#allocation3 + $0x40] sm:$0xf]
          %v455 = vld [vmem:[#allocation3 + $0x44] sm:$0xf]
          %v456 = vld [vmem:[#allocation3 + $0x48] sm:$0xf]
          %v457 = vld [vmem:[#allocation3 + $0x4c] sm:$0xf]
          %v458 = vld [vmem:[#allocation3 + $0x50] sm:$0xf]
          %v459 = vld [vmem:[#allocation3 + $0x54] sm:$0xf]
          %v460 = vld [vmem:[#allocation3 + $0x58] sm:$0xf]
          %v461 = vld [vmem:[#allocation3 + $0x5c] sm:$0xf]
          %v462 = vld [vmem:[#allocation3 + $0x60] sm:$0xf]
          %v463 = vld [vmem:[#allocation3 + $0x64] sm:$0xf]
          %v464 = vld [vmem:[#allocation3 + $0x68] sm:$0xf]
          %v465 = vld [vmem:[#allocation3 + $0x6c] sm:$0xf]
          %v466 = vld [vmem:[#allocation3 + $0x70] sm:$0xf]
          %v467 = vld [vmem:[#allocation3 + $0x74] sm:$0xf]
          %v468 = vld [vmem:[#allocation3 + $0x78] sm:$0xf]
          %v469 = vld [vmem:[#allocation3 + $0x7c] sm:$0xf]
          %v470 = vld [vmem:[#allocation3 + $0x80] sm:$0xf]
          %v471 = vld [vmem:[#allocation3 + $0x84] sm:$0xf]
          %v472 = vld [vmem:[#allocation3 + $0x88] sm:$0xf]
          %v473 = vld [vmem:[#allocation3 + $0x8c] sm:$0xf]
          %v474 = vld [vmem:[#allocation3 + $0x90] sm:$0xf]
          %v475 = vld [vmem:[#allocation3 + $0x94] sm:$0xf]
          %v476 = vld [vmem:[#allocation3 + $0x98] sm:$0xf]
          %v477 = vld [vmem:[#allocation3 + $0x9c] sm:$0xf]
          %v478 = vld [vmem:[#allocation3 + $0xa0] sm:$0xf]
          %v479 = vld [vmem:[#allocation3 + $0xa4] sm:$0xf]
          %v480 = vld [vmem:[#allocation3 + $0xa8] sm:$0xf]
          %v481 = vld [vmem:[#allocation3 + $0xac] sm:$0xf]
          %v482 = vld [vmem:[#allocation3 + $0xb0] sm:$0xf]
          %v483 = vld [vmem:[#allocation3 + $0xb4] sm:$0xf]
          %v484 = vld [vmem:[#allocation3 + $0xb8] sm:$0xf]
          %v485 = vld [vmem:[#allocation3 + $0xbc] sm:$0xf]
          %v486 = vld [vmem:[#allocation3 + $0xc0] sm:$0xf]
          %v487 = vld [vmem:[#allocation3 + $0xc4] sm:$0xf]
          %v488 = vld [vmem:[#allocation3 + $0xc8] sm:$0xf]
          %v489 = vld [vmem:[#allocation3 + $0xcc] sm:$0xf]
          %v490 = vld [vmem:[#allocation3 + $0xd0] sm:$0xf]
          %v491 = vld [vmem:[#allocation3 + $0xd4] sm:$0xf]
          %v492 = vld [vmem:[#allocation3 + $0xd8] sm:$0xf]
          %v493 = vld [vmem:[#allocation3 + $0xdc] sm:$0xf]
          %v494 = vld [vmem:[#allocation3 + $0xe0] sm:$0xf]
          %v495 = vld [vmem:[#allocation3 + $0xe4] sm:$0xf]
          %v496 = vld [vmem:[#allocation3 + $0xe8] sm:$0xf]
          %v497 = vld [vmem:[#allocation3 + $0xec] sm:$0xf]
          %v498 = vld [vmem:[#allocation3 + $0xf0] sm:$0xf]
          %v499 = vld [vmem:[#allocation3 + $0xf4] sm:$0xf]
          %v500 = vld [vmem:[#allocation3 + $0xf8] sm:$0xf]
          %v501 = vld [vmem:[#allocation3 + $0xfc] sm:$0xf]
          %s502 = sshra.s32 %s437, 3
          %s503 = sand.u32 %s437, 7
          %s504 = smul.u32 %s502, 4
          %s505 = smul.addr %s504, 4
          %s506 = scalar_lea.vmem [#allocation2], %s505
          %v507 = vld [vmem:[%s506] sm:$0xff]
          %v508 = vld [vmem:[%s506 + $0x8] sm:$0xff]
          %v509 = vld [vmem:[%s506 + $0x10] sm:$0xff]
          %v510 = vld [vmem:[%s506 + $0x18] sm:$0xff]
          %v511 = vld [vmem:[%s506 + $0x20] sm:$0xff]
          %v512 = vld [vmem:[%s506 + $0x28] sm:$0xff]
          %v513 = vld [vmem:[%s506 + $0x30] sm:$0xff]
          %v514 = vld [vmem:[%s506 + $0x38] sm:$0xff]
          %v515 = vld [vmem:[%s506 + $0x40] sm:$0xff]
          %v516 = vld [vmem:[%s506 + $0x48] sm:$0xff]
          %v517 = vld [vmem:[%s506 + $0x50] sm:$0xff]
          %v518 = vld [vmem:[%s506 + $0x58] sm:$0xff]
          %v519 = vld [vmem:[%s506 + $0x60] sm:$0xff]
          %v520 = vld [vmem:[%s506 + $0x68] sm:$0xff]
          %v521 = vld [vmem:[%s506 + $0x70] sm:$0xff]
          %v522 = vld [vmem:[%s506 + $0x78] sm:$0xff]
          %v523 = vld [vmem:[%s506 + $0x80] sm:$0xff]
          %v524 = vld [vmem:[%s506 + $0x88] sm:$0xff]
          %v525 = vld [vmem:[%s506 + $0x90] sm:$0xff]
          %v526 = vld [vmem:[%s506 + $0x98] sm:$0xff]
          %v527 = vld [vmem:[%s506 + $0xa0] sm:$0xff]
          %v528 = vld [vmem:[%s506 + $0xa8] sm:$0xff]
          %v529 = vld [vmem:[%s506 + $0xb0] sm:$0xff]
          %v530 = vld [vmem:[%s506 + $0xb8] sm:$0xff]
          %v531 = vld [vmem:[%s506 + $0xc0] sm:$0xff]
          %v532 = vld [vmem:[%s506 + $0xc8] sm:$0xff]
          %v533 = vld [vmem:[%s506 + $0xd0] sm:$0xff]
          %v534 = vld [vmem:[%s506 + $0xd8] sm:$0xff]
          %v535 = vld [vmem:[%s506 + $0xe0] sm:$0xff]
          %v536 = vld [vmem:[%s506 + $0xe8] sm:$0xff]
          %v537 = vld [vmem:[%s506 + $0xf0] sm:$0xff]
          %v538 = vld [vmem:[%s506 + $0xf8] sm:$0xff]
          %v571 = vunpack.c.l.b16 %v507
          %v572 = vunpack.c.h.b16 %v507
          %v573 = vunpack.c.l.b16 %v508
          %v574 = vunpack.c.h.b16 %v508
          %v575 = vunpack.c.l.b16 %v509
          %v576 = vunpack.c.h.b16 %v509
          %v577 = vunpack.c.l.b16 %v510
          %v578 = vunpack.c.h.b16 %v510
          %v579 = vunpack.c.l.b16 %v511
          %v580 = vunpack.c.h.b16 %v511
          %v581 = vunpack.c.l.b16 %v512
          %v582 = vunpack.c.h.b16 %v512
          %v583 = vunpack.c.l.b16 %v513
          %v584 = vunpack.c.h.b16 %v513
          %v585 = vunpack.c.l.b16 %v514
          %v586 = vunpack.c.h.b16 %v514
          %v587 = vunpack.c.l.b16 %v515
          %v588 = vunpack.c.h.b16 %v515
          %v589 = vunpack.c.l.b16 %v516
          %v590 = vunpack.c.h.b16 %v516
          %v591 = vunpack.c.l.b16 %v517
          %v592 = vunpack.c.h.b16 %v517
          %v593 = vunpack.c.l.b16 %v518
          %v594 = vunpack.c.h.b16 %v518
          %v595 = vunpack.c.l.b16 %v519
          %v596 = vunpack.c.h.b16 %v519
          %v597 = vunpack.c.l.b16 %v520
          %v598 = vunpack.c.h.b16 %v520
          %v599 = vunpack.c.l.b16 %v521
          %v600 = vunpack.c.h.b16 %v521
          %v601 = vunpack.c.l.b16 %v522
          %v602 = vunpack.c.h.b16 %v522
          %v603 = vunpack.c.l.b16 %v523
          %v604 = vunpack.c.h.b16 %v523
          %v605 = vunpack.c.l.b16 %v524
          %v606 = vunpack.c.h.b16 %v524
          %v607 = vunpack.c.l.b16 %v525
          %v608 = vunpack.c.h.b16 %v525
          %v609 = vunpack.c.l.b16 %v526
          %v610 = vunpack.c.h.b16 %v526
          %v611 = vunpack.c.l.b16 %v527
          %v612 = vunpack.c.h.b16 %v527
          %v613 = vunpack.c.l.b16 %v528
          %v614 = vunpack.c.h.b16 %v528
          %v615 = vunpack.c.l.b16 %v529
          %v616 = vunpack.c.h.b16 %v529
          %v617 = vunpack.c.l.b16 %v530
          %v618 = vunpack.c.h.b16 %v530
          %v619 = vunpack.c.l.b16 %v531
          %v620 = vunpack.c.h.b16 %v531
          %v621 = vunpack.c.l.b16 %v532
          %v622 = vunpack.c.h.b16 %v532
          %v623 = vunpack.c.l.b16 %v533
          %v624 = vunpack.c.h.b16 %v533
          %v625 = vunpack.c.l.b16 %v534
          %v626 = vunpack.c.h.b16 %v534
          %v627 = vunpack.c.l.b16 %v535
          %v628 = vunpack.c.h.b16 %v535
          %v629 = vunpack.c.l.b16 %v536
          %v630 = vunpack.c.h.b16 %v536
          %v631 = vunpack.c.l.b16 %v537
          %v632 = vunpack.c.h.b16 %v537
          %v633 = vunpack.c.l.b16 %v538
          %v634 = vunpack.c.h.b16 %v538
          %v635 = vpack.c.b16 %v575, %v571
          %v636 = vpack.c.b16 %v576, %v572
          %v637 = vpack.c.b16 %v577, %v573
          %v638 = vpack.c.b16 %v578, %v574
          %v639 = vpack.c.b16 %v583, %v579
          %v640 = vpack.c.b16 %v584, %v580
          %v641 = vpack.c.b16 %v585, %v581
          %v642 = vpack.c.b16 %v586, %v582
          %v643 = vpack.c.b16 %v591, %v587
          %v644 = vpack.c.b16 %v592, %v588
          %v645 = vpack.c.b16 %v593, %v589
          %v646 = vpack.c.b16 %v594, %v590
          %v647 = vpack.c.b16 %v599, %v595
          %v648 = vpack.c.b16 %v600, %v596
          %v649 = vpack.c.b16 %v601, %v597
          %v650 = vpack.c.b16 %v602, %v598
          %v651 = vpack.c.b16 %v607, %v603
          %v652 = vpack.c.b16 %v608, %v604
          %v653 = vpack.c.b16 %v609, %v605
          %v654 = vpack.c.b16 %v610, %v606
          %v655 = vpack.c.b16 %v615, %v611
          %v656 = vpack.c.b16 %v616, %v612
          %v657 = vpack.c.b16 %v617, %v613
          %v658 = vpack.c.b16 %v618, %v614
          %v659 = vpack.c.b16 %v623, %v619
          %v660 = vpack.c.b16 %v624, %v620
          %v661 = vpack.c.b16 %v625, %v621
          %v662 = vpack.c.b16 %v626, %v622
          %v663 = vpack.c.b16 %v631, %v627
          %v664 = vpack.c.b16 %v632, %v628
          %v665 = vpack.c.b16 %v633, %v629
          %v666 = vpack.c.b16 %v634, %v630
          %v763 = vunpack.c.l.b16 %v438
          %v764 = vunpack.c.l.b16 %v439
          %v765 = vunpack.c.l.b16 %v440
          %v766 = vunpack.c.l.b16 %v441
          %v767 = vunpack.c.l.b16 %v442
          %v768 = vunpack.c.l.b16 %v443
          %v769 = vunpack.c.l.b16 %v444
          %v770 = vunpack.c.l.b16 %v445
          %v771 = vunpack.c.l.b16 %v446
          %v772 = vunpack.c.l.b16 %v447
          %v773 = vunpack.c.l.b16 %v448
          %v774 = vunpack.c.l.b16 %v449
          %v775 = vunpack.c.l.b16 %v450
          %v776 = vunpack.c.l.b16 %v451
          %v777 = vunpack.c.l.b16 %v452
          %v778 = vunpack.c.l.b16 %v453
          %v779 = vunpack.c.l.b16 %v454
          %v780 = vunpack.c.l.b16 %v455
          %v781 = vunpack.c.l.b16 %v456
          %v782 = vunpack.c.l.b16 %v457
          %v783 = vunpack.c.l.b16 %v458
          %v784 = vunpack.c.l.b16 %v459
          %v785 = vunpack.c.l.b16 %v460
          %v786 = vunpack.c.l.b16 %v461
          %v787 = vunpack.c.l.b16 %v462
          %v788 = vunpack.c.l.b16 %v463
          %v789 = vunpack.c.l.b16 %v464
          %v790 = vunpack.c.l.b16 %v465
          %v791 = vunpack.c.l.b16 %v466
          %v792 = vunpack.c.l.b16 %v467
          %v793 = vunpack.c.l.b16 %v468
          %v794 = vunpack.c.l.b16 %v469
          %v795 = vunpack.c.l.b16 %v470
          %v796 = vunpack.c.l.b16 %v471
          %v797 = vunpack.c.l.b16 %v472
          %v798 = vunpack.c.l.b16 %v473
          %v799 = vunpack.c.l.b16 %v474
          %v800 = vunpack.c.l.b16 %v475
          %v801 = vunpack.c.l.b16 %v476
          %v802 = vunpack.c.l.b16 %v477
          %v803 = vunpack.c.l.b16 %v478
          %v804 = vunpack.c.l.b16 %v479
          %v805 = vunpack.c.l.b16 %v480
          %v806 = vunpack.c.l.b16 %v481
          %v807 = vunpack.c.l.b16 %v482
          %v808 = vunpack.c.l.b16 %v483
          %v809 = vunpack.c.l.b16 %v484
          %v810 = vunpack.c.l.b16 %v485
          %v811 = vunpack.c.l.b16 %v486
          %v812 = vunpack.c.l.b16 %v487
          %v813 = vunpack.c.l.b16 %v488
          %v814 = vunpack.c.l.b16 %v489
          %v815 = vunpack.c.l.b16 %v490
          %v816 = vunpack.c.l.b16 %v491
          %v817 = vunpack.c.l.b16 %v492
          %v818 = vunpack.c.l.b16 %v493
          %v819 = vunpack.c.l.b16 %v494
          %v820 = vunpack.c.l.b16 %v495
          %v821 = vunpack.c.l.b16 %v496
          %v822 = vunpack.c.l.b16 %v497
          %v823 = vunpack.c.l.b16 %v498
          %v824 = vunpack.c.l.b16 %v499
          %v825 = vunpack.c.l.b16 %v500
          %v826 = vunpack.c.l.b16 %v501
          %v827 = vpack.c.b16 %v764, %v763
          %v828 = vpack.c.b16 %v766, %v765
          %v829 = vpack.c.b16 %v768, %v767
          %v830 = vpack.c.b16 %v770, %v769
          %v831 = vpack.c.b16 %v772, %v771
          %v832 = vpack.c.b16 %v774, %v773
          %v833 = vpack.c.b16 %v776, %v775
          %v834 = vpack.c.b16 %v778, %v777
          %v835 = vpack.c.b16 %v780, %v779
          %v836 = vpack.c.b16 %v782, %v781
          %v837 = vpack.c.b16 %v784, %v783
          %v838 = vpack.c.b16 %v786, %v785
          %v839 = vpack.c.b16 %v788, %v787
          %v840 = vpack.c.b16 %v790, %v789
          %v841 = vpack.c.b16 %v792, %v791
          %v842 = vpack.c.b16 %v794, %v793
          %v843 = vpack.c.b16 %v796, %v795
          %v844 = vpack.c.b16 %v798, %v797
          %v845 = vpack.c.b16 %v800, %v799
          %v846 = vpack.c.b16 %v802, %v801
          %v847 = vpack.c.b16 %v804, %v803
          %v848 = vpack.c.b16 %v806, %v805
          %v849 = vpack.c.b16 %v808, %v807
          %v850 = vpack.c.b16 %v810, %v809
          %v851 = vpack.c.b16 %v812, %v811
          %v852 = vpack.c.b16 %v814, %v813
          %v853 = vpack.c.b16 %v816, %v815
          %v854 = vpack.c.b16 %v818, %v817
          %v855 = vpack.c.b16 %v820, %v819
          %v856 = vpack.c.b16 %v822, %v821
          %v857 = vpack.c.b16 %v824, %v823
          %v858 = vpack.c.b16 %v826, %v825
          %891 = vmatpush.bf16.msra.mxu0 %v834
          %892 = vmatpush.bf16.msra.mxu0 %v833
          %893 = vmatpush.bf16.msra.mxu0 %v832
          %894 = vmatpush.bf16.msra.mxu0 %v831
          %895 = vmatpush.bf16.msra.mxu0 %v830
          %896 = vmatpush.bf16.msra.mxu0 %v829
          %897 = vmatpush.bf16.msra.mxu0 %v828
          %898 = vmatpush.bf16.msra.mxu0 %v827
          %899 = vmatmul.bf16.gmra.mxu0 %v635
          %v900 = vpop.f32.mrf.mxu0
          %v901 = vadd.f32 0.0, %v900
          %v902 = vpop.f32.mrf.mxu0
          %v903 = vadd.f32 0.0, %v902
          %904 = vmatmul.bf16.gmra.mxu0 %v639
          %v905 = vpop.f32.mrf.mxu0
          %v906 = vadd.f32 0.0, %v905
          %v907 = vpop.f32.mrf.mxu0
          %v908 = vadd.f32 0.0, %v907
          %909 = vmatmul.bf16.gmra.mxu0 %v643
          %v910 = vpop.f32.mrf.mxu0
          %v911 = vadd.f32 0.0, %v910
          %v912 = vpop.f32.mrf.mxu0
          %v913 = vadd.f32 0.0, %v912
          %914 = vmatmul.bf16.gmra.mxu0 %v647
          %v915 = vpop.f32.mrf.mxu0
          %v916 = vadd.f32 0.0, %v915
          %v917 = vpop.f32.mrf.mxu0
          %v918 = vadd.f32 0.0, %v917
          %919 = vmatmul.bf16.gmra.mxu0 %v651
          %v920 = vpop.f32.mrf.mxu0
          %v921 = vadd.f32 0.0, %v920
          %v922 = vpop.f32.mrf.mxu0
          %v923 = vadd.f32 0.0, %v922
          %924 = vmatmul.bf16.gmra.mxu0 %v655
          %v925 = vpop.f32.mrf.mxu0
          %v926 = vadd.f32 0.0, %v925
          %v927 = vpop.f32.mrf.mxu0
          %v928 = vadd.f32 0.0, %v927
          %929 = vmatmul.bf16.gmra.mxu0 %v659
          %v930 = vpop.f32.mrf.mxu0
          %v931 = vadd.f32 0.0, %v930
          %v932 = vpop.f32.mrf.mxu0
          %v933 = vadd.f32 0.0, %v932
          %934 = vmatmul.bf16.gmra.mxu0 %v663
          %v935 = vpop.f32.mrf.mxu0
          %v936 = vadd.f32 0.0, %v935
          %v937 = vpop.f32.mrf.mxu0
          %v938 = vadd.f32 0.0, %v937
          %939 = vdwg.mxu0
          %940 = vmatpush.bf16.msra.mxu0 %v842
          %941 = vmatpush.bf16.msra.mxu0 %v841
          %942 = vmatpush.bf16.msra.mxu0 %v840
          %943 = vmatpush.bf16.msra.mxu0 %v839
          %944 = vmatpush.bf16.msra.mxu0 %v838
          %945 = vmatpush.bf16.msra.mxu0 %v837
          %946 = vmatpush.bf16.msra.mxu0 %v836
          %947 = vmatpush.bf16.msra.mxu0 %v835
          %948 = vmatmul.bf16.gmra.mxu0 %v636
          %v949 = vpop.f32.mrf.mxu0
          %v950 = vadd.f32 %v901, %v949
          %v951 = vpop.f32.mrf.mxu0
          %v952 = vadd.f32 %v903, %v951
          %953 = vmatmul.bf16.gmra.mxu0 %v640
          %v954 = vpop.f32.mrf.mxu0
          %v955 = vadd.f32 %v906, %v954
          %v956 = vpop.f32.mrf.mxu0
          %v957 = vadd.f32 %v908, %v956
          %958 = vmatmul.bf16.gmra.mxu0 %v644
          %v959 = vpop.f32.mrf.mxu0
          %v960 = vadd.f32 %v911, %v959
          %v961 = vpop.f32.mrf.mxu0
          %v962 = vadd.f32 %v913, %v961
          %963 = vmatmul.bf16.gmra.mxu0 %v648
          %v964 = vpop.f32.mrf.mxu0
          %v965 = vadd.f32 %v916, %v964
          %v966 = vpop.f32.mrf.mxu0
          %v967 = vadd.f32 %v918, %v966
          %968 = vmatmul.bf16.gmra.mxu0 %v652
          %v969 = vpop.f32.mrf.mxu0
          %v970 = vadd.f32 %v921, %v969
          %v971 = vpop.f32.mrf.mxu0
          %v972 = vadd.f32 %v923, %v971
          %973 = vmatmul.bf16.gmra.mxu0 %v656
          %v974 = vpop.f32.mrf.mxu0
          %v975 = vadd.f32 %v926, %v974
          %v976 = vpop.f32.mrf.mxu0
          %v977 = vadd.f32 %v928, %v976
          %978 = vmatmul.bf16.gmra.mxu0 %v660
          %v979 = vpop.f32.mrf.mxu0
          %v980 = vadd.f32 %v931, %v979
          %v981 = vpop.f32.mrf.mxu0
          %v982 = vadd.f32 %v933, %v981
          %983 = vmatmul.bf16.gmra.mxu0 %v664
          %v984 = vpop.f32.mrf.mxu0
          %v985 = vadd.f32 %v936, %v984
          %v986 = vpop.f32.mrf.mxu0
          %v987 = vadd.f32 %v938, %v986
          %988 = vdwg.mxu0
          %989 = vmatpush.bf16.msra.mxu0 %v850
          %990 = vmatpush.bf16.msra.mxu0 %v849
          %991 = vmatpush.bf16.msra.mxu0 %v848
          %992 = vmatpush.bf16.msra.mxu0 %v847
          %993 = vmatpush.bf16.msra.mxu0 %v846
          %994 = vmatpush.bf16.msra.mxu0 %v845
          %995 = vmatpush.bf16.msra.mxu0 %v844
          %996 = vmatpush.bf16.msra.mxu0 %v843
          %997 = vmatmul.bf16.gmra.mxu0 %v637
          %v998 = vpop.f32.mrf.mxu0
          %v999 = vadd.f32 %v950, %v998
          %v1000 = vpop.f32.mrf.mxu0
          %v1001 = vadd.f32 %v952, %v1000
          %1002 = vmatmul.bf16.gmra.mxu0 %v641
          %v1003 = vpop.f32.mrf.mxu0
          %v1004 = vadd.f32 %v955, %v1003
          %v1005 = vpop.f32.mrf.mxu0
          %v1006 = vadd.f32 %v957, %v1005
          %1007 = vmatmul.bf16.gmra.mxu0 %v645
          %v1008 = vpop.f32.mrf.mxu0
          %v1009 = vadd.f32 %v960, %v1008
          %v1010 = vpop.f32.mrf.mxu0
          %v1011 = vadd.f32 %v962, %v1010
          %1012 = vmatmul.bf16.gmra.mxu0 %v649
          %v1013 = vpop.f32.mrf.mxu0
          %v1014 = vadd.f32 %v965, %v1013
          %v1015 = vpop.f32.mrf.mxu0
          %v1016 = vadd.f32 %v967, %v1015
          %1017 = vmatmul.bf16.gmra.mxu0 %v653
          %v1018 = vpop.f32.mrf.mxu0
          %v1019 = vadd.f32 %v970, %v1018
          %v1020 = vpop.f32.mrf.mxu0
          %v1021 = vadd.f32 %v972, %v1020
          %1022 = vmatmul.bf16.gmra.mxu0 %v657
          %v1023 = vpop.f32.mrf.mxu0
          %v1024 = vadd.f32 %v975, %v1023
          %v1025 = vpop.f32.mrf.mxu0
          %v1026 = vadd.f32 %v977, %v1025
          %1027 = vmatmul.bf16.gmra.mxu0 %v661
          %v1028 = vpop.f32.mrf.mxu0
          %v1029 = vadd.f32 %v980, %v1028
          %v1030 = vpop.f32.mrf.mxu0
          %v1031 = vadd.f32 %v982, %v1030
          %1032 = vmatmul.bf16.gmra.mxu0 %v665
          %v1033 = vpop.f32.mrf.mxu0
          %v1034 = vadd.f32 %v985, %v1033
          %v1035 = vpop.f32.mrf.mxu0
          %v1036 = vadd.f32 %v987, %v1035
          %1037 = vdwg.mxu0
          %1038 = vmatpush.bf16.msra.mxu0 %v858
          %1039 = vmatpush.bf16.msra.mxu0 %v857
          %1040 = vmatpush.bf16.msra.mxu0 %v856
          %1041 = vmatpush.bf16.msra.mxu0 %v855
          %1042 = vmatpush.bf16.msra.mxu0 %v854
          %1043 = vmatpush.bf16.msra.mxu0 %v853
          %1044 = vmatpush.bf16.msra.mxu0 %v852
          %1045 = vmatpush.bf16.msra.mxu0 %v851
          %1046 = vmatmul.bf16.gmra.mxu0 %v638
          %v1047 = vpop.f32.mrf.mxu0
          %v1048 = vadd.f32 %v999, %v1047
          %v1049 = vpop.f32.mrf.mxu0
          %v1050 = vadd.f32 %v1001, %v1049
          %1051 = vmatmul.bf16.gmra.mxu0 %v642
          %v1052 = vpop.f32.mrf.mxu0
          %v1053 = vadd.f32 %v1004, %v1052
          %v1054 = vpop.f32.mrf.mxu0
          %v1055 = vadd.f32 %v1006, %v1054
          %1056 = vmatmul.bf16.gmra.mxu0 %v646
          %v1057 = vpop.f32.mrf.mxu0
          %v1058 = vadd.f32 %v1009, %v1057
          %v1059 = vpop.f32.mrf.mxu0
          %v1060 = vadd.f32 %v1011, %v1059
          %1061 = vmatmul.bf16.gmra.mxu0 %v650
          %v1062 = vpop.f32.mrf.mxu0
          %v1063 = vadd.f32 %v1014, %v1062
          %v1064 = vpop.f32.mrf.mxu0
          %v1065 = vadd.f32 %v1016, %v1064
          %1066 = vmatmul.bf16.gmra.mxu0 %v654
          %v1067 = vpop.f32.mrf.mxu0
          %v1068 = vadd.f32 %v1019, %v1067
          %v1069 = vpop.f32.mrf.mxu0
          %v1070 = vadd.f32 %v1021, %v1069
          %1071 = vmatmul.bf16.gmra.mxu0 %v658
          %v1072 = vpop.f32.mrf.mxu0
          %v1073 = vadd.f32 %v1024, %v1072
          %v1074 = vpop.f32.mrf.mxu0
          %v1075 = vadd.f32 %v1026, %v1074
          %1076 = vmatmul.bf16.gmra.mxu0 %v662
          %v1077 = vpop.f32.mrf.mxu0
          %v1078 = vadd.f32 %v1029, %v1077
          %v1079 = vpop.f32.mrf.mxu0
          %v1080 = vadd.f32 %v1031, %v1079
          %1081 = vmatmul.bf16.gmra.mxu0 %v666
          %v1082 = vpop.f32.mrf.mxu0
          %v1083 = vadd.f32 %v1034, %v1082
          %v1084 = vpop.f32.mrf.mxu0
          %v1085 = vadd.f32 %v1036, %v1084
          %1086 = vdwg.mxu0
          %s1087 = sadd.s32 %s504, 256
          %s1088 = smul.addr %s1087, 4
          %s1089 = scalar_lea.vmem [#allocation2], %s1088
          %v1090 = vld [vmem:[%s1089] sm:$0xff]
          %v1091 = vld [vmem:[%s1089 + $0x8] sm:$0xff]
          %v1092 = vld [vmem:[%s1089 + $0x10] sm:$0xff]
          %v1093 = vld [vmem:[%s1089 + $0x18] sm:$0xff]
          %v1094 = vld [vmem:[%s1089 + $0x20] sm:$0xff]
          %v1095 = vld [vmem:[%s1089 + $0x28] sm:$0xff]
          %v1096 = vld [vmem:[%s1089 + $0x30] sm:$0xff]
          %v1097 = vld [vmem:[%s1089 + $0x38] sm:$0xff]
          %v1098 = vld [vmem:[%s1089 + $0x40] sm:$0xff]
          %v1099 = vld [vmem:[%s1089 + $0x48] sm:$0xff]
          %v1100 = vld [vmem:[%s1089 + $0x50] sm:$0xff]
          %v1101 = vld [vmem:[%s1089 + $0x58] sm:$0xff]
          %v1102 = vld [vmem:[%s1089 + $0x60] sm:$0xff]
          %v1103 = vld [vmem:[%s1089 + $0x68] sm:$0xff]
          %v1104 = vld [vmem:[%s1089 + $0x70] sm:$0xff]
          %v1105 = vld [vmem:[%s1089 + $0x78] sm:$0xff]
          %v1106 = vld [vmem:[%s1089 + $0x80] sm:$0xff]
          %v1107 = vld [vmem:[%s1089 + $0x88] sm:$0xff]
          %v1108 = vld [vmem:[%s1089 + $0x90] sm:$0xff]
          %v1109 = vld [vmem:[%s1089 + $0x98] sm:$0xff]
          %v1110 = vld [vmem:[%s1089 + $0xa0] sm:$0xff]
          %v1111 = vld [vmem:[%s1089 + $0xa8] sm:$0xff]
          %v1112 = vld [vmem:[%s1089 + $0xb0] sm:$0xff]
          %v1113 = vld [vmem:[%s1089 + $0xb8] sm:$0xff]
          %v1114 = vld [vmem:[%s1089 + $0xc0] sm:$0xff]
          %v1115 = vld [vmem:[%s1089 + $0xc8] sm:$0xff]
          %v1116 = vld [vmem:[%s1089 + $0xd0] sm:$0xff]
          %v1117 = vld [vmem:[%s1089 + $0xd8] sm:$0xff]
          %v1118 = vld [vmem:[%s1089 + $0xe0] sm:$0xff]
          %v1119 = vld [vmem:[%s1089 + $0xe8] sm:$0xff]
          %v1120 = vld [vmem:[%s1089 + $0xf0] sm:$0xff]
          %v1121 = vld [vmem:[%s1089 + $0xf8] sm:$0xff]
          %v1154 = vunpack.c.l.b16 %v1090
          %v1155 = vunpack.c.h.b16 %v1090
          %v1156 = vunpack.c.l.b16 %v1091
          %v1157 = vunpack.c.h.b16 %v1091
          %v1158 = vunpack.c.l.b16 %v1092
          %v1159 = vunpack.c.h.b16 %v1092
          %v1160 = vunpack.c.l.b16 %v1093
          %v1161 = vunpack.c.h.b16 %v1093
          %v1162 = vunpack.c.l.b16 %v1094
          %v1163 = vunpack.c.h.b16 %v1094
          %v1164 = vunpack.c.l.b16 %v1095
          %v1165 = vunpack.c.h.b16 %v1095
          %v1166 = vunpack.c.l.b16 %v1096
          %v1167 = vunpack.c.h.b16 %v1096
          %v1168 = vunpack.c.l.b16 %v1097
          %v1169 = vunpack.c.h.b16 %v1097
          %v1170 = vunpack.c.l.b16 %v1098
          %v1171 = vunpack.c.h.b16 %v1098
          %v1172 = vunpack.c.l.b16 %v1099
          %v1173 = vunpack.c.h.b16 %v1099
          %v1174 = vunpack.c.l.b16 %v1100
          %v1175 = vunpack.c.h.b16 %v1100
          %v1176 = vunpack.c.l.b16 %v1101
          %v1177 = vunpack.c.h.b16 %v1101
          %v1178 = vunpack.c.l.b16 %v1102
          %v1179 = vunpack.c.h.b16 %v1102
          %v1180 = vunpack.c.l.b16 %v1103
          %v1181 = vunpack.c.h.b16 %v1103
          %v1182 = vunpack.c.l.b16 %v1104
          %v1183 = vunpack.c.h.b16 %v1104
          %v1184 = vunpack.c.l.b16 %v1105
          %v1185 = vunpack.c.h.b16 %v1105
          %v1186 = vunpack.c.l.b16 %v1106
          %v1187 = vunpack.c.h.b16 %v1106
          %v1188 = vunpack.c.l.b16 %v1107
          %v1189 = vunpack.c.h.b16 %v1107
          %v1190 = vunpack.c.l.b16 %v1108
          %v1191 = vunpack.c.h.b16 %v1108
          %v1192 = vunpack.c.l.b16 %v1109
          %v1193 = vunpack.c.h.b16 %v1109
          %v1194 = vunpack.c.l.b16 %v1110
          %v1195 = vunpack.c.h.b16 %v1110
          %v1196 = vunpack.c.l.b16 %v1111
          %v1197 = vunpack.c.h.b16 %v1111
          %v1198 = vunpack.c.l.b16 %v1112
          %v1199 = vunpack.c.h.b16 %v1112
          %v1200 = vunpack.c.l.b16 %v1113
          %v1201 = vunpack.c.h.b16 %v1113
          %v1202 = vunpack.c.l.b16 %v1114
          %v1203 = vunpack.c.h.b16 %v1114
          %v1204 = vunpack.c.l.b16 %v1115
          %v1205 = vunpack.c.h.b16 %v1115
          %v1206 = vunpack.c.l.b16 %v1116
          %v1207 = vunpack.c.h.b16 %v1116
          %v1208 = vunpack.c.l.b16 %v1117
          %v1209 = vunpack.c.h.b16 %v1117
          %v1210 = vunpack.c.l.b16 %v1118
          %v1211 = vunpack.c.h.b16 %v1118
          %v1212 = vunpack.c.l.b16 %v1119
          %v1213 = vunpack.c.h.b16 %v1119
          %v1214 = vunpack.c.l.b16 %v1120
          %v1215 = vunpack.c.h.b16 %v1120
          %v1216 = vunpack.c.l.b16 %v1121
          %v1217 = vunpack.c.h.b16 %v1121
          %v1218 = vpack.c.b16 %v1158, %v1154
          %v1219 = vpack.c.b16 %v1159, %v1155
          %v1220 = vpack.c.b16 %v1160, %v1156
          %v1221 = vpack.c.b16 %v1161, %v1157
          %v1222 = vpack.c.b16 %v1166, %v1162
          %v1223 = vpack.c.b16 %v1167, %v1163
          %v1224 = vpack.c.b16 %v1168, %v1164
          %v1225 = vpack.c.b16 %v1169, %v1165
          %v1226 = vpack.c.b16 %v1174, %v1170
          %v1227 = vpack.c.b16 %v1175, %v1171
          %v1228 = vpack.c.b16 %v1176, %v1172
          %v1229 = vpack.c.b16 %v1177, %v1173
          %v1230 = vpack.c.b16 %v1182, %v1178
          %v1231 = vpack.c.b16 %v1183, %v1179
          %v1232 = vpack.c.b16 %v1184, %v1180
          %v1233 = vpack.c.b16 %v1185, %v1181
          %v1234 = vpack.c.b16 %v1190, %v1186
          %v1235 = vpack.c.b16 %v1191, %v1187
          %v1236 = vpack.c.b16 %v1192, %v1188
          %v1237 = vpack.c.b16 %v1193, %v1189
          %v1238 = vpack.c.b16 %v1198, %v1194
          %v1239 = vpack.c.b16 %v1199, %v1195
          %v1240 = vpack.c.b16 %v1200, %v1196
          %v1241 = vpack.c.b16 %v1201, %v1197
          %v1242 = vpack.c.b16 %v1206, %v1202
          %v1243 = vpack.c.b16 %v1207, %v1203
          %v1244 = vpack.c.b16 %v1208, %v1204
          %v1245 = vpack.c.b16 %v1209, %v1205
          %v1246 = vpack.c.b16 %v1214, %v1210
          %v1247 = vpack.c.b16 %v1215, %v1211
          %v1248 = vpack.c.b16 %v1216, %v1212
          %v1249 = vpack.c.b16 %v1217, %v1213
          %1282 = vmatpush.bf16.msra.mxu0 %v834
          %1283 = vmatpush.bf16.msra.mxu0 %v833
          %1284 = vmatpush.bf16.msra.mxu0 %v832
          %1285 = vmatpush.bf16.msra.mxu0 %v831
          %1286 = vmatpush.bf16.msra.mxu0 %v830
          %1287 = vmatpush.bf16.msra.mxu0 %v829
          %1288 = vmatpush.bf16.msra.mxu0 %v828
          %1289 = vmatpush.bf16.msra.mxu0 %v827
          %1290 = vmatmul.bf16.gmra.mxu0 %v1218
          %v1291 = vpop.f32.mrf.mxu0
          %v1292 = vadd.f32 0.0, %v1291
          %v1293 = vpop.f32.mrf.mxu0
          %v1294 = vadd.f32 0.0, %v1293
          %1295 = vmatmul.bf16.gmra.mxu0 %v1222
          %v1296 = vpop.f32.mrf.mxu0
          %v1297 = vadd.f32 0.0, %v1296
          %v1298 = vpop.f32.mrf.mxu0
          %v1299 = vadd.f32 0.0, %v1298
          %1300 = vmatmul.bf16.gmra.mxu0 %v1226
          %v1301 = vpop.f32.mrf.mxu0
          %v1302 = vadd.f32 0.0, %v1301
          %v1303 = vpop.f32.mrf.mxu0
          %v1304 = vadd.f32 0.0, %v1303
          %1305 = vmatmul.bf16.gmra.mxu0 %v1230
          %v1306 = vpop.f32.mrf.mxu0
          %v1307 = vadd.f32 0.0, %v1306
          %v1308 = vpop.f32.mrf.mxu0
          %v1309 = vadd.f32 0.0, %v1308
          %1310 = vmatmul.bf16.gmra.mxu0 %v1234
          %v1311 = vpop.f32.mrf.mxu0
          %v1312 = vadd.f32 0.0, %v1311
          %v1313 = vpop.f32.mrf.mxu0
          %v1314 = vadd.f32 0.0, %v1313
          %1315 = vmatmul.bf16.gmra.mxu0 %v1238
          %v1316 = vpop.f32.mrf.mxu0
          %v1317 = vadd.f32 0.0, %v1316
          %v1318 = vpop.f32.mrf.mxu0
          %v1319 = vadd.f32 0.0, %v1318
          %1320 = vmatmul.bf16.gmra.mxu0 %v1242
          %v1321 = vpop.f32.mrf.mxu0
          %v1322 = vadd.f32 0.0, %v1321
          %v1323 = vpop.f32.mrf.mxu0
          %v1324 = vadd.f32 0.0, %v1323
          %1325 = vmatmul.bf16.gmra.mxu0 %v1246
          %v1326 = vpop.f32.mrf.mxu0
          %v1327 = vadd.f32 0.0, %v1326
          %v1328 = vpop.f32.mrf.mxu0
          %v1329 = vadd.f32 0.0, %v1328
          %1330 = vdwg.mxu0
          %1331 = vmatpush.bf16.msra.mxu0 %v842
          %1332 = vmatpush.bf16.msra.mxu0 %v841
          %1333 = vmatpush.bf16.msra.mxu0 %v840
          %1334 = vmatpush.bf16.msra.mxu0 %v839
          %1335 = vmatpush.bf16.msra.mxu0 %v838
          %1336 = vmatpush.bf16.msra.mxu0 %v837
          %1337 = vmatpush.bf16.msra.mxu0 %v836
          %1338 = vmatpush.bf16.msra.mxu0 %v835
          %1339 = vmatmul.bf16.gmra.mxu0 %v1219
          %v1340 = vpop.f32.mrf.mxu0
          %v1341 = vadd.f32 %v1292, %v1340
          %v1342 = vpop.f32.mrf.mxu0
          %v1343 = vadd.f32 %v1294, %v1342
          %1344 = vmatmul.bf16.gmra.mxu0 %v1223
          %v1345 = vpop.f32.mrf.mxu0
          %v1346 = vadd.f32 %v1297, %v1345
          %v1347 = vpop.f32.mrf.mxu0
          %v1348 = vadd.f32 %v1299, %v1347
          %1349 = vmatmul.bf16.gmra.mxu0 %v1227
          %v1350 = vpop.f32.mrf.mxu0
          %v1351 = vadd.f32 %v1302, %v1350
          %v1352 = vpop.f32.mrf.mxu0
          %v1353 = vadd.f32 %v1304, %v1352
          %1354 = vmatmul.bf16.gmra.mxu0 %v1231
          %v1355 = vpop.f32.mrf.mxu0
          %v1356 = vadd.f32 %v1307, %v1355
          %v1357 = vpop.f32.mrf.mxu0
          %v1358 = vadd.f32 %v1309, %v1357
          %1359 = vmatmul.bf16.gmra.mxu0 %v1235
          %v1360 = vpop.f32.mrf.mxu0
          %v1361 = vadd.f32 %v1312, %v1360
          %v1362 = vpop.f32.mrf.mxu0
          %v1363 = vadd.f32 %v1314, %v1362
          %1364 = vmatmul.bf16.gmra.mxu0 %v1239
          %v1365 = vpop.f32.mrf.mxu0
          %v1366 = vadd.f32 %v1317, %v1365
          %v1367 = vpop.f32.mrf.mxu0
          %v1368 = vadd.f32 %v1319, %v1367
          %1369 = vmatmul.bf16.gmra.mxu0 %v1243
          %v1370 = vpop.f32.mrf.mxu0
          %v1371 = vadd.f32 %v1322, %v1370
          %v1372 = vpop.f32.mrf.mxu0
          %v1373 = vadd.f32 %v1324, %v1372
          %1374 = vmatmul.bf16.gmra.mxu0 %v1247
          %v1375 = vpop.f32.mrf.mxu0
          %v1376 = vadd.f32 %v1327, %v1375
          %v1377 = vpop.f32.mrf.mxu0
          %v1378 = vadd.f32 %v1329, %v1377
          %1379 = vdwg.mxu0
          %1380 = vmatpush.bf16.msra.mxu0 %v850
          %1381 = vmatpush.bf16.msra.mxu0 %v849
          %1382 = vmatpush.bf16.msra.mxu0 %v848
          %1383 = vmatpush.bf16.msra.mxu0 %v847
          %1384 = vmatpush.bf16.msra.mxu0 %v846
          %1385 = vmatpush.bf16.msra.mxu0 %v845
          %1386 = vmatpush.bf16.msra.mxu0 %v844
          %1387 = vmatpush.bf16.msra.mxu0 %v843
          %1388 = vmatmul.bf16.gmra.mxu0 %v1220
          %v1389 = vpop.f32.mrf.mxu0
          %v1390 = vadd.f32 %v1341, %v1389
          %v1391 = vpop.f32.mrf.mxu0
          %v1392 = vadd.f32 %v1343, %v1391
          %1393 = vmatmul.bf16.gmra.mxu0 %v1224
          %v1394 = vpop.f32.mrf.mxu0
          %v1395 = vadd.f32 %v1346, %v1394
          %v1396 = vpop.f32.mrf.mxu0
          %v1397 = vadd.f32 %v1348, %v1396
          %1398 = vmatmul.bf16.gmra.mxu0 %v1228
          %v1399 = vpop.f32.mrf.mxu0
          %v1400 = vadd.f32 %v1351, %v1399
          %v1401 = vpop.f32.mrf.mxu0
          %v1402 = vadd.f32 %v1353, %v1401
          %1403 = vmatmul.bf16.gmra.mxu0 %v1232
          %v1404 = vpop.f32.mrf.mxu0
          %v1405 = vadd.f32 %v1356, %v1404
          %v1406 = vpop.f32.mrf.mxu0
          %v1407 = vadd.f32 %v1358, %v1406
          %1408 = vmatmul.bf16.gmra.mxu0 %v1236
          %v1409 = vpop.f32.mrf.mxu0
          %v1410 = vadd.f32 %v1361, %v1409
          %v1411 = vpop.f32.mrf.mxu0
          %v1412 = vadd.f32 %v1363, %v1411
          %1413 = vmatmul.bf16.gmra.mxu0 %v1240
          %v1414 = vpop.f32.mrf.mxu0
          %v1415 = vadd.f32 %v1366, %v1414
          %v1416 = vpop.f32.mrf.mxu0
          %v1417 = vadd.f32 %v1368, %v1416
          %1418 = vmatmul.bf16.gmra.mxu0 %v1244
          %v1419 = vpop.f32.mrf.mxu0
          %v1420 = vadd.f32 %v1371, %v1419
          %v1421 = vpop.f32.mrf.mxu0
          %v1422 = vadd.f32 %v1373, %v1421
          %1423 = vmatmul.bf16.gmra.mxu0 %v1248
          %v1424 = vpop.f32.mrf.mxu0
          %v1425 = vadd.f32 %v1376, %v1424
          %v1426 = vpop.f32.mrf.mxu0
          %v1427 = vadd.f32 %v1378, %v1426
          %1428 = vdwg.mxu0
          %1429 = vmatpush.bf16.msra.mxu0 %v858
          %1430 = vmatpush.bf16.msra.mxu0 %v857
          %1431 = vmatpush.bf16.msra.mxu0 %v856
          %1432 = vmatpush.bf16.msra.mxu0 %v855
          %1433 = vmatpush.bf16.msra.mxu0 %v854
          %1434 = vmatpush.bf16.msra.mxu0 %v853
          %1435 = vmatpush.bf16.msra.mxu0 %v852
          %1436 = vmatpush.bf16.msra.mxu0 %v851
          %1437 = vmatmul.bf16.gmra.mxu0 %v1221
          %v1438 = vpop.f32.mrf.mxu0
          %v1439 = vadd.f32 %v1390, %v1438
          %v1440 = vpop.f32.mrf.mxu0
          %v1441 = vadd.f32 %v1392, %v1440
          %1442 = vmatmul.bf16.gmra.mxu0 %v1225
          %v1443 = vpop.f32.mrf.mxu0
          %v1444 = vadd.f32 %v1395, %v1443
          %v1445 = vpop.f32.mrf.mxu0
          %v1446 = vadd.f32 %v1397, %v1445
          %1447 = vmatmul.bf16.gmra.mxu0 %v1229
          %v1448 = vpop.f32.mrf.mxu0
          %v1449 = vadd.f32 %v1400, %v1448
          %v1450 = vpop.f32.mrf.mxu0
          %v1451 = vadd.f32 %v1402, %v1450
          %1452 = vmatmul.bf16.gmra.mxu0 %v1233
          %v1453 = vpop.f32.mrf.mxu0
          %v1454 = vadd.f32 %v1405, %v1453
          %v1455 = vpop.f32.mrf.mxu0
          %v1456 = vadd.f32 %v1407, %v1455
          %1457 = vmatmul.bf16.gmra.mxu0 %v1237
          %v1458 = vpop.f32.mrf.mxu0
          %v1459 = vadd.f32 %v1410, %v1458
          %v1460 = vpop.f32.mrf.mxu0
          %v1461 = vadd.f32 %v1412, %v1460
          %1462 = vmatmul.bf16.gmra.mxu0 %v1241
          %v1463 = vpop.f32.mrf.mxu0
          %v1464 = vadd.f32 %v1415, %v1463
          %v1465 = vpop.f32.mrf.mxu0
          %v1466 = vadd.f32 %v1417, %v1465
          %1467 = vmatmul.bf16.gmra.mxu0 %v1245
          %v1468 = vpop.f32.mrf.mxu0
          %v1469 = vadd.f32 %v1420, %v1468
          %v1470 = vpop.f32.mrf.mxu0
          %v1471 = vadd.f32 %v1422, %v1470
          %1472 = vmatmul.bf16.gmra.mxu0 %v1249
          %v1473 = vpop.f32.mrf.mxu0
          %v1474 = vadd.f32 %v1425, %v1473
          %v1475 = vpop.f32.mrf.mxu0
          %v1476 = vadd.f32 %v1427, %v1475
          %1477 = vdwg.mxu0
          %s1478 = sadd.s32 %s504, 512
          %s1479 = smul.addr %s1478, 4
          %s1480 = scalar_lea.vmem [#allocation2], %s1479
          %v1481 = vld [vmem:[%s1480] sm:$0xff]
          %v1482 = vld [vmem:[%s1480 + $0x8] sm:$0xff]
          %v1483 = vld [vmem:[%s1480 + $0x10] sm:$0xff]
          %v1484 = vld [vmem:[%s1480 + $0x18] sm:$0xff]
          %v1485 = vld [vmem:[%s1480 + $0x20] sm:$0xff]
          %v1486 = vld [vmem:[%s1480 + $0x28] sm:$0xff]
          %v1487 = vld [vmem:[%s1480 + $0x30] sm:$0xff]
          %v1488 = vld [vmem:[%s1480 + $0x38] sm:$0xff]
          %v1489 = vld [vmem:[%s1480 + $0x40] sm:$0xff]
          %v1490 = vld [vmem:[%s1480 + $0x48] sm:$0xff]
          %v1491 = vld [vmem:[%s1480 + $0x50] sm:$0xff]
          %v1492 = vld [vmem:[%s1480 + $0x58] sm:$0xff]
          %v1493 = vld [vmem:[%s1480 + $0x60] sm:$0xff]
          %v1494 = vld [vmem:[%s1480 + $0x68] sm:$0xff]
          %v1495 = vld [vmem:[%s1480 + $0x70] sm:$0xff]
          %v1496 = vld [vmem:[%s1480 + $0x78] sm:$0xff]
          %v1497 = vld [vmem:[%s1480 + $0x80] sm:$0xff]
          %v1498 = vld [vmem:[%s1480 + $0x88] sm:$0xff]
          %v1499 = vld [vmem:[%s1480 + $0x90] sm:$0xff]
          %v1500 = vld [vmem:[%s1480 + $0x98] sm:$0xff]
          %v1501 = vld [vmem:[%s1480 + $0xa0] sm:$0xff]
          %v1502 = vld [vmem:[%s1480 + $0xa8] sm:$0xff]
          %v1503 = vld [vmem:[%s1480 + $0xb0] sm:$0xff]
          %v1504 = vld [vmem:[%s1480 + $0xb8] sm:$0xff]
          %v1505 = vld [vmem:[%s1480 + $0xc0] sm:$0xff]
          %v1506 = vld [vmem:[%s1480 + $0xc8] sm:$0xff]
          %v1507 = vld [vmem:[%s1480 + $0xd0] sm:$0xff]
          %v1508 = vld [vmem:[%s1480 + $0xd8] sm:$0xff]
          %v1509 = vld [vmem:[%s1480 + $0xe0] sm:$0xff]
          %v1510 = vld [vmem:[%s1480 + $0xe8] sm:$0xff]
          %v1511 = vld [vmem:[%s1480 + $0xf0] sm:$0xff]
          %v1512 = vld [vmem:[%s1480 + $0xf8] sm:$0xff]
          %v1545 = vunpack.c.l.b16 %v1481
          %v1546 = vunpack.c.h.b16 %v1481
          %v1547 = vunpack.c.l.b16 %v1482
          %v1548 = vunpack.c.h.b16 %v1482
          %v1549 = vunpack.c.l.b16 %v1483
          %v1550 = vunpack.c.h.b16 %v1483
          %v1551 = vunpack.c.l.b16 %v1484
          %v1552 = vunpack.c.h.b16 %v1484
          %v1553 = vunpack.c.l.b16 %v1485
          %v1554 = vunpack.c.h.b16 %v1485
          %v1555 = vunpack.c.l.b16 %v1486
          %v1556 = vunpack.c.h.b16 %v1486
          %v1557 = vunpack.c.l.b16 %v1487
          %v1558 = vunpack.c.h.b16 %v1487
          %v1559 = vunpack.c.l.b16 %v1488
          %v1560 = vunpack.c.h.b16 %v1488
          %v1561 = vunpack.c.l.b16 %v1489
          %v1562 = vunpack.c.h.b16 %v1489
          %v1563 = vunpack.c.l.b16 %v1490
          %v1564 = vunpack.c.h.b16 %v1490
          %v1565 = vunpack.c.l.b16 %v1491
          %v1566 = vunpack.c.h.b16 %v1491
          %v1567 = vunpack.c.l.b16 %v1492
          %v1568 = vunpack.c.h.b16 %v1492
          %v1569 = vunpack.c.l.b16 %v1493
          %v1570 = vunpack.c.h.b16 %v1493
          %v1571 = vunpack.c.l.b16 %v1494
          %v1572 = vunpack.c.h.b16 %v1494
          %v1573 = vunpack.c.l.b16 %v1495
          %v1574 = vunpack.c.h.b16 %v1495
          %v1575 = vunpack.c.l.b16 %v1496
          %v1576 = vunpack.c.h.b16 %v1496
          %v1577 = vunpack.c.l.b16 %v1497
          %v1578 = vunpack.c.h.b16 %v1497
          %v1579 = vunpack.c.l.b16 %v1498
          %v1580 = vunpack.c.h.b16 %v1498
          %v1581 = vunpack.c.l.b16 %v1499
          %v1582 = vunpack.c.h.b16 %v1499
          %v1583 = vunpack.c.l.b16 %v1500
          %v1584 = vunpack.c.h.b16 %v1500
          %v1585 = vunpack.c.l.b16 %v1501
          %v1586 = vunpack.c.h.b16 %v1501
          %v1587 = vunpack.c.l.b16 %v1502
          %v1588 = vunpack.c.h.b16 %v1502
          %v1589 = vunpack.c.l.b16 %v1503
          %v1590 = vunpack.c.h.b16 %v1503
          %v1591 = vunpack.c.l.b16 %v1504
          %v1592 = vunpack.c.h.b16 %v1504
          %v1593 = vunpack.c.l.b16 %v1505
          %v1594 = vunpack.c.h.b16 %v1505
          %v1595 = vunpack.c.l.b16 %v1506
          %v1596 = vunpack.c.h.b16 %v1506
          %v1597 = vunpack.c.l.b16 %v1507
          %v1598 = vunpack.c.h.b16 %v1507
          %v1599 = vunpack.c.l.b16 %v1508
          %v1600 = vunpack.c.h.b16 %v1508
          %v1601 = vunpack.c.l.b16 %v1509
          %v1602 = vunpack.c.h.b16 %v1509
          %v1603 = vunpack.c.l.b16 %v1510
          %v1604 = vunpack.c.h.b16 %v1510
          %v1605 = vunpack.c.l.b16 %v1511
          %v1606 = vunpack.c.h.b16 %v1511
          %v1607 = vunpack.c.l.b16 %v1512
          %v1608 = vunpack.c.h.b16 %v1512
          %v1609 = vpack.c.b16 %v1549, %v1545
          %v1610 = vpack.c.b16 %v1550, %v1546
          %v1611 = vpack.c.b16 %v1551, %v1547
          %v1612 = vpack.c.b16 %v1552, %v1548
          %v1613 = vpack.c.b16 %v1557, %v1553
          %v1614 = vpack.c.b16 %v1558, %v1554
          %v1615 = vpack.c.b16 %v1559, %v1555
          %v1616 = vpack.c.b16 %v1560, %v1556
          %v1617 = vpack.c.b16 %v1565, %v1561
          %v1618 = vpack.c.b16 %v1566, %v1562
          %v1619 = vpack.c.b16 %v1567, %v1563
          %v1620 = vpack.c.b16 %v1568, %v1564
          %v1621 = vpack.c.b16 %v1573, %v1569
          %v1622 = vpack.c.b16 %v1574, %v1570
          %v1623 = vpack.c.b16 %v1575, %v1571
          %v1624 = vpack.c.b16 %v1576, %v1572
          %v1625 = vpack.c.b16 %v1581, %v1577
          %v1626 = vpack.c.b16 %v1582, %v1578
          %v1627 = vpack.c.b16 %v1583, %v1579
          %v1628 = vpack.c.b16 %v1584, %v1580
          %v1629 = vpack.c.b16 %v1589, %v1585
          %v1630 = vpack.c.b16 %v1590, %v1586
          %v1631 = vpack.c.b16 %v1591, %v1587
          %v1632 = vpack.c.b16 %v1592, %v1588
          %v1633 = vpack.c.b16 %v1597, %v1593
          %v1634 = vpack.c.b16 %v1598, %v1594
          %v1635 = vpack.c.b16 %v1599, %v1595
          %v1636 = vpack.c.b16 %v1600, %v1596
          %v1637 = vpack.c.b16 %v1605, %v1601
          %v1638 = vpack.c.b16 %v1606, %v1602
          %v1639 = vpack.c.b16 %v1607, %v1603
          %v1640 = vpack.c.b16 %v1608, %v1604
          %1673 = vmatpush.bf16.msra.mxu0 %v834
          %1674 = vmatpush.bf16.msra.mxu0 %v833
          %1675 = vmatpush.bf16.msra.mxu0 %v832
          %1676 = vmatpush.bf16.msra.mxu0 %v831
          %1677 = vmatpush.bf16.msra.mxu0 %v830
          %1678 = vmatpush.bf16.msra.mxu0 %v829
          %1679 = vmatpush.bf16.msra.mxu0 %v828
          %1680 = vmatpush.bf16.msra.mxu0 %v827
          %1681 = vmatmul.bf16.gmra.mxu0 %v1609
          %v1682 = vpop.f32.mrf.mxu0
          %v1683 = vadd.f32 0.0, %v1682
          %v1684 = vpop.f32.mrf.mxu0
          %v1685 = vadd.f32 0.0, %v1684
          %1686 = vmatmul.bf16.gmra.mxu0 %v1613
          %v1687 = vpop.f32.mrf.mxu0
          %v1688 = vadd.f32 0.0, %v1687
          %v1689 = vpop.f32.mrf.mxu0
          %v1690 = vadd.f32 0.0, %v1689
          %1691 = vmatmul.bf16.gmra.mxu0 %v1617
          %v1692 = vpop.f32.mrf.mxu0
          %v1693 = vadd.f32 0.0, %v1692
          %v1694 = vpop.f32.mrf.mxu0
          %v1695 = vadd.f32 0.0, %v1694
          %1696 = vmatmul.bf16.gmra.mxu0 %v1621
          %v1697 = vpop.f32.mrf.mxu0
          %v1698 = vadd.f32 0.0, %v1697
          %v1699 = vpop.f32.mrf.mxu0
          %v1700 = vadd.f32 0.0, %v1699
          %1701 = vmatmul.bf16.gmra.mxu0 %v1625
          %v1702 = vpop.f32.mrf.mxu0
          %v1703 = vadd.f32 0.0, %v1702
          %v1704 = vpop.f32.mrf.mxu0
          %v1705 = vadd.f32 0.0, %v1704
          %1706 = vmatmul.bf16.gmra.mxu0 %v1629
          %v1707 = vpop.f32.mrf.mxu0
          %v1708 = vadd.f32 0.0, %v1707
          %v1709 = vpop.f32.mrf.mxu0
          %v1710 = vadd.f32 0.0, %v1709
          %1711 = vmatmul.bf16.gmra.mxu0 %v1633
          %v1712 = vpop.f32.mrf.mxu0
          %v1713 = vadd.f32 0.0, %v1712
          %v1714 = vpop.f32.mrf.mxu0
          %v1715 = vadd.f32 0.0, %v1714
          %1716 = vmatmul.bf16.gmra.mxu0 %v1637
          %v1717 = vpop.f32.mrf.mxu0
          %v1718 = vadd.f32 0.0, %v1717
          %v1719 = vpop.f32.mrf.mxu0
          %v1720 = vadd.f32 0.0, %v1719
          %1721 = vdwg.mxu0
          %1722 = vmatpush.bf16.msra.mxu0 %v842
          %1723 = vmatpush.bf16.msra.mxu0 %v841
          %1724 = vmatpush.bf16.msra.mxu0 %v840
          %1725 = vmatpush.bf16.msra.mxu0 %v839
          %1726 = vmatpush.bf16.msra.mxu0 %v838
          %1727 = vmatpush.bf16.msra.mxu0 %v837
          %1728 = vmatpush.bf16.msra.mxu0 %v836
          %1729 = vmatpush.bf16.msra.mxu0 %v835
          %1730 = vmatmul.bf16.gmra.mxu0 %v1610
          %v1731 = vpop.f32.mrf.mxu0
          %v1732 = vadd.f32 %v1683, %v1731
          %v1733 = vpop.f32.mrf.mxu0
          %v1734 = vadd.f32 %v1685, %v1733
          %1735 = vmatmul.bf16.gmra.mxu0 %v1614
          %v1736 = vpop.f32.mrf.mxu0
          %v1737 = vadd.f32 %v1688, %v1736
          %v1738 = vpop.f32.mrf.mxu0
          %v1739 = vadd.f32 %v1690, %v1738
          %1740 = vmatmul.bf16.gmra.mxu0 %v1618
          %v1741 = vpop.f32.mrf.mxu0
          %v1742 = vadd.f32 %v1693, %v1741
          %v1743 = vpop.f32.mrf.mxu0
          %v1744 = vadd.f32 %v1695, %v1743
          %1745 = vmatmul.bf16.gmra.mxu0 %v1622
          %v1746 = vpop.f32.mrf.mxu0
          %v1747 = vadd.f32 %v1698, %v1746
          %v1748 = vpop.f32.mrf.mxu0
          %v1749 = vadd.f32 %v1700, %v1748
          %1750 = vmatmul.bf16.gmra.mxu0 %v1626
          %v1751 = vpop.f32.mrf.mxu0
          %v1752 = vadd.f32 %v1703, %v1751
          %v1753 = vpop.f32.mrf.mxu0
          %v1754 = vadd.f32 %v1705, %v1753
          %1755 = vmatmul.bf16.gmra.mxu0 %v1630
          %v1756 = vpop.f32.mrf.mxu0
          %v1757 = vadd.f32 %v1708, %v1756
          %v1758 = vpop.f32.mrf.mxu0
          %v1759 = vadd.f32 %v1710, %v1758
          %1760 = vmatmul.bf16.gmra.mxu0 %v1634
          %v1761 = vpop.f32.mrf.mxu0
          %v1762 = vadd.f32 %v1713, %v1761
          %v1763 = vpop.f32.mrf.mxu0
          %v1764 = vadd.f32 %v1715, %v1763
          %1765 = vmatmul.bf16.gmra.mxu0 %v1638
          %v1766 = vpop.f32.mrf.mxu0
          %v1767 = vadd.f32 %v1718, %v1766
          %v1768 = vpop.f32.mrf.mxu0
          %v1769 = vadd.f32 %v1720, %v1768
          %1770 = vdwg.mxu0
          %1771 = vmatpush.bf16.msra.mxu0 %v850
          %1772 = vmatpush.bf16.msra.mxu0 %v849
          %1773 = vmatpush.bf16.msra.mxu0 %v848
          %1774 = vmatpush.bf16.msra.mxu0 %v847
          %1775 = vmatpush.bf16.msra.mxu0 %v846
          %1776 = vmatpush.bf16.msra.mxu0 %v845
          %1777 = vmatpush.bf16.msra.mxu0 %v844
          %1778 = vmatpush.bf16.msra.mxu0 %v843
          %1779 = vmatmul.bf16.gmra.mxu0 %v1611
          %v1780 = vpop.f32.mrf.mxu0
          %v1781 = vadd.f32 %v1732, %v1780
          %v1782 = vpop.f32.mrf.mxu0
          %v1783 = vadd.f32 %v1734, %v1782
          %1784 = vmatmul.bf16.gmra.mxu0 %v1615
          %v1785 = vpop.f32.mrf.mxu0
          %v1786 = vadd.f32 %v1737, %v1785
          %v1787 = vpop.f32.mrf.mxu0
          %v1788 = vadd.f32 %v1739, %v1787
          %1789 = vmatmul.bf16.gmra.mxu0 %v1619
          %v1790 = vpop.f32.mrf.mxu0
          %v1791 = vadd.f32 %v1742, %v1790
          %v1792 = vpop.f32.mrf.mxu0
          %v1793 = vadd.f32 %v1744, %v1792
          %1794 = vmatmul.bf16.gmra.mxu0 %v1623
          %v1795 = vpop.f32.mrf.mxu0
          %v1796 = vadd.f32 %v1747, %v1795
          %v1797 = vpop.f32.mrf.mxu0
          %v1798 = vadd.f32 %v1749, %v1797
          %1799 = vmatmul.bf16.gmra.mxu0 %v1627
          %v1800 = vpop.f32.mrf.mxu0
          %v1801 = vadd.f32 %v1752, %v1800
          %v1802 = vpop.f32.mrf.mxu0
          %v1803 = vadd.f32 %v1754, %v1802
          %1804 = vmatmul.bf16.gmra.mxu0 %v1631
          %v1805 = vpop.f32.mrf.mxu0
          %v1806 = vadd.f32 %v1757, %v1805
          %v1807 = vpop.f32.mrf.mxu0
          %v1808 = vadd.f32 %v1759, %v1807
          %1809 = vmatmul.bf16.gmra.mxu0 %v1635
          %v1810 = vpop.f32.mrf.mxu0
          %v1811 = vadd.f32 %v1762, %v1810
          %v1812 = vpop.f32.mrf.mxu0
          %v1813 = vadd.f32 %v1764, %v1812
          %1814 = vmatmul.bf16.gmra.mxu0 %v1639
          %v1815 = vpop.f32.mrf.mxu0
          %v1816 = vadd.f32 %v1767, %v1815
          %v1817 = vpop.f32.mrf.mxu0
          %v1818 = vadd.f32 %v1769, %v1817
          %1819 = vdwg.mxu0
          %1820 = vmatpush.bf16.msra.mxu0 %v858
          %1821 = vmatpush.bf16.msra.mxu0 %v857
          %1822 = vmatpush.bf16.msra.mxu0 %v856
          %1823 = vmatpush.bf16.msra.mxu0 %v855
          %1824 = vmatpush.bf16.msra.mxu0 %v854
          %1825 = vmatpush.bf16.msra.mxu0 %v853
          %1826 = vmatpush.bf16.msra.mxu0 %v852
          %1827 = vmatpush.bf16.msra.mxu0 %v851
          %1828 = vmatmul.bf16.gmra.mxu0 %v1612
          %v1829 = vpop.f32.mrf.mxu0
          %v1830 = vadd.f32 %v1781, %v1829
          %v1831 = vpop.f32.mrf.mxu0
          %v1832 = vadd.f32 %v1783, %v1831
          %1833 = vmatmul.bf16.gmra.mxu0 %v1616
          %v1834 = vpop.f32.mrf.mxu0
          %v1835 = vadd.f32 %v1786, %v1834
          %v1836 = vpop.f32.mrf.mxu0
          %v1837 = vadd.f32 %v1788, %v1836
          %1838 = vmatmul.bf16.gmra.mxu0 %v1620
          %v1839 = vpop.f32.mrf.mxu0
          %v1840 = vadd.f32 %v1791, %v1839
          %v1841 = vpop.f32.mrf.mxu0
          %v1842 = vadd.f32 %v1793, %v1841
          %1843 = vmatmul.bf16.gmra.mxu0 %v1624
          %v1844 = vpop.f32.mrf.mxu0
          %v1845 = vadd.f32 %v1796, %v1844
          %v1846 = vpop.f32.mrf.mxu0
          %v1847 = vadd.f32 %v1798, %v1846
          %1848 = vmatmul.bf16.gmra.mxu0 %v1628
          %v1849 = vpop.f32.mrf.mxu0
          %v1850 = vadd.f32 %v1801, %v1849
          %v1851 = vpop.f32.mrf.mxu0
          %v1852 = vadd.f32 %v1803, %v1851
          %1853 = vmatmul.bf16.gmra.mxu0 %v1632
          %v1854 = vpop.f32.mrf.mxu0
          %v1855 = vadd.f32 %v1806, %v1854
          %v1856 = vpop.f32.mrf.mxu0
          %v1857 = vadd.f32 %v1808, %v1856
          %1858 = vmatmul.bf16.gmra.mxu0 %v1636
          %v1859 = vpop.f32.mrf.mxu0
          %v1860 = vadd.f32 %v1811, %v1859
          %v1861 = vpop.f32.mrf.mxu0
          %v1862 = vadd.f32 %v1813, %v1861
          %1863 = vmatmul.bf16.gmra.mxu0 %v1640
          %v1864 = vpop.f32.mrf.mxu0
          %v1865 = vadd.f32 %v1816, %v1864
          %v1866 = vpop.f32.mrf.mxu0
          %v1867 = vadd.f32 %v1818, %v1866
          %1868 = vdwg.mxu0
          %v1869 = vmax.f32 %v1048, 0.0
          %v1870 = vmax.f32 %v1050, 0.0
          %v1871 = vmax.f32 %v1053, 0.0
          %v1872 = vmax.f32 %v1055, 0.0
          %v1873 = vmax.f32 %v1058, 0.0
          %v1874 = vmax.f32 %v1060, 0.0
          %v1875 = vmax.f32 %v1063, 0.0
          %v1876 = vmax.f32 %v1065, 0.0
          %v1877 = vmax.f32 %v1068, 0.0
          %v1878 = vmax.f32 %v1070, 0.0
          %v1879 = vmax.f32 %v1073, 0.0
          %v1880 = vmax.f32 %v1075, 0.0
          %v1881 = vmax.f32 %v1078, 0.0
          %v1882 = vmax.f32 %v1080, 0.0
          %v1883 = vmax.f32 %v1083, 0.0
          %v1884 = vmax.f32 %v1085, 0.0
          %v1885 = vadd.f32 %v1048, %v1439
          %v1886 = vadd.f32 %v1050, %v1441
          %v1887 = vadd.f32 %v1053, %v1444
          %v1888 = vadd.f32 %v1055, %v1446
          %v1889 = vadd.f32 %v1058, %v1449
          %v1890 = vadd.f32 %v1060, %v1451
          %v1891 = vadd.f32 %v1063, %v1454
          %v1892 = vadd.f32 %v1065, %v1456
          %v1893 = vadd.f32 %v1068, %v1459
          %v1894 = vadd.f32 %v1070, %v1461
          %v1895 = vadd.f32 %v1073, %v1464
          %v1896 = vadd.f32 %v1075, %v1466
          %v1897 = vadd.f32 %v1078, %v1469
          %v1898 = vadd.f32 %v1080, %v1471
          %v1899 = vadd.f32 %v1083, %v1474
          %v1900 = vadd.f32 %v1085, %v1476
          %v1901 = vmax.f32 %v1885, 0.0
          %v1902 = vmax.f32 %v1886, 0.0
          %v1903 = vmax.f32 %v1887, 0.0
          %v1904 = vmax.f32 %v1888, 0.0
          %v1905 = vmax.f32 %v1889, 0.0
          %v1906 = vmax.f32 %v1890, 0.0
          %v1907 = vmax.f32 %v1891, 0.0
          %v1908 = vmax.f32 %v1892, 0.0
          %v1909 = vmax.f32 %v1893, 0.0
          %v1910 = vmax.f32 %v1894, 0.0
          %v1911 = vmax.f32 %v1895, 0.0
          %v1912 = vmax.f32 %v1896, 0.0
          %v1913 = vmax.f32 %v1897, 0.0
          %v1914 = vmax.f32 %v1898, 0.0
          %v1915 = vmax.f32 %v1899, 0.0
          %v1916 = vmax.f32 %v1900, 0.0
          %v1917 = vadd.f32 %v1885, %v1830
          %v1918 = vadd.f32 %v1886, %v1832
          %v1919 = vadd.f32 %v1887, %v1835
          %v1920 = vadd.f32 %v1888, %v1837
          %v1921 = vadd.f32 %v1889, %v1840
          %v1922 = vadd.f32 %v1890, %v1842
          %v1923 = vadd.f32 %v1891, %v1845
          %v1924 = vadd.f32 %v1892, %v1847
          %v1925 = vadd.f32 %v1893, %v1850
          %v1926 = vadd.f32 %v1894, %v1852
          %v1927 = vadd.f32 %v1895, %v1855
          %v1928 = vadd.f32 %v1896, %v1857
          %v1929 = vadd.f32 %v1897, %v1860
          %v1930 = vadd.f32 %v1898, %v1862
          %v1931 = vadd.f32 %v1899, %v1865
          %v1932 = vadd.f32 %v1900, %v1867
          %v1933 = vmax.f32 %v1917, 0.0
          %v1934 = vmax.f32 %v1918, 0.0
          %v1935 = vmax.f32 %v1919, 0.0
          %v1936 = vmax.f32 %v1920, 0.0
          %v1937 = vmax.f32 %v1921, 0.0
          %v1938 = vmax.f32 %v1922, 0.0
          %v1939 = vmax.f32 %v1923, 0.0
          %v1940 = vmax.f32 %v1924, 0.0
          %v1941 = vmax.f32 %v1925, 0.0
          %v1942 = vmax.f32 %v1926, 0.0
          %v1943 = vmax.f32 %v1927, 0.0
          %v1944 = vmax.f32 %v1928, 0.0
          %v1945 = vmax.f32 %v1929, 0.0
          %v1946 = vmax.f32 %v1930, 0.0
          %v1947 = vmax.f32 %v1931, 0.0
          %v1948 = vmax.f32 %v1932, 0.0
          %v1949 = vpack.c.bf16 %v1870, %v1869
          %v1950 = vpack.c.bf16 %v1872, %v1871
          %v1951 = vpack.c.bf16 %v1874, %v1873
          %v1952 = vpack.c.bf16 %v1876, %v1875
          %v1953 = vpack.c.bf16 %v1878, %v1877
          %v1954 = vpack.c.bf16 %v1880, %v1879
          %v1955 = vpack.c.bf16 %v1882, %v1881
          %v1956 = vpack.c.bf16 %v1884, %v1883
          %v1957 = vpack.c.bf16 %v1902, %v1901
          %v1958 = vpack.c.bf16 %v1904, %v1903
          %v1959 = vpack.c.bf16 %v1906, %v1905
          %v1960 = vpack.c.bf16 %v1908, %v1907
          %v1961 = vpack.c.bf16 %v1910, %v1909
          %v1962 = vpack.c.bf16 %v1912, %v1911
          %v1963 = vpack.c.bf16 %v1914, %v1913
          %v1964 = vpack.c.bf16 %v1916, %v1915
          %v1965 = vpack.c.bf16 %v1934, %v1933
          %v1966 = vpack.c.bf16 %v1936, %v1935
          %v1967 = vpack.c.bf16 %v1938, %v1937
          %v1968 = vpack.c.bf16 %v1940, %v1939
          %v1969 = vpack.c.bf16 %v1942, %v1941
          %v1970 = vpack.c.bf16 %v1944, %v1943
          %v1971 = vpack.c.bf16 %v1946, %v1945
          %v1972 = vpack.c.bf16 %v1948, %v1947
          %v1974 = vperm.slane %v429, 0
          %v1975 = vperm.slane %v429, 1
          %v1976 = vperm.slane %v429, 2
          %v2012 = vunpack.c.l.b16 %v365
          %v2013 = vunpack.c.h.b16 %v365
          %v2014 = vunpack.c.l.b16 %v366
          %v2015 = vunpack.c.l.b16 %v367
          %v2016 = vunpack.c.h.b16 %v367
          %v2017 = vunpack.c.l.b16 %v368
          %v2018 = vunpack.c.l.b16 %v369
          %v2019 = vunpack.c.h.b16 %v369
          %v2020 = vunpack.c.l.b16 %v370
          %v2021 = vunpack.c.l.b16 %v371
          %v2022 = vunpack.c.h.b16 %v371
          %v2023 = vunpack.c.l.b16 %v372
          %v2024 = vunpack.c.l.b16 %v373
          %v2025 = vunpack.c.h.b16 %v373
          %v2026 = vunpack.c.l.b16 %v374
          %v2027 = vunpack.c.l.b16 %v375
          %v2028 = vunpack.c.h.b16 %v375
          %v2029 = vunpack.c.l.b16 %v376
          %v2030 = vunpack.c.l.b16 %v377
          %v2031 = vunpack.c.h.b16 %v377
          %v2032 = vunpack.c.l.b16 %v378
          %v2033 = vunpack.c.l.b16 %v379
          %v2034 = vunpack.c.h.b16 %v379
          %v2035 = vunpack.c.l.b16 %v380
          %v2036 = vunpack.c.l.b16 %v381
          %v2037 = vunpack.c.h.b16 %v381
          %v2038 = vunpack.c.l.b16 %v382
          %v2039 = vunpack.c.l.b16 %v383
          %v2040 = vunpack.c.h.b16 %v383
          %v2041 = vunpack.c.l.b16 %v384
          %v2042 = vunpack.c.l.b16 %v385
          %v2043 = vunpack.c.h.b16 %v385
          %v2044 = vunpack.c.l.b16 %v386
          %v2045 = vunpack.c.l.b16 %v387
          %v2046 = vunpack.c.h.b16 %v387
          %v2047 = vunpack.c.l.b16 %v388
          %v2048 = vunpack.c.l.b16 %v389
          %v2049 = vunpack.c.h.b16 %v389
          %v2050 = vunpack.c.l.b16 %v390
          %v2051 = vunpack.c.l.b16 %v391
          %v2052 = vunpack.c.h.b16 %v391
          %v2053 = vunpack.c.l.b16 %v392
          %v2054 = vunpack.c.l.b16 %v393
          %v2055 = vunpack.c.h.b16 %v393
          %v2056 = vunpack.c.l.b16 %v394
          %v2057 = vunpack.c.l.b16 %v395
          %v2058 = vunpack.c.h.b16 %v395
          %v2059 = vunpack.c.l.b16 %v396
          %v2060 = vpack.c.b16 %v2015, %v2012
          %v2061 = vpack.c.b16 %v2016, %v2013
          %v2062 = vpack.c.b16 %v2017, %v2014
          %v2063 = vpack.c.b16 %v2021, %v2018
          %v2064 = vpack.c.b16 %v2022, %v2019
          %v2065 = vpack.c.b16 %v2023, %v2020
          %v2066 = vpack.c.b16 %v2027, %v2024
          %v2067 = vpack.c.b16 %v2028, %v2025
          %v2068 = vpack.c.b16 %v2029, %v2026
          %v2069 = vpack.c.b16 %v2033, %v2030
          %v2070 = vpack.c.b16 %v2034, %v2031
          %v2071 = vpack.c.b16 %v2035, %v2032
          %v2072 = vpack.c.b16 %v2039, %v2036
          %v2073 = vpack.c.b16 %v2040, %v2037
          %v2074 = vpack.c.b16 %v2041, %v2038
          %v2075 = vpack.c.b16 %v2045, %v2042
          %v2076 = vpack.c.b16 %v2046, %v2043
          %v2077 = vpack.c.b16 %v2047, %v2044
          %v2078 = vpack.c.b16 %v2051, %v2048
          %v2079 = vpack.c.b16 %v2052, %v2049
          %v2080 = vpack.c.b16 %v2053, %v2050
          %v2081 = vpack.c.b16 %v2057, %v2054
          %v2082 = vpack.c.b16 %v2058, %v2055
          %v2083 = vpack.c.b16 %v2059, %v2056
          %2108 = vmatpush.bf16.msra.mxu0 %v2081
          %2109 = vmatpush.bf16.msra.mxu0 %v2078
          %2110 = vmatpush.bf16.msra.mxu0 %v2075
          %2111 = vmatpush.bf16.msra.mxu0 %v2072
          %2112 = vmatpush.bf16.msra.mxu0 %v2069
          %2113 = vmatpush.bf16.msra.mxu0 %v2066
          %2114 = vmatpush.bf16.msra.mxu0 %v2063
          %2115 = vmatpush.bf16.msra.mxu0 %v2060
          %2116 = vmatmul.bf16.gmra.mxu0 %v1949
          %v2117 = vpop.f32.mrf.mxu0
          %v2118 = vadd.f32 %v1974, %v2117
          %v2119 = vpop.f32.mrf.mxu0
          %v2120 = vadd.f32 %v1974, %v2119
          %2121 = vmatmul.bf16.gmra.mxu0 %v1950
          %v2122 = vpop.f32.mrf.mxu0
          %v2123 = vadd.f32 %v1974, %v2122
          %v2124 = vpop.f32.mrf.mxu0
          %v2125 = vadd.f32 %v1974, %v2124
          %2126 = vmatmul.bf16.gmra.mxu0 %v1951
          %v2127 = vpop.f32.mrf.mxu0
          %v2128 = vadd.f32 %v1974, %v2127
          %v2129 = vpop.f32.mrf.mxu0
          %v2130 = vadd.f32 %v1974, %v2129
          %2131 = vmatmul.bf16.gmra.mxu0 %v1952
          %v2132 = vpop.f32.mrf.mxu0
          %v2133 = vadd.f32 %v1974, %v2132
          %v2134 = vpop.f32.mrf.mxu0
          %v2135 = vadd.f32 %v1974, %v2134
          %2136 = vmatmul.bf16.gmra.mxu0 %v1953
          %v2137 = vpop.f32.mrf.mxu0
          %v2138 = vadd.f32 %v1974, %v2137
          %v2139 = vpop.f32.mrf.mxu0
          %v2140 = vadd.f32 %v1974, %v2139
          %2141 = vmatmul.bf16.gmra.mxu0 %v1954
          %v2142 = vpop.f32.mrf.mxu0
          %v2143 = vadd.f32 %v1974, %v2142
          %v2144 = vpop.f32.mrf.mxu0
          %v2145 = vadd.f32 %v1974, %v2144
          %2146 = vmatmul.bf16.gmra.mxu0 %v1955
          %v2147 = vpop.f32.mrf.mxu0
          %v2148 = vadd.f32 %v1974, %v2147
          %v2149 = vpop.f32.mrf.mxu0
          %v2150 = vadd.f32 %v1974, %v2149
          %2151 = vmatmul.bf16.gmra.mxu0 %v1956
          %v2152 = vpop.f32.mrf.mxu0
          %v2153 = vadd.f32 %v1974, %v2152
          %v2154 = vpop.f32.mrf.mxu0
          %v2155 = vadd.f32 %v1974, %v2154
          %2156 = vmatmul.bf16.gmra.mxu0 %v1957
          %v2157 = vpop.f32.mrf.mxu0
          %v2158 = vadd.f32 %v1974, %v2157
          %v2159 = vpop.f32.mrf.mxu0
          %v2160 = vadd.f32 %v1974, %v2159
          %2161 = vmatmul.bf16.gmra.mxu0 %v1958
          %v2162 = vpop.f32.mrf.mxu0
          %v2163 = vadd.f32 %v1974, %v2162
          %v2164 = vpop.f32.mrf.mxu0
          %v2165 = vadd.f32 %v1974, %v2164
          %2166 = vmatmul.bf16.gmra.mxu0 %v1959
          %v2167 = vpop.f32.mrf.mxu0
          %v2168 = vadd.f32 %v1974, %v2167
          %v2169 = vpop.f32.mrf.mxu0
          %v2170 = vadd.f32 %v1974, %v2169
          %2171 = vmatmul.bf16.gmra.mxu0 %v1960
          %v2172 = vpop.f32.mrf.mxu0
          %v2173 = vadd.f32 %v1974, %v2172
          %v2174 = vpop.f32.mrf.mxu0
          %v2175 = vadd.f32 %v1974, %v2174
          %2176 = vmatmul.bf16.gmra.mxu0 %v1961
          %v2177 = vpop.f32.mrf.mxu0
          %v2178 = vadd.f32 %v1974, %v2177
          %v2179 = vpop.f32.mrf.mxu0
          %v2180 = vadd.f32 %v1974, %v2179
          %2181 = vmatmul.bf16.gmra.mxu0 %v1962
          %v2182 = vpop.f32.mrf.mxu0
          %v2183 = vadd.f32 %v1974, %v2182
          %v2184 = vpop.f32.mrf.mxu0
          %v2185 = vadd.f32 %v1974, %v2184
          %2186 = vmatmul.bf16.gmra.mxu0 %v1963
          %v2187 = vpop.f32.mrf.mxu0
          %v2188 = vadd.f32 %v1974, %v2187
          %v2189 = vpop.f32.mrf.mxu0
          %v2190 = vadd.f32 %v1974, %v2189
          %2191 = vmatmul.bf16.gmra.mxu0 %v1964
          %v2192 = vpop.f32.mrf.mxu0
          %v2193 = vadd.f32 %v1974, %v2192
          %v2194 = vpop.f32.mrf.mxu0
          %v2195 = vadd.f32 %v1974, %v2194
          %2196 = vmatmul.bf16.gmra.mxu0 %v1965
          %v2197 = vpop.f32.mrf.mxu0
          %v2198 = vadd.f32 %v1974, %v2197
          %v2199 = vpop.f32.mrf.mxu0
          %v2200 = vadd.f32 %v1974, %v2199
          %2201 = vmatmul.bf16.gmra.mxu0 %v1966
          %v2202 = vpop.f32.mrf.mxu0
          %v2203 = vadd.f32 %v1974, %v2202
          %v2204 = vpop.f32.mrf.mxu0
          %v2205 = vadd.f32 %v1974, %v2204
          %2206 = vmatmul.bf16.gmra.mxu0 %v1967
          %v2207 = vpop.f32.mrf.mxu0
          %v2208 = vadd.f32 %v1974, %v2207
          %v2209 = vpop.f32.mrf.mxu0
          %v2210 = vadd.f32 %v1974, %v2209
          %2211 = vmatmul.bf16.gmra.mxu0 %v1968
          %v2212 = vpop.f32.mrf.mxu0
          %v2213 = vadd.f32 %v1974, %v2212
          %v2214 = vpop.f32.mrf.mxu0
          %v2215 = vadd.f32 %v1974, %v2214
          %2216 = vmatmul.bf16.gmra.mxu0 %v1969
          %v2217 = vpop.f32.mrf.mxu0
          %v2218 = vadd.f32 %v1974, %v2217
          %v2219 = vpop.f32.mrf.mxu0
          %v2220 = vadd.f32 %v1974, %v2219
          %2221 = vmatmul.bf16.gmra.mxu0 %v1970
          %v2222 = vpop.f32.mrf.mxu0
          %v2223 = vadd.f32 %v1974, %v2222
          %v2224 = vpop.f32.mrf.mxu0
          %v2225 = vadd.f32 %v1974, %v2224
          %2226 = vmatmul.bf16.gmra.mxu0 %v1971
          %v2227 = vpop.f32.mrf.mxu0
          %v2228 = vadd.f32 %v1974, %v2227
          %v2229 = vpop.f32.mrf.mxu0
          %v2230 = vadd.f32 %v1974, %v2229
          %2231 = vmatmul.bf16.gmra.mxu0 %v1972
          %v2232 = vpop.f32.mrf.mxu0
          %v2233 = vadd.f32 %v1974, %v2232
          %v2234 = vpop.f32.mrf.mxu0
          %v2235 = vadd.f32 %v1974, %v2234
          %2236 = vdwg.mxu0
          %2237 = vmatpush.bf16.msra.mxu0 %v2082
          %2238 = vmatpush.bf16.msra.mxu0 %v2079
          %2239 = vmatpush.bf16.msra.mxu0 %v2076
          %2240 = vmatpush.bf16.msra.mxu0 %v2073
          %2241 = vmatpush.bf16.msra.mxu0 %v2070
          %2242 = vmatpush.bf16.msra.mxu0 %v2067
          %2243 = vmatpush.bf16.msra.mxu0 %v2064
          %2244 = vmatpush.bf16.msra.mxu0 %v2061
          %2245 = vmatmul.bf16.gmra.mxu0 %v1949
          %v2246 = vpop.f32.mrf.mxu0
          %v2247 = vadd.f32 %v1975, %v2246
          %v2248 = vpop.f32.mrf.mxu0
          %v2249 = vadd.f32 %v1975, %v2248
          %2250 = vmatmul.bf16.gmra.mxu0 %v1950
          %v2251 = vpop.f32.mrf.mxu0
          %v2252 = vadd.f32 %v1975, %v2251
          %v2253 = vpop.f32.mrf.mxu0
          %v2254 = vadd.f32 %v1975, %v2253
          %2255 = vmatmul.bf16.gmra.mxu0 %v1951
          %v2256 = vpop.f32.mrf.mxu0
          %v2257 = vadd.f32 %v1975, %v2256
          %v2258 = vpop.f32.mrf.mxu0
          %v2259 = vadd.f32 %v1975, %v2258
          %2260 = vmatmul.bf16.gmra.mxu0 %v1952
          %v2261 = vpop.f32.mrf.mxu0
          %v2262 = vadd.f32 %v1975, %v2261
          %v2263 = vpop.f32.mrf.mxu0
          %v2264 = vadd.f32 %v1975, %v2263
          %2265 = vmatmul.bf16.gmra.mxu0 %v1953
          %v2266 = vpop.f32.mrf.mxu0
          %v2267 = vadd.f32 %v1975, %v2266
          %v2268 = vpop.f32.mrf.mxu0
          %v2269 = vadd.f32 %v1975, %v2268
          %2270 = vmatmul.bf16.gmra.mxu0 %v1954
          %v2271 = vpop.f32.mrf.mxu0
          %v2272 = vadd.f32 %v1975, %v2271
          %v2273 = vpop.f32.mrf.mxu0
          %v2274 = vadd.f32 %v1975, %v2273
          %2275 = vmatmul.bf16.gmra.mxu0 %v1955
          %v2276 = vpop.f32.mrf.mxu0
          %v2277 = vadd.f32 %v1975, %v2276
          %v2278 = vpop.f32.mrf.mxu0
          %v2279 = vadd.f32 %v1975, %v2278
          %2280 = vmatmul.bf16.gmra.mxu0 %v1956
          %v2281 = vpop.f32.mrf.mxu0
          %v2282 = vadd.f32 %v1975, %v2281
          %v2283 = vpop.f32.mrf.mxu0
          %v2284 = vadd.f32 %v1975, %v2283
          %2285 = vmatmul.bf16.gmra.mxu0 %v1957
          %v2286 = vpop.f32.mrf.mxu0
          %v2287 = vadd.f32 %v1975, %v2286
          %v2288 = vpop.f32.mrf.mxu0
          %v2289 = vadd.f32 %v1975, %v2288
          %2290 = vmatmul.bf16.gmra.mxu0 %v1958
          %v2291 = vpop.f32.mrf.mxu0
          %v2292 = vadd.f32 %v1975, %v2291
          %v2293 = vpop.f32.mrf.mxu0
          %v2294 = vadd.f32 %v1975, %v2293
          %2295 = vmatmul.bf16.gmra.mxu0 %v1959
          %v2296 = vpop.f32.mrf.mxu0
          %v2297 = vadd.f32 %v1975, %v2296
          %v2298 = vpop.f32.mrf.mxu0
          %v2299 = vadd.f32 %v1975, %v2298
          %2300 = vmatmul.bf16.gmra.mxu0 %v1960
          %v2301 = vpop.f32.mrf.mxu0
          %v2302 = vadd.f32 %v1975, %v2301
          %v2303 = vpop.f32.mrf.mxu0
          %v2304 = vadd.f32 %v1975, %v2303
          %2305 = vmatmul.bf16.gmra.mxu0 %v1961
          %v2306 = vpop.f32.mrf.mxu0
          %v2307 = vadd.f32 %v1975, %v2306
          %v2308 = vpop.f32.mrf.mxu0
          %v2309 = vadd.f32 %v1975, %v2308
          %2310 = vmatmul.bf16.gmra.mxu0 %v1962
          %v2311 = vpop.f32.mrf.mxu0
          %v2312 = vadd.f32 %v1975, %v2311
          %v2313 = vpop.f32.mrf.mxu0
          %v2314 = vadd.f32 %v1975, %v2313
          %2315 = vmatmul.bf16.gmra.mxu0 %v1963
          %v2316 = vpop.f32.mrf.mxu0
          %v2317 = vadd.f32 %v1975, %v2316
          %v2318 = vpop.f32.mrf.mxu0
          %v2319 = vadd.f32 %v1975, %v2318
          %2320 = vmatmul.bf16.gmra.mxu0 %v1964
          %v2321 = vpop.f32.mrf.mxu0
          %v2322 = vadd.f32 %v1975, %v2321
          %v2323 = vpop.f32.mrf.mxu0
          %v2324 = vadd.f32 %v1975, %v2323
          %2325 = vmatmul.bf16.gmra.mxu0 %v1965
          %v2326 = vpop.f32.mrf.mxu0
          %v2327 = vadd.f32 %v1975, %v2326
          %v2328 = vpop.f32.mrf.mxu0
          %v2329 = vadd.f32 %v1975, %v2328
          %2330 = vmatmul.bf16.gmra.mxu0 %v1966
          %v2331 = vpop.f32.mrf.mxu0
          %v2332 = vadd.f32 %v1975, %v2331
          %v2333 = vpop.f32.mrf.mxu0
          %v2334 = vadd.f32 %v1975, %v2333
          %2335 = vmatmul.bf16.gmra.mxu0 %v1967
          %v2336 = vpop.f32.mrf.mxu0
          %v2337 = vadd.f32 %v1975, %v2336
          %v2338 = vpop.f32.mrf.mxu0
          %v2339 = vadd.f32 %v1975, %v2338
          %2340 = vmatmul.bf16.gmra.mxu0 %v1968
          %v2341 = vpop.f32.mrf.mxu0
          %v2342 = vadd.f32 %v1975, %v2341
          %v2343 = vpop.f32.mrf.mxu0
          %v2344 = vadd.f32 %v1975, %v2343
          %2345 = vmatmul.bf16.gmra.mxu0 %v1969
          %v2346 = vpop.f32.mrf.mxu0
          %v2347 = vadd.f32 %v1975, %v2346
          %v2348 = vpop.f32.mrf.mxu0
          %v2349 = vadd.f32 %v1975, %v2348
          %2350 = vmatmul.bf16.gmra.mxu0 %v1970
          %v2351 = vpop.f32.mrf.mxu0
          %v2352 = vadd.f32 %v1975, %v2351
          %v2353 = vpop.f32.mrf.mxu0
          %v2354 = vadd.f32 %v1975, %v2353
          %2355 = vmatmul.bf16.gmra.mxu0 %v1971
          %v2356 = vpop.f32.mrf.mxu0
          %v2357 = vadd.f32 %v1975, %v2356
          %v2358 = vpop.f32.mrf.mxu0
          %v2359 = vadd.f32 %v1975, %v2358
          %2360 = vmatmul.bf16.gmra.mxu0 %v1972
          %v2361 = vpop.f32.mrf.mxu0
          %v2362 = vadd.f32 %v1975, %v2361
          %v2363 = vpop.f32.mrf.mxu0
          %v2364 = vadd.f32 %v1975, %v2363
          %2365 = vdwg.mxu0
          %2366 = vmatpush.bf16.msra.mxu0 %v2083
          %2367 = vmatpush.bf16.msra.mxu0 %v2080
          %2368 = vmatpush.bf16.msra.mxu0 %v2077
          %2369 = vmatpush.bf16.msra.mxu0 %v2074
          %2370 = vmatpush.bf16.msra.mxu0 %v2071
          %2371 = vmatpush.bf16.msra.mxu0 %v2068
          %2372 = vmatpush.bf16.msra.mxu0 %v2065
          %2373 = vmatpush.bf16.msra.mxu0 %v2062
          %2374 = vmatmul.bf16.gmra.mxu0 %v1949
          %v2375 = vpop.f32.mrf.mxu0
          %v2376 = vadd.f32 %v1976, %v2375
          %v2377 = vpop.f32.mrf.mxu0
          %v2378 = vadd.f32 %v1976, %v2377
          %2379 = vmatmul.bf16.gmra.mxu0 %v1950
          %v2380 = vpop.f32.mrf.mxu0
          %v2381 = vadd.f32 %v1976, %v2380
          %v2382 = vpop.f32.mrf.mxu0
          %v2383 = vadd.f32 %v1976, %v2382
          %2384 = vmatmul.bf16.gmra.mxu0 %v1951
          %v2385 = vpop.f32.mrf.mxu0
          %v2386 = vadd.f32 %v1976, %v2385
          %v2387 = vpop.f32.mrf.mxu0
          %v2388 = vadd.f32 %v1976, %v2387
          %2389 = vmatmul.bf16.gmra.mxu0 %v1952
          %v2390 = vpop.f32.mrf.mxu0
          %v2391 = vadd.f32 %v1976, %v2390
          %v2392 = vpop.f32.mrf.mxu0
          %v2393 = vadd.f32 %v1976, %v2392
          %2394 = vmatmul.bf16.gmra.mxu0 %v1953
          %v2395 = vpop.f32.mrf.mxu0
          %v2396 = vadd.f32 %v1976, %v2395
          %v2397 = vpop.f32.mrf.mxu0
          %v2398 = vadd.f32 %v1976, %v2397
          %2399 = vmatmul.bf16.gmra.mxu0 %v1954
          %v2400 = vpop.f32.mrf.mxu0
          %v2401 = vadd.f32 %v1976, %v2400
          %v2402 = vpop.f32.mrf.mxu0
          %v2403 = vadd.f32 %v1976, %v2402
          %2404 = vmatmul.bf16.gmra.mxu0 %v1955
          %v2405 = vpop.f32.mrf.mxu0
          %v2406 = vadd.f32 %v1976, %v2405
          %v2407 = vpop.f32.mrf.mxu0
          %v2408 = vadd.f32 %v1976, %v2407
          %2409 = vmatmul.bf16.gmra.mxu0 %v1956
          %v2410 = vpop.f32.mrf.mxu0
          %v2411 = vadd.f32 %v1976, %v2410
          %v2412 = vpop.f32.mrf.mxu0
          %v2413 = vadd.f32 %v1976, %v2412
          %2414 = vmatmul.bf16.gmra.mxu0 %v1957
          %v2415 = vpop.f32.mrf.mxu0
          %v2416 = vadd.f32 %v1976, %v2415
          %v2417 = vpop.f32.mrf.mxu0
          %v2418 = vadd.f32 %v1976, %v2417
          %2419 = vmatmul.bf16.gmra.mxu0 %v1958
          %v2420 = vpop.f32.mrf.mxu0
          %v2421 = vadd.f32 %v1976, %v2420
          %v2422 = vpop.f32.mrf.mxu0
          %v2423 = vadd.f32 %v1976, %v2422
          %2424 = vmatmul.bf16.gmra.mxu0 %v1959
          %v2425 = vpop.f32.mrf.mxu0
          %v2426 = vadd.f32 %v1976, %v2425
          %v2427 = vpop.f32.mrf.mxu0
          %v2428 = vadd.f32 %v1976, %v2427
          %2429 = vmatmul.bf16.gmra.mxu0 %v1960
          %v2430 = vpop.f32.mrf.mxu0
          %v2431 = vadd.f32 %v1976, %v2430
          %v2432 = vpop.f32.mrf.mxu0
          %v2433 = vadd.f32 %v1976, %v2432
          %2434 = vmatmul.bf16.gmra.mxu0 %v1961
          %v2435 = vpop.f32.mrf.mxu0
          %v2436 = vadd.f32 %v1976, %v2435
          %v2437 = vpop.f32.mrf.mxu0
          %v2438 = vadd.f32 %v1976, %v2437
          %2439 = vmatmul.bf16.gmra.mxu0 %v1962
          %v2440 = vpop.f32.mrf.mxu0
          %v2441 = vadd.f32 %v1976, %v2440
          %v2442 = vpop.f32.mrf.mxu0
          %v2443 = vadd.f32 %v1976, %v2442
          %2444 = vmatmul.bf16.gmra.mxu0 %v1963
          %v2445 = vpop.f32.mrf.mxu0
          %v2446 = vadd.f32 %v1976, %v2445
          %v2447 = vpop.f32.mrf.mxu0
          %v2448 = vadd.f32 %v1976, %v2447
          %2449 = vmatmul.bf16.gmra.mxu0 %v1964
          %v2450 = vpop.f32.mrf.mxu0
          %v2451 = vadd.f32 %v1976, %v2450
          %v2452 = vpop.f32.mrf.mxu0
          %v2453 = vadd.f32 %v1976, %v2452
          %2454 = vmatmul.bf16.gmra.mxu0 %v1965
          %v2455 = vpop.f32.mrf.mxu0
          %v2456 = vadd.f32 %v1976, %v2455
          %v2457 = vpop.f32.mrf.mxu0
          %v2458 = vadd.f32 %v1976, %v2457
          %2459 = vmatmul.bf16.gmra.mxu0 %v1966
          %v2460 = vpop.f32.mrf.mxu0
          %v2461 = vadd.f32 %v1976, %v2460
          %v2462 = vpop.f32.mrf.mxu0
          %v2463 = vadd.f32 %v1976, %v2462
          %2464 = vmatmul.bf16.gmra.mxu0 %v1967
          %v2465 = vpop.f32.mrf.mxu0
          %v2466 = vadd.f32 %v1976, %v2465
          %v2467 = vpop.f32.mrf.mxu0
          %v2468 = vadd.f32 %v1976, %v2467
          %2469 = vmatmul.bf16.gmra.mxu0 %v1968
          %v2470 = vpop.f32.mrf.mxu0
          %v2471 = vadd.f32 %v1976, %v2470
          %v2472 = vpop.f32.mrf.mxu0
          %v2473 = vadd.f32 %v1976, %v2472
          %2474 = vmatmul.bf16.gmra.mxu0 %v1969
          %v2475 = vpop.f32.mrf.mxu0
          %v2476 = vadd.f32 %v1976, %v2475
          %v2477 = vpop.f32.mrf.mxu0
          %v2478 = vadd.f32 %v1976, %v2477
          %2479 = vmatmul.bf16.gmra.mxu0 %v1970
          %v2480 = vpop.f32.mrf.mxu0
          %v2481 = vadd.f32 %v1976, %v2480
          %v2482 = vpop.f32.mrf.mxu0
          %v2483 = vadd.f32 %v1976, %v2482
          %2484 = vmatmul.bf16.gmra.mxu0 %v1971
          %v2485 = vpop.f32.mrf.mxu0
          %v2486 = vadd.f32 %v1976, %v2485
          %v2487 = vpop.f32.mrf.mxu0
          %v2488 = vadd.f32 %v1976, %v2487
          %2489 = vmatmul.bf16.gmra.mxu0 %v1972
          %v2490 = vpop.f32.mrf.mxu0
          %v2491 = vadd.f32 %v1976, %v2490
          %v2492 = vpop.f32.mrf.mxu0
          %v2493 = vadd.f32 %v1976, %v2492
          %2494 = vdwg.mxu0
          %v2496 = vperm.slane %v430, 0
          %v2497 = vperm.slane %v430, 1
          %v2498 = vperm.slane %v430, 2
          %v2534 = vunpack.c.l.b16 %v397
          %v2535 = vunpack.c.h.b16 %v397
          %v2536 = vunpack.c.l.b16 %v398
          %v2537 = vunpack.c.l.b16 %v399
          %v2538 = vunpack.c.h.b16 %v399
          %v2539 = vunpack.c.l.b16 %v400
          %v2540 = vunpack.c.l.b16 %v401
          %v2541 = vunpack.c.h.b16 %v401
          %v2542 = vunpack.c.l.b16 %v402
          %v2543 = vunpack.c.l.b16 %v403
          %v2544 = vunpack.c.h.b16 %v403
          %v2545 = vunpack.c.l.b16 %v404
          %v2546 = vunpack.c.l.b16 %v405
          %v2547 = vunpack.c.h.b16 %v405
          %v2548 = vunpack.c.l.b16 %v406
          %v2549 = vunpack.c.l.b16 %v407
          %v2550 = vunpack.c.h.b16 %v407
          %v2551 = vunpack.c.l.b16 %v408
          %v2552 = vunpack.c.l.b16 %v409
          %v2553 = vunpack.c.h.b16 %v409
          %v2554 = vunpack.c.l.b16 %v410
          %v2555 = vunpack.c.l.b16 %v411
          %v2556 = vunpack.c.h.b16 %v411
          %v2557 = vunpack.c.l.b16 %v412
          %v2558 = vunpack.c.l.b16 %v413
          %v2559 = vunpack.c.h.b16 %v413
          %v2560 = vunpack.c.l.b16 %v414
          %v2561 = vunpack.c.l.b16 %v415
          %v2562 = vunpack.c.h.b16 %v415
          %v2563 = vunpack.c.l.b16 %v416
          %v2564 = vunpack.c.l.b16 %v417
          %v2565 = vunpack.c.h.b16 %v417
          %v2566 = vunpack.c.l.b16 %v418
          %v2567 = vunpack.c.l.b16 %v419
          %v2568 = vunpack.c.h.b16 %v419
          %v2569 = vunpack.c.l.b16 %v420
          %v2570 = vunpack.c.l.b16 %v421
          %v2571 = vunpack.c.h.b16 %v421
          %v2572 = vunpack.c.l.b16 %v422
          %v2573 = vunpack.c.l.b16 %v423
          %v2574 = vunpack.c.h.b16 %v423
          %v2575 = vunpack.c.l.b16 %v424
          %v2576 = vunpack.c.l.b16 %v425
          %v2577 = vunpack.c.h.b16 %v425
          %v2578 = vunpack.c.l.b16 %v426
          %v2579 = vunpack.c.l.b16 %v427
          %v2580 = vunpack.c.h.b16 %v427
          %v2581 = vunpack.c.l.b16 %v428
          %v2582 = vpack.c.b16 %v2537, %v2534
          %v2583 = vpack.c.b16 %v2538, %v2535
          %v2584 = vpack.c.b16 %v2539, %v2536
          %v2585 = vpack.c.b16 %v2543, %v2540
          %v2586 = vpack.c.b16 %v2544, %v2541
          %v2587 = vpack.c.b16 %v2545, %v2542
          %v2588 = vpack.c.b16 %v2549, %v2546
          %v2589 = vpack.c.b16 %v2550, %v2547
          %v2590 = vpack.c.b16 %v2551, %v2548
          %v2591 = vpack.c.b16 %v2555, %v2552
          %v2592 = vpack.c.b16 %v2556, %v2553
          %v2593 = vpack.c.b16 %v2557, %v2554
          %v2594 = vpack.c.b16 %v2561, %v2558
          %v2595 = vpack.c.b16 %v2562, %v2559
          %v2596 = vpack.c.b16 %v2563, %v2560
          %v2597 = vpack.c.b16 %v2567, %v2564
          %v2598 = vpack.c.b16 %v2568, %v2565
          %v2599 = vpack.c.b16 %v2569, %v2566
          %v2600 = vpack.c.b16 %v2573, %v2570
          %v2601 = vpack.c.b16 %v2574, %v2571
          %v2602 = vpack.c.b16 %v2575, %v2572
          %v2603 = vpack.c.b16 %v2579, %v2576
          %v2604 = vpack.c.b16 %v2580, %v2577
          %v2605 = vpack.c.b16 %v2581, %v2578
          %2630 = vmatpush.bf16.msra.mxu0 %v2603
          %2631 = vmatpush.bf16.msra.mxu0 %v2600
          %2632 = vmatpush.bf16.msra.mxu0 %v2597
          %2633 = vmatpush.bf16.msra.mxu0 %v2594
          %2634 = vmatpush.bf16.msra.mxu0 %v2591
          %2635 = vmatpush.bf16.msra.mxu0 %v2588
          %2636 = vmatpush.bf16.msra.mxu0 %v2585
          %2637 = vmatpush.bf16.msra.mxu0 %v2582
          %2638 = vmatmul.bf16.gmra.mxu0 0
          %v2639 = vpop.f32.mrf.mxu0
          %v2640 = vadd.f32 %v2496, %v2639
          %v2641 = vpop.f32.mrf.mxu0
          %v2642 = vadd.f32 %v2496, %v2641
          %2643 = vmatmul.bf16.gmra.mxu0 0
          %v2644 = vpop.f32.mrf.mxu0
          %v2645 = vadd.f32 %v2496, %v2644
          %v2646 = vpop.f32.mrf.mxu0
          %v2647 = vadd.f32 %v2496, %v2646
          %2648 = vmatmul.bf16.gmra.mxu0 0
          %v2649 = vpop.f32.mrf.mxu0
          %v2650 = vadd.f32 %v2496, %v2649
          %v2651 = vpop.f32.mrf.mxu0
          %v2652 = vadd.f32 %v2496, %v2651
          %2653 = vmatmul.bf16.gmra.mxu0 0
          %v2654 = vpop.f32.mrf.mxu0
          %v2655 = vadd.f32 %v2496, %v2654
          %v2656 = vpop.f32.mrf.mxu0
          %v2657 = vadd.f32 %v2496, %v2656
          %2658 = vmatmul.bf16.gmra.mxu0 0
          %v2659 = vpop.f32.mrf.mxu0
          %v2660 = vadd.f32 %v2496, %v2659
          %v2661 = vpop.f32.mrf.mxu0
          %v2662 = vadd.f32 %v2496, %v2661
          %2663 = vmatmul.bf16.gmra.mxu0 0
          %v2664 = vpop.f32.mrf.mxu0
          %v2665 = vadd.f32 %v2496, %v2664
          %v2666 = vpop.f32.mrf.mxu0
          %v2667 = vadd.f32 %v2496, %v2666
          %2668 = vmatmul.bf16.gmra.mxu0 0
          %v2669 = vpop.f32.mrf.mxu0
          %v2670 = vadd.f32 %v2496, %v2669
          %v2671 = vpop.f32.mrf.mxu0
          %v2672 = vadd.f32 %v2496, %v2671
          %2673 = vmatmul.bf16.gmra.mxu0 0
          %v2674 = vpop.f32.mrf.mxu0
          %v2675 = vadd.f32 %v2496, %v2674
          %v2676 = vpop.f32.mrf.mxu0
          %v2677 = vadd.f32 %v2496, %v2676
          %2678 = vdwg.mxu0
          %2679 = vmatpush.bf16.msra.mxu0 %v2604
          %2680 = vmatpush.bf16.msra.mxu0 %v2601
          %2681 = vmatpush.bf16.msra.mxu0 %v2598
          %2682 = vmatpush.bf16.msra.mxu0 %v2595
          %2683 = vmatpush.bf16.msra.mxu0 %v2592
          %2684 = vmatpush.bf16.msra.mxu0 %v2589
          %2685 = vmatpush.bf16.msra.mxu0 %v2586
          %2686 = vmatpush.bf16.msra.mxu0 %v2583
          %2687 = vmatmul.bf16.gmra.mxu0 0
          %v2688 = vpop.f32.mrf.mxu0
          %v2689 = vadd.f32 %v2497, %v2688
          %v2690 = vpop.f32.mrf.mxu0
          %v2691 = vadd.f32 %v2497, %v2690
          %2692 = vmatmul.bf16.gmra.mxu0 0
          %v2693 = vpop.f32.mrf.mxu0
          %v2694 = vadd.f32 %v2497, %v2693
          %v2695 = vpop.f32.mrf.mxu0
          %v2696 = vadd.f32 %v2497, %v2695
          %2697 = vmatmul.bf16.gmra.mxu0 0
          %v2698 = vpop.f32.mrf.mxu0
          %v2699 = vadd.f32 %v2497, %v2698
          %v2700 = vpop.f32.mrf.mxu0
          %v2701 = vadd.f32 %v2497, %v2700
          %2702 = vmatmul.bf16.gmra.mxu0 0
          %v2703 = vpop.f32.mrf.mxu0
          %v2704 = vadd.f32 %v2497, %v2703
          %v2705 = vpop.f32.mrf.mxu0
          %v2706 = vadd.f32 %v2497, %v2705
          %2707 = vmatmul.bf16.gmra.mxu0 0
          %v2708 = vpop.f32.mrf.mxu0
          %v2709 = vadd.f32 %v2497, %v2708
          %v2710 = vpop.f32.mrf.mxu0
          %v2711 = vadd.f32 %v2497, %v2710
          %2712 = vmatmul.bf16.gmra.mxu0 0
          %v2713 = vpop.f32.mrf.mxu0
          %v2714 = vadd.f32 %v2497, %v2713
          %v2715 = vpop.f32.mrf.mxu0
          %v2716 = vadd.f32 %v2497, %v2715
          %2717 = vmatmul.bf16.gmra.mxu0 0
          %v2718 = vpop.f32.mrf.mxu0
          %v2719 = vadd.f32 %v2497, %v2718
          %v2720 = vpop.f32.mrf.mxu0
          %v2721 = vadd.f32 %v2497, %v2720
          %2722 = vmatmul.bf16.gmra.mxu0 0
          %v2723 = vpop.f32.mrf.mxu0
          %v2724 = vadd.f32 %v2497, %v2723
          %v2725 = vpop.f32.mrf.mxu0
          %v2726 = vadd.f32 %v2497, %v2725
          %2727 = vdwg.mxu0
          %2728 = vmatpush.bf16.msra.mxu0 %v2605
          %2729 = vmatpush.bf16.msra.mxu0 %v2602
          %2730 = vmatpush.bf16.msra.mxu0 %v2599
          %2731 = vmatpush.bf16.msra.mxu0 %v2596
          %2732 = vmatpush.bf16.msra.mxu0 %v2593
          %2733 = vmatpush.bf16.msra.mxu0 %v2590
          %2734 = vmatpush.bf16.msra.mxu0 %v2587
          %2735 = vmatpush.bf16.msra.mxu0 %v2584
          %2736 = vmatmul.bf16.gmra.mxu0 0
          %v2737 = vpop.f32.mrf.mxu0
          %v2738 = vadd.f32 %v2498, %v2737
          %v2739 = vpop.f32.mrf.mxu0
          %v2740 = vadd.f32 %v2498, %v2739
          %2741 = vmatmul.bf16.gmra.mxu0 0
          %v2742 = vpop.f32.mrf.mxu0
          %v2743 = vadd.f32 %v2498, %v2742
          %v2744 = vpop.f32.mrf.mxu0
          %v2745 = vadd.f32 %v2498, %v2744
          %2746 = vmatmul.bf16.gmra.mxu0 0
          %v2747 = vpop.f32.mrf.mxu0
          %v2748 = vadd.f32 %v2498, %v2747
          %v2749 = vpop.f32.mrf.mxu0
          %v2750 = vadd.f32 %v2498, %v2749
          %2751 = vmatmul.bf16.gmra.mxu0 0
          %v2752 = vpop.f32.mrf.mxu0
          %v2753 = vadd.f32 %v2498, %v2752
          %v2754 = vpop.f32.mrf.mxu0
          %v2755 = vadd.f32 %v2498, %v2754
          %2756 = vmatmul.bf16.gmra.mxu0 0
          %v2757 = vpop.f32.mrf.mxu0
          %v2758 = vadd.f32 %v2498, %v2757
          %v2759 = vpop.f32.mrf.mxu0
          %v2760 = vadd.f32 %v2498, %v2759
          %2761 = vmatmul.bf16.gmra.mxu0 0
          %v2762 = vpop.f32.mrf.mxu0
          %v2763 = vadd.f32 %v2498, %v2762
          %v2764 = vpop.f32.mrf.mxu0
          %v2765 = vadd.f32 %v2498, %v2764
          %2766 = vmatmul.bf16.gmra.mxu0 0
          %v2767 = vpop.f32.mrf.mxu0
          %v2768 = vadd.f32 %v2498, %v2767
          %v2769 = vpop.f32.mrf.mxu0
          %v2770 = vadd.f32 %v2498, %v2769
          %2771 = vmatmul.bf16.gmra.mxu0 0
          %v2772 = vpop.f32.mrf.mxu0
          %v2773 = vadd.f32 %v2498, %v2772
          %v2774 = vpop.f32.mrf.mxu0
          %v2775 = vadd.f32 %v2498, %v2774
          %2776 = vdwg.mxu0
          %v2777 = vadd.f32 %v2118, %v2640
          %v2778 = vadd.f32 %v2120, %v2642
          %v2779 = vadd.f32 %v2123, %v2645
          %v2780 = vadd.f32 %v2125, %v2647
          %v2781 = vadd.f32 %v2128, %v2650
          %v2782 = vadd.f32 %v2130, %v2652
          %v2783 = vadd.f32 %v2133, %v2655
          %v2784 = vadd.f32 %v2135, %v2657
          %v2785 = vadd.f32 %v2138, %v2660
          %v2786 = vadd.f32 %v2140, %v2662
          %v2787 = vadd.f32 %v2143, %v2665
          %v2788 = vadd.f32 %v2145, %v2667
          %v2789 = vadd.f32 %v2148, %v2670
          %v2790 = vadd.f32 %v2150, %v2672
          %v2791 = vadd.f32 %v2153, %v2675
          %v2792 = vadd.f32 %v2155, %v2677
          %v2793 = vxor.u32 %v2777, 2147483648
          %v2794 = vxor.u32 %v2778, 2147483648
          %v2795 = vxor.u32 %v2779, 2147483648
          %v2796 = vxor.u32 %v2780, 2147483648
          %v2797 = vxor.u32 %v2781, 2147483648
          %v2798 = vxor.u32 %v2782, 2147483648
          %v2799 = vxor.u32 %v2783, 2147483648
          %v2800 = vxor.u32 %v2784, 2147483648
          %v2801 = vxor.u32 %v2785, 2147483648
          %v2802 = vxor.u32 %v2786, 2147483648
          %v2803 = vxor.u32 %v2787, 2147483648
          %v2804 = vxor.u32 %v2788, 2147483648
          %v2805 = vxor.u32 %v2789, 2147483648
          %v2806 = vxor.u32 %v2790, 2147483648
          %v2807 = vxor.u32 %v2791, 2147483648
          %v2808 = vxor.u32 %v2792, 2147483648
          %v2809 = vmul.f32 %v2793, 1.442695
          %v2810 = vpow.pop %v2809
          %v2811 = vmul.f32 %v2794, 1.442695
          %v2812 = vpow.pop %v2811
          %v2813 = vmul.f32 %v2795, 1.442695
          %v2814 = vpow.pop %v2813
          %v2815 = vmul.f32 %v2796, 1.442695
          %v2816 = vpow.pop %v2815
          %v2817 = vmul.f32 %v2797, 1.442695
          %v2818 = vpow.pop %v2817
          %v2819 = vmul.f32 %v2798, 1.442695
          %v2820 = vpow.pop %v2819
          %v2821 = vmul.f32 %v2799, 1.442695
          %v2822 = vpow.pop %v2821
          %v2823 = vmul.f32 %v2800, 1.442695
          %v2824 = vpow.pop %v2823
          %v2825 = vmul.f32 %v2801, 1.442695
          %v2826 = vpow.pop %v2825
          %v2827 = vmul.f32 %v2802, 1.442695
          %v2828 = vpow.pop %v2827
          %v2829 = vmul.f32 %v2803, 1.442695
          %v2830 = vpow.pop %v2829
          %v2831 = vmul.f32 %v2804, 1.442695
          %v2832 = vpow.pop %v2831
          %v2833 = vmul.f32 %v2805, 1.442695
          %v2834 = vpow.pop %v2833
          %v2835 = vmul.f32 %v2806, 1.442695
          %v2836 = vpow.pop %v2835
          %v2837 = vmul.f32 %v2807, 1.442695
          %v2838 = vpow.pop %v2837
          %v2839 = vmul.f32 %v2808, 1.442695
          %v2840 = vpow.pop %v2839
          %v2841 = vadd.f32 %v2810, 1.0
          %v2842 = vadd.f32 %v2812, 1.0
          %v2843 = vadd.f32 %v2814, 1.0
          %v2844 = vadd.f32 %v2816, 1.0
          %v2845 = vadd.f32 %v2818, 1.0
          %v2846 = vadd.f32 %v2820, 1.0
          %v2847 = vadd.f32 %v2822, 1.0
          %v2848 = vadd.f32 %v2824, 1.0
          %v2849 = vadd.f32 %v2826, 1.0
          %v2850 = vadd.f32 %v2828, 1.0
          %v2851 = vadd.f32 %v2830, 1.0
          %v2852 = vadd.f32 %v2832, 1.0
          %v2853 = vadd.f32 %v2834, 1.0
          %v2854 = vadd.f32 %v2836, 1.0
          %v2855 = vadd.f32 %v2838, 1.0
          %v2856 = vadd.f32 %v2840, 1.0
          %v2857 = vrcp.pop %v2841
          %v2858 = vmul.f32 %v2841, %v2857
          %v2859 = vsub.f32 1.0, %v2858
          %v2860 = vmul.f32 %v2857, %v2859
          %v2861 = vadd.f32 %v2857, %v2860
          %vm2862 = vweird.f32 %v2841
          %vm2863 = vweird.f32 %v2857
          %vm2864 = vmor %vm2862, %vm2863
          %v2865 = vsel %vm2864, %v2857, %v2861
          %v2866 = vand.u32 2147483647, %v2841
          %vm2867 = vcmp.eq.f32.partialorder %v2866, 8.507059e+37
          %v2868 = vand.u32 %v2841, 2147483648
          %v2869 = vor.u32 1.1754944e-38, %v2868
          %v2870 = vsel %vm2867, %v2869, %v2865
          %v2871 = vmul.f32 1.0, %v2870
          %v2872 = vrcp.pop %v2842
          %v2873 = vmul.f32 %v2842, %v2872
          %v2874 = vsub.f32 1.0, %v2873
          %v2875 = vmul.f32 %v2872, %v2874
          %v2876 = vadd.f32 %v2872, %v2875
          %vm2877 = vweird.f32 %v2842
          %vm2878 = vweird.f32 %v2872
          %vm2879 = vmor %vm2877, %vm2878
          %v2880 = vsel %vm2879, %v2872, %v2876
          %v2881 = vand.u32 2147483647, %v2842
          %vm2882 = vcmp.eq.f32.partialorder %v2881, 8.507059e+37
          %v2883 = vand.u32 %v2842, 2147483648
          %v2884 = vor.u32 1.1754944e-38, %v2883
          %v2885 = vsel %vm2882, %v2884, %v2880
          %v2886 = vmul.f32 1.0, %v2885
          %v2887 = vrcp.pop %v2843
          %v2888 = vmul.f32 %v2843, %v2887
          %v2889 = vsub.f32 1.0, %v2888
          %v2890 = vmul.f32 %v2887, %v2889
          %v2891 = vadd.f32 %v2887, %v2890
          %vm2892 = vweird.f32 %v2843
          %vm2893 = vweird.f32 %v2887
          %vm2894 = vmor %vm2892, %vm2893
          %v2895 = vsel %vm2894, %v2887, %v2891
          %v2896 = vand.u32 2147483647, %v2843
          %vm2897 = vcmp.eq.f32.partialorder %v2896, 8.507059e+37
          %v2898 = vand.u32 %v2843, 2147483648
          %v2899 = vor.u32 1.1754944e-38, %v2898
          %v2900 = vsel %vm2897, %v2899, %v2895
          %v2901 = vmul.f32 1.0, %v2900
          %v2902 = vrcp.pop %v2844
          %v2903 = vmul.f32 %v2844, %v2902
          %v2904 = vsub.f32 1.0, %v2903
          %v2905 = vmul.f32 %v2902, %v2904
          %v2906 = vadd.f32 %v2902, %v2905
          %vm2907 = vweird.f32 %v2844
          %vm2908 = vweird.f32 %v2902
          %vm2909 = vmor %vm2907, %vm2908
          %v2910 = vsel %vm2909, %v2902, %v2906
          %v2911 = vand.u32 2147483647, %v2844
          %vm2912 = vcmp.eq.f32.partialorder %v2911, 8.507059e+37
          %v2913 = vand.u32 %v2844, 2147483648
          %v2914 = vor.u32 1.1754944e-38, %v2913
          %v2915 = vsel %vm2912, %v2914, %v2910
          %v2916 = vmul.f32 1.0, %v2915
          %v2917 = vrcp.pop %v2845
          %v2918 = vmul.f32 %v2845, %v2917
          %v2919 = vsub.f32 1.0, %v2918
          %v2920 = vmul.f32 %v2917, %v2919
          %v2921 = vadd.f32 %v2917, %v2920
          %vm2922 = vweird.f32 %v2845
          %vm2923 = vweird.f32 %v2917
          %vm2924 = vmor %vm2922, %vm2923
          %v2925 = vsel %vm2924, %v2917, %v2921
          %v2926 = vand.u32 2147483647, %v2845
          %vm2927 = vcmp.eq.f32.partialorder %v2926, 8.507059e+37
          %v2928 = vand.u32 %v2845, 2147483648
          %v2929 = vor.u32 1.1754944e-38, %v2928
          %v2930 = vsel %vm2927, %v2929, %v2925
          %v2931 = vmul.f32 1.0, %v2930
          %v2932 = vrcp.pop %v2846
          %v2933 = vmul.f32 %v2846, %v2932
          %v2934 = vsub.f32 1.0, %v2933
          %v2935 = vmul.f32 %v2932, %v2934
          %v2936 = vadd.f32 %v2932, %v2935
          %vm2937 = vweird.f32 %v2846
          %vm2938 = vweird.f32 %v2932
          %vm2939 = vmor %vm2937, %vm2938
          %v2940 = vsel %vm2939, %v2932, %v2936
          %v2941 = vand.u32 2147483647, %v2846
          %vm2942 = vcmp.eq.f32.partialorder %v2941, 8.507059e+37
          %v2943 = vand.u32 %v2846, 2147483648
          %v2944 = vor.u32 1.1754944e-38, %v2943
          %v2945 = vsel %vm2942, %v2944, %v2940
          %v2946 = vmul.f32 1.0, %v2945
          %v2947 = vrcp.pop %v2847
          %v2948 = vmul.f32 %v2847, %v2947
          %v2949 = vsub.f32 1.0, %v2948
          %v2950 = vmul.f32 %v2947, %v2949
          %v2951 = vadd.f32 %v2947, %v2950
          %vm2952 = vweird.f32 %v2847
          %vm2953 = vweird.f32 %v2947
          %vm2954 = vmor %vm2952, %vm2953
          %v2955 = vsel %vm2954, %v2947, %v2951
          %v2956 = vand.u32 2147483647, %v2847
          %vm2957 = vcmp.eq.f32.partialorder %v2956, 8.507059e+37
          %v2958 = vand.u32 %v2847, 2147483648
          %v2959 = vor.u32 1.1754944e-38, %v2958
          %v2960 = vsel %vm2957, %v2959, %v2955
          %v2961 = vmul.f32 1.0, %v2960
          %v2962 = vrcp.pop %v2848
          %v2963 = vmul.f32 %v2848, %v2962
          %v2964 = vsub.f32 1.0, %v2963
          %v2965 = vmul.f32 %v2962, %v2964
          %v2966 = vadd.f32 %v2962, %v2965
          %vm2967 = vweird.f32 %v2848
          %vm2968 = vweird.f32 %v2962
          %vm2969 = vmor %vm2967, %vm2968
          %v2970 = vsel %vm2969, %v2962, %v2966
          %v2971 = vand.u32 2147483647, %v2848
          %vm2972 = vcmp.eq.f32.partialorder %v2971, 8.507059e+37
          %v2973 = vand.u32 %v2848, 2147483648
          %v2974 = vor.u32 1.1754944e-38, %v2973
          %v2975 = vsel %vm2972, %v2974, %v2970
          %v2976 = vmul.f32 1.0, %v2975
          %v2977 = vrcp.pop %v2849
          %v2978 = vmul.f32 %v2849, %v2977
          %v2979 = vsub.f32 1.0, %v2978
          %v2980 = vmul.f32 %v2977, %v2979
          %v2981 = vadd.f32 %v2977, %v2980
          %vm2982 = vweird.f32 %v2849
          %vm2983 = vweird.f32 %v2977
          %vm2984 = vmor %vm2982, %vm2983
          %v2985 = vsel %vm2984, %v2977, %v2981
          %v2986 = vand.u32 2147483647, %v2849
          %vm2987 = vcmp.eq.f32.partialorder %v2986, 8.507059e+37
          %v2988 = vand.u32 %v2849, 2147483648
          %v2989 = vor.u32 1.1754944e-38, %v2988
          %v2990 = vsel %vm2987, %v2989, %v2985
          %v2991 = vmul.f32 1.0, %v2990
          %v2992 = vrcp.pop %v2850
          %v2993 = vmul.f32 %v2850, %v2992
          %v2994 = vsub.f32 1.0, %v2993
          %v2995 = vmul.f32 %v2992, %v2994
          %v2996 = vadd.f32 %v2992, %v2995
          %vm2997 = vweird.f32 %v2850
          %vm2998 = vweird.f32 %v2992
          %vm2999 = vmor %vm2997, %vm2998
          %v3000 = vsel %vm2999, %v2992, %v2996
          %v3001 = vand.u32 2147483647, %v2850
          %vm3002 = vcmp.eq.f32.partialorder %v3001, 8.507059e+37
          %v3003 = vand.u32 %v2850, 2147483648
          %v3004 = vor.u32 1.1754944e-38, %v3003
          %v3005 = vsel %vm3002, %v3004, %v3000
          %v3006 = vmul.f32 1.0, %v3005
          %v3007 = vrcp.pop %v2851
          %v3008 = vmul.f32 %v2851, %v3007
          %v3009 = vsub.f32 1.0, %v3008
          %v3010 = vmul.f32 %v3007, %v3009
          %v3011 = vadd.f32 %v3007, %v3010
          %vm3012 = vweird.f32 %v2851
          %vm3013 = vweird.f32 %v3007
          %vm3014 = vmor %vm3012, %vm3013
          %v3015 = vsel %vm3014, %v3007, %v3011
          %v3016 = vand.u32 2147483647, %v2851
          %vm3017 = vcmp.eq.f32.partialorder %v3016, 8.507059e+37
          %v3018 = vand.u32 %v2851, 2147483648
          %v3019 = vor.u32 1.1754944e-38, %v3018
          %v3020 = vsel %vm3017, %v3019, %v3015
          %v3021 = vmul.f32 1.0, %v3020
          %v3022 = vrcp.pop %v2852
          %v3023 = vmul.f32 %v2852, %v3022
          %v3024 = vsub.f32 1.0, %v3023
          %v3025 = vmul.f32 %v3022, %v3024
          %v3026 = vadd.f32 %v3022, %v3025
          %vm3027 = vweird.f32 %v2852
          %vm3028 = vweird.f32 %v3022
          %vm3029 = vmor %vm3027, %vm3028
          %v3030 = vsel %vm3029, %v3022, %v3026
          %v3031 = vand.u32 2147483647, %v2852
          %vm3032 = vcmp.eq.f32.partialorder %v3031, 8.507059e+37
          %v3033 = vand.u32 %v2852, 2147483648
          %v3034 = vor.u32 1.1754944e-38, %v3033
          %v3035 = vsel %vm3032, %v3034, %v3030
          %v3036 = vmul.f32 1.0, %v3035
          %v3037 = vrcp.pop %v2853
          %v3038 = vmul.f32 %v2853, %v3037
          %v3039 = vsub.f32 1.0, %v3038
          %v3040 = vmul.f32 %v3037, %v3039
          %v3041 = vadd.f32 %v3037, %v3040
          %vm3042 = vweird.f32 %v2853
          %vm3043 = vweird.f32 %v3037
          %vm3044 = vmor %vm3042, %vm3043
          %v3045 = vsel %vm3044, %v3037, %v3041
          %v3046 = vand.u32 2147483647, %v2853
          %vm3047 = vcmp.eq.f32.partialorder %v3046, 8.507059e+37
          %v3048 = vand.u32 %v2853, 2147483648
          %v3049 = vor.u32 1.1754944e-38, %v3048
          %v3050 = vsel %vm3047, %v3049, %v3045
          %v3051 = vmul.f32 1.0, %v3050
          %v3052 = vrcp.pop %v2854
          %v3053 = vmul.f32 %v2854, %v3052
          %v3054 = vsub.f32 1.0, %v3053
          %v3055 = vmul.f32 %v3052, %v3054
          %v3056 = vadd.f32 %v3052, %v3055
          %vm3057 = vweird.f32 %v2854
          %vm3058 = vweird.f32 %v3052
          %vm3059 = vmor %vm3057, %vm3058
          %v3060 = vsel %vm3059, %v3052, %v3056
          %v3061 = vand.u32 2147483647, %v2854
          %vm3062 = vcmp.eq.f32.partialorder %v3061, 8.507059e+37
          %v3063 = vand.u32 %v2854, 2147483648
          %v3064 = vor.u32 1.1754944e-38, %v3063
          %v3065 = vsel %vm3062, %v3064, %v3060
          %v3066 = vmul.f32 1.0, %v3065
          %v3067 = vrcp.pop %v2855
          %v3068 = vmul.f32 %v2855, %v3067
          %v3069 = vsub.f32 1.0, %v3068
          %v3070 = vmul.f32 %v3067, %v3069
          %v3071 = vadd.f32 %v3067, %v3070
          %vm3072 = vweird.f32 %v2855
          %vm3073 = vweird.f32 %v3067
          %vm3074 = vmor %vm3072, %vm3073
          %v3075 = vsel %vm3074, %v3067, %v3071
          %v3076 = vand.u32 2147483647, %v2855
          %vm3077 = vcmp.eq.f32.partialorder %v3076, 8.507059e+37
          %v3078 = vand.u32 %v2855, 2147483648
          %v3079 = vor.u32 1.1754944e-38, %v3078
          %v3080 = vsel %vm3077, %v3079, %v3075
          %v3081 = vmul.f32 1.0, %v3080
          %v3082 = vrcp.pop %v2856
          %v3083 = vmul.f32 %v2856, %v3082
          %v3084 = vsub.f32 1.0, %v3083
          %v3085 = vmul.f32 %v3082, %v3084
          %v3086 = vadd.f32 %v3082, %v3085
          %vm3087 = vweird.f32 %v2856
          %vm3088 = vweird.f32 %v3082
          %vm3089 = vmor %vm3087, %vm3088
          %v3090 = vsel %vm3089, %v3082, %v3086
          %v3091 = vand.u32 2147483647, %v2856
          %vm3092 = vcmp.eq.f32.partialorder %v3091, 8.507059e+37
          %v3093 = vand.u32 %v2856, 2147483648
          %v3094 = vor.u32 1.1754944e-38, %v3093
          %v3095 = vsel %vm3092, %v3094, %v3090
          %v3096 = vmul.f32 1.0, %v3095
          %v3097 = vadd.f32 %v2247, %v2689
          %v3098 = vadd.f32 %v2249, %v2691
          %v3099 = vadd.f32 %v2252, %v2694
          %v3100 = vadd.f32 %v2254, %v2696
          %v3101 = vadd.f32 %v2257, %v2699
          %v3102 = vadd.f32 %v2259, %v2701
          %v3103 = vadd.f32 %v2262, %v2704
          %v3104 = vadd.f32 %v2264, %v2706
          %v3105 = vadd.f32 %v2267, %v2709
          %v3106 = vadd.f32 %v2269, %v2711
          %v3107 = vadd.f32 %v2272, %v2714
          %v3108 = vadd.f32 %v2274, %v2716
          %v3109 = vadd.f32 %v2277, %v2719
          %v3110 = vadd.f32 %v2279, %v2721
          %v3111 = vadd.f32 %v2282, %v2724
          %v3112 = vadd.f32 %v2284, %v2726
          %v3113 = vxor.u32 %v3097, 2147483648
          %v3114 = vxor.u32 %v3098, 2147483648
          %v3115 = vxor.u32 %v3099, 2147483648
          %v3116 = vxor.u32 %v3100, 2147483648
          %v3117 = vxor.u32 %v3101, 2147483648
          %v3118 = vxor.u32 %v3102, 2147483648
          %v3119 = vxor.u32 %v3103, 2147483648
          %v3120 = vxor.u32 %v3104, 2147483648
          %v3121 = vxor.u32 %v3105, 2147483648
          %v3122 = vxor.u32 %v3106, 2147483648
          %v3123 = vxor.u32 %v3107, 2147483648
          %v3124 = vxor.u32 %v3108, 2147483648
          %v3125 = vxor.u32 %v3109, 2147483648
          %v3126 = vxor.u32 %v3110, 2147483648
          %v3127 = vxor.u32 %v3111, 2147483648
          %v3128 = vxor.u32 %v3112, 2147483648
          %v3129 = vmul.f32 %v3113, 1.442695
          %v3130 = vpow.pop %v3129
          %v3131 = vmul.f32 %v3114, 1.442695
          %v3132 = vpow.pop %v3131
          %v3133 = vmul.f32 %v3115, 1.442695
          %v3134 = vpow.pop %v3133
          %v3135 = vmul.f32 %v3116, 1.442695
          %v3136 = vpow.pop %v3135
          %v3137 = vmul.f32 %v3117, 1.442695
          %v3138 = vpow.pop %v3137
          %v3139 = vmul.f32 %v3118, 1.442695
          %v3140 = vpow.pop %v3139
          %v3141 = vmul.f32 %v3119, 1.442695
          %v3142 = vpow.pop %v3141
          %v3143 = vmul.f32 %v3120, 1.442695
          %v3144 = vpow.pop %v3143
          %v3145 = vmul.f32 %v3121, 1.442695
          %v3146 = vpow.pop %v3145
          %v3147 = vmul.f32 %v3122, 1.442695
          %v3148 = vpow.pop %v3147
          %v3149 = vmul.f32 %v3123, 1.442695
          %v3150 = vpow.pop %v3149
          %v3151 = vmul.f32 %v3124, 1.442695
          %v3152 = vpow.pop %v3151
          %v3153 = vmul.f32 %v3125, 1.442695
          %v3154 = vpow.pop %v3153
          %v3155 = vmul.f32 %v3126, 1.442695
          %v3156 = vpow.pop %v3155
          %v3157 = vmul.f32 %v3127, 1.442695
          %v3158 = vpow.pop %v3157
          %v3159 = vmul.f32 %v3128, 1.442695
          %v3160 = vpow.pop %v3159
          %v3161 = vadd.f32 %v3130, 1.0
          %v3162 = vadd.f32 %v3132, 1.0
          %v3163 = vadd.f32 %v3134, 1.0
          %v3164 = vadd.f32 %v3136, 1.0
          %v3165 = vadd.f32 %v3138, 1.0
          %v3166 = vadd.f32 %v3140, 1.0
          %v3167 = vadd.f32 %v3142, 1.0
          %v3168 = vadd.f32 %v3144, 1.0
          %v3169 = vadd.f32 %v3146, 1.0
          %v3170 = vadd.f32 %v3148, 1.0
          %v3171 = vadd.f32 %v3150, 1.0
          %v3172 = vadd.f32 %v3152, 1.0
          %v3173 = vadd.f32 %v3154, 1.0
          %v3174 = vadd.f32 %v3156, 1.0
          %v3175 = vadd.f32 %v3158, 1.0
          %v3176 = vadd.f32 %v3160, 1.0
          %v3177 = vrcp.pop %v3161
          %v3178 = vmul.f32 %v3161, %v3177
          %v3179 = vsub.f32 1.0, %v3178
          %v3180 = vmul.f32 %v3177, %v3179
          %v3181 = vadd.f32 %v3177, %v3180
          %vm3182 = vweird.f32 %v3161
          %vm3183 = vweird.f32 %v3177
          %vm3184 = vmor %vm3182, %vm3183
          %v3185 = vsel %vm3184, %v3177, %v3181
          %v3186 = vand.u32 2147483647, %v3161
          %vm3187 = vcmp.eq.f32.partialorder %v3186, 8.507059e+37
          %v3188 = vand.u32 %v3161, 2147483648
          %v3189 = vor.u32 1.1754944e-38, %v3188
          %v3190 = vsel %vm3187, %v3189, %v3185
          %v3191 = vmul.f32 1.0, %v3190
          %v3192 = vrcp.pop %v3162
          %v3193 = vmul.f32 %v3162, %v3192
          %v3194 = vsub.f32 1.0, %v3193
          %v3195 = vmul.f32 %v3192, %v3194
          %v3196 = vadd.f32 %v3192, %v3195
          %vm3197 = vweird.f32 %v3162
          %vm3198 = vweird.f32 %v3192
          %vm3199 = vmor %vm3197, %vm3198
          %v3200 = vsel %vm3199, %v3192, %v3196
          %v3201 = vand.u32 2147483647, %v3162
          %vm3202 = vcmp.eq.f32.partialorder %v3201, 8.507059e+37
          %v3203 = vand.u32 %v3162, 2147483648
          %v3204 = vor.u32 1.1754944e-38, %v3203
          %v3205 = vsel %vm3202, %v3204, %v3200
          %v3206 = vmul.f32 1.0, %v3205
          %v3207 = vrcp.pop %v3163
          %v3208 = vmul.f32 %v3163, %v3207
          %v3209 = vsub.f32 1.0, %v3208
          %v3210 = vmul.f32 %v3207, %v3209
          %v3211 = vadd.f32 %v3207, %v3210
          %vm3212 = vweird.f32 %v3163
          %vm3213 = vweird.f32 %v3207
          %vm3214 = vmor %vm3212, %vm3213
          %v3215 = vsel %vm3214, %v3207, %v3211
          %v3216 = vand.u32 2147483647, %v3163
          %vm3217 = vcmp.eq.f32.partialorder %v3216, 8.507059e+37
          %v3218 = vand.u32 %v3163, 2147483648
          %v3219 = vor.u32 1.1754944e-38, %v3218
          %v3220 = vsel %vm3217, %v3219, %v3215
          %v3221 = vmul.f32 1.0, %v3220
          %v3222 = vrcp.pop %v3164
          %v3223 = vmul.f32 %v3164, %v3222
          %v3224 = vsub.f32 1.0, %v3223
          %v3225 = vmul.f32 %v3222, %v3224
          %v3226 = vadd.f32 %v3222, %v3225
          %vm3227 = vweird.f32 %v3164
          %vm3228 = vweird.f32 %v3222
          %vm3229 = vmor %vm3227, %vm3228
          %v3230 = vsel %vm3229, %v3222, %v3226
          %v3231 = vand.u32 2147483647, %v3164
          %vm3232 = vcmp.eq.f32.partialorder %v3231, 8.507059e+37
          %v3233 = vand.u32 %v3164, 2147483648
          %v3234 = vor.u32 1.1754944e-38, %v3233
          %v3235 = vsel %vm3232, %v3234, %v3230
          %v3236 = vmul.f32 1.0, %v3235
          %v3237 = vrcp.pop %v3165
          %v3238 = vmul.f32 %v3165, %v3237
          %v3239 = vsub.f32 1.0, %v3238
          %v3240 = vmul.f32 %v3237, %v3239
          %v3241 = vadd.f32 %v3237, %v3240
          %vm3242 = vweird.f32 %v3165
          %vm3243 = vweird.f32 %v3237
          %vm3244 = vmor %vm3242, %vm3243
          %v3245 = vsel %vm3244, %v3237, %v3241
          %v3246 = vand.u32 2147483647, %v3165
          %vm3247 = vcmp.eq.f32.partialorder %v3246, 8.507059e+37
          %v3248 = vand.u32 %v3165, 2147483648
          %v3249 = vor.u32 1.1754944e-38, %v3248
          %v3250 = vsel %vm3247, %v3249, %v3245
          %v3251 = vmul.f32 1.0, %v3250
          %v3252 = vrcp.pop %v3166
          %v3253 = vmul.f32 %v3166, %v3252
          %v3254 = vsub.f32 1.0, %v3253
          %v3255 = vmul.f32 %v3252, %v3254
          %v3256 = vadd.f32 %v3252, %v3255
          %vm3257 = vweird.f32 %v3166
          %vm3258 = vweird.f32 %v3252
          %vm3259 = vmor %vm3257, %vm3258
          %v3260 = vsel %vm3259, %v3252, %v3256
          %v3261 = vand.u32 2147483647, %v3166
          %vm3262 = vcmp.eq.f32.partialorder %v3261, 8.507059e+37
          %v3263 = vand.u32 %v3166, 2147483648
          %v3264 = vor.u32 1.1754944e-38, %v3263
          %v3265 = vsel %vm3262, %v3264, %v3260
          %v3266 = vmul.f32 1.0, %v3265
          %v3267 = vrcp.pop %v3167
          %v3268 = vmul.f32 %v3167, %v3267
          %v3269 = vsub.f32 1.0, %v3268
          %v3270 = vmul.f32 %v3267, %v3269
          %v3271 = vadd.f32 %v3267, %v3270
          %vm3272 = vweird.f32 %v3167
          %vm3273 = vweird.f32 %v3267
          %vm3274 = vmor %vm3272, %vm3273
          %v3275 = vsel %vm3274, %v3267, %v3271
          %v3276 = vand.u32 2147483647, %v3167
          %vm3277 = vcmp.eq.f32.partialorder %v3276, 8.507059e+37
          %v3278 = vand.u32 %v3167, 2147483648
          %v3279 = vor.u32 1.1754944e-38, %v3278
          %v3280 = vsel %vm3277, %v3279, %v3275
          %v3281 = vmul.f32 1.0, %v3280
          %v3282 = vrcp.pop %v3168
          %v3283 = vmul.f32 %v3168, %v3282
          %v3284 = vsub.f32 1.0, %v3283
          %v3285 = vmul.f32 %v3282, %v3284
          %v3286 = vadd.f32 %v3282, %v3285
          %vm3287 = vweird.f32 %v3168
          %vm3288 = vweird.f32 %v3282
          %vm3289 = vmor %vm3287, %vm3288
          %v3290 = vsel %vm3289, %v3282, %v3286
          %v3291 = vand.u32 2147483647, %v3168
          %vm3292 = vcmp.eq.f32.partialorder %v3291, 8.507059e+37
          %v3293 = vand.u32 %v3168, 2147483648
          %v3294 = vor.u32 1.1754944e-38, %v3293
          %v3295 = vsel %vm3292, %v3294, %v3290
          %v3296 = vmul.f32 1.0, %v3295
          %v3297 = vrcp.pop %v3169
          %v3298 = vmul.f32 %v3169, %v3297
          %v3299 = vsub.f32 1.0, %v3298
          %v3300 = vmul.f32 %v3297, %v3299
          %v3301 = vadd.f32 %v3297, %v3300
          %vm3302 = vweird.f32 %v3169
          %vm3303 = vweird.f32 %v3297
          %vm3304 = vmor %vm3302, %vm3303
          %v3305 = vsel %vm3304, %v3297, %v3301
          %v3306 = vand.u32 2147483647, %v3169
          %vm3307 = vcmp.eq.f32.partialorder %v3306, 8.507059e+37
          %v3308 = vand.u32 %v3169, 2147483648
          %v3309 = vor.u32 1.1754944e-38, %v3308
          %v3310 = vsel %vm3307, %v3309, %v3305
          %v3311 = vmul.f32 1.0, %v3310
          %v3312 = vrcp.pop %v3170
          %v3313 = vmul.f32 %v3170, %v3312
          %v3314 = vsub.f32 1.0, %v3313
          %v3315 = vmul.f32 %v3312, %v3314
          %v3316 = vadd.f32 %v3312, %v3315
          %vm3317 = vweird.f32 %v3170
          %vm3318 = vweird.f32 %v3312
          %vm3319 = vmor %vm3317, %vm3318
          %v3320 = vsel %vm3319, %v3312, %v3316
          %v3321 = vand.u32 2147483647, %v3170
          %vm3322 = vcmp.eq.f32.partialorder %v3321, 8.507059e+37
          %v3323 = vand.u32 %v3170, 2147483648
          %v3324 = vor.u32 1.1754944e-38, %v3323
          %v3325 = vsel %vm3322, %v3324, %v3320
          %v3326 = vmul.f32 1.0, %v3325
          %v3327 = vrcp.pop %v3171
          %v3328 = vmul.f32 %v3171, %v3327
          %v3329 = vsub.f32 1.0, %v3328
          %v3330 = vmul.f32 %v3327, %v3329
          %v3331 = vadd.f32 %v3327, %v3330
          %vm3332 = vweird.f32 %v3171
          %vm3333 = vweird.f32 %v3327
          %vm3334 = vmor %vm3332, %vm3333
          %v3335 = vsel %vm3334, %v3327, %v3331
          %v3336 = vand.u32 2147483647, %v3171
          %vm3337 = vcmp.eq.f32.partialorder %v3336, 8.507059e+37
          %v3338 = vand.u32 %v3171, 2147483648
          %v3339 = vor.u32 1.1754944e-38, %v3338
          %v3340 = vsel %vm3337, %v3339, %v3335
          %v3341 = vmul.f32 1.0, %v3340
          %v3342 = vrcp.pop %v3172
          %v3343 = vmul.f32 %v3172, %v3342
          %v3344 = vsub.f32 1.0, %v3343
          %v3345 = vmul.f32 %v3342, %v3344
          %v3346 = vadd.f32 %v3342, %v3345
          %vm3347 = vweird.f32 %v3172
          %vm3348 = vweird.f32 %v3342
          %vm3349 = vmor %vm3347, %vm3348
          %v3350 = vsel %vm3349, %v3342, %v3346
          %v3351 = vand.u32 2147483647, %v3172
          %vm3352 = vcmp.eq.f32.partialorder %v3351, 8.507059e+37
          %v3353 = vand.u32 %v3172, 2147483648
          %v3354 = vor.u32 1.1754944e-38, %v3353
          %v3355 = vsel %vm3352, %v3354, %v3350
          %v3356 = vmul.f32 1.0, %v3355
          %v3357 = vrcp.pop %v3173
          %v3358 = vmul.f32 %v3173, %v3357
          %v3359 = vsub.f32 1.0, %v3358
          %v3360 = vmul.f32 %v3357, %v3359
          %v3361 = vadd.f32 %v3357, %v3360
          %vm3362 = vweird.f32 %v3173
          %vm3363 = vweird.f32 %v3357
          %vm3364 = vmor %vm3362, %vm3363
          %v3365 = vsel %vm3364, %v3357, %v3361
          %v3366 = vand.u32 2147483647, %v3173
          %vm3367 = vcmp.eq.f32.partialorder %v3366, 8.507059e+37
          %v3368 = vand.u32 %v3173, 2147483648
          %v3369 = vor.u32 1.1754944e-38, %v3368
          %v3370 = vsel %vm3367, %v3369, %v3365
          %v3371 = vmul.f32 1.0, %v3370
          %v3372 = vrcp.pop %v3174
          %v3373 = vmul.f32 %v3174, %v3372
          %v3374 = vsub.f32 1.0, %v3373
          %v3375 = vmul.f32 %v3372, %v3374
          %v3376 = vadd.f32 %v3372, %v3375
          %vm3377 = vweird.f32 %v3174
          %vm3378 = vweird.f32 %v3372
          %vm3379 = vmor %vm3377, %vm3378
          %v3380 = vsel %vm3379, %v3372, %v3376
          %v3381 = vand.u32 2147483647, %v3174
          %vm3382 = vcmp.eq.f32.partialorder %v3381, 8.507059e+37
          %v3383 = vand.u32 %v3174, 2147483648
          %v3384 = vor.u32 1.1754944e-38, %v3383
          %v3385 = vsel %vm3382, %v3384, %v3380
          %v3386 = vmul.f32 1.0, %v3385
          %v3387 = vrcp.pop %v3175
          %v3388 = vmul.f32 %v3175, %v3387
          %v3389 = vsub.f32 1.0, %v3388
          %v3390 = vmul.f32 %v3387, %v3389
          %v3391 = vadd.f32 %v3387, %v3390
          %vm3392 = vweird.f32 %v3175
          %vm3393 = vweird.f32 %v3387
          %vm3394 = vmor %vm3392, %vm3393
          %v3395 = vsel %vm3394, %v3387, %v3391
          %v3396 = vand.u32 2147483647, %v3175
          %vm3397 = vcmp.eq.f32.partialorder %v3396, 8.507059e+37
          %v3398 = vand.u32 %v3175, 2147483648
          %v3399 = vor.u32 1.1754944e-38, %v3398
          %v3400 = vsel %vm3397, %v3399, %v3395
          %v3401 = vmul.f32 1.0, %v3400
          %v3402 = vrcp.pop %v3176
          %v3403 = vmul.f32 %v3176, %v3402
          %v3404 = vsub.f32 1.0, %v3403
          %v3405 = vmul.f32 %v3402, %v3404
          %v3406 = vadd.f32 %v3402, %v3405
          %vm3407 = vweird.f32 %v3176
          %vm3408 = vweird.f32 %v3402
          %vm3409 = vmor %vm3407, %vm3408
          %v3410 = vsel %vm3409, %v3402, %v3406
          %v3411 = vand.u32 2147483647, %v3176
          %vm3412 = vcmp.eq.f32.partialorder %v3411, 8.507059e+37
          %v3413 = vand.u32 %v3176, 2147483648
          %v3414 = vor.u32 1.1754944e-38, %v3413
          %v3415 = vsel %vm3412, %v3414, %v3410
          %v3416 = vmul.f32 1.0, %v3415
          %v3417 = vmul.f32 %v2871, %v2738
          %v3418 = vmul.f32 %v2886, %v2740
          %v3419 = vmul.f32 %v2901, %v2743
          %v3420 = vmul.f32 %v2916, %v2745
          %v3421 = vmul.f32 %v2931, %v2748
          %v3422 = vmul.f32 %v2946, %v2750
          %v3423 = vmul.f32 %v2961, %v2753
          %v3424 = vmul.f32 %v2976, %v2755
          %v3425 = vmul.f32 %v2991, %v2758
          %v3426 = vmul.f32 %v3006, %v2760
          %v3427 = vmul.f32 %v3021, %v2763
          %v3428 = vmul.f32 %v3036, %v2765
          %v3429 = vmul.f32 %v3051, %v2768
          %v3430 = vmul.f32 %v3066, %v2770
          %v3431 = vmul.f32 %v3081, %v2773
          %v3432 = vmul.f32 %v3096, %v2775
          %v3433 = vadd.f32 %v2376, %v3417
          %v3434 = vadd.f32 %v2378, %v3418
          %v3435 = vadd.f32 %v2381, %v3419
          %v3436 = vadd.f32 %v2383, %v3420
          %v3437 = vadd.f32 %v2386, %v3421
          %v3438 = vadd.f32 %v2388, %v3422
          %v3439 = vadd.f32 %v2391, %v3423
          %v3440 = vadd.f32 %v2393, %v3424
          %v3441 = vadd.f32 %v2396, %v3425
          %v3442 = vadd.f32 %v2398, %v3426
          %v3443 = vadd.f32 %v2401, %v3427
          %v3444 = vadd.f32 %v2403, %v3428
          %v3445 = vadd.f32 %v2406, %v3429
          %v3446 = vadd.f32 %v2408, %v3430
          %v3447 = vadd.f32 %v2411, %v3431
          %v3448 = vadd.f32 %v2413, %v3432
          %v3449 = vtanh.pop %v3433
          %v3450 = vtanh.pop %v3434
          %v3451 = vtanh.pop %v3435
          %v3452 = vtanh.pop %v3436
          %v3453 = vtanh.pop %v3437
          %v3454 = vtanh.pop %v3438
          %v3455 = vtanh.pop %v3439
          %v3456 = vtanh.pop %v3440
          %v3457 = vtanh.pop %v3441
          %v3458 = vtanh.pop %v3442
          %v3459 = vtanh.pop %v3443
          %v3460 = vtanh.pop %v3444
          %v3461 = vtanh.pop %v3445
          %v3462 = vtanh.pop %v3446
          %v3463 = vtanh.pop %v3447
          %v3464 = vtanh.pop %v3448
          %v3465 = vsub.f32 1.0, %v3191
          %v3466 = vsub.f32 1.0, %v3206
          %v3467 = vsub.f32 1.0, %v3221
          %v3468 = vsub.f32 1.0, %v3236
          %v3469 = vsub.f32 1.0, %v3251
          %v3470 = vsub.f32 1.0, %v3266
          %v3471 = vsub.f32 1.0, %v3281
          %v3472 = vsub.f32 1.0, %v3296
          %v3473 = vsub.f32 1.0, %v3311
          %v3474 = vsub.f32 1.0, %v3326
          %v3475 = vsub.f32 1.0, %v3341
          %v3476 = vsub.f32 1.0, %v3356
          %v3477 = vsub.f32 1.0, %v3371
          %v3478 = vsub.f32 1.0, %v3386
          %v3479 = vsub.f32 1.0, %v3401
          %v3480 = vsub.f32 1.0, %v3416
          %v3481 = vmul.f32 %v3465, %v3449
          %v3482 = vmul.f32 %v3466, %v3450
          %v3483 = vmul.f32 %v3467, %v3451
          %v3484 = vmul.f32 %v3468, %v3452
          %v3485 = vmul.f32 %v3469, %v3453
          %v3486 = vmul.f32 %v3470, %v3454
          %v3487 = vmul.f32 %v3471, %v3455
          %v3488 = vmul.f32 %v3472, %v3456
          %v3489 = vmul.f32 %v3473, %v3457
          %v3490 = vmul.f32 %v3474, %v3458
          %v3491 = vmul.f32 %v3475, %v3459
          %v3492 = vmul.f32 %v3476, %v3460
          %v3493 = vmul.f32 %v3477, %v3461
          %v3494 = vmul.f32 %v3478, %v3462
          %v3495 = vmul.f32 %v3479, %v3463
          %v3496 = vmul.f32 %v3480, %v3464
          %v3497 = vmul.f32 %v3191, 0.0
          %v3498 = vmul.f32 %v3206, 0.0
          %v3499 = vmul.f32 %v3221, 0.0
          %v3500 = vmul.f32 %v3236, 0.0
          %v3501 = vmul.f32 %v3251, 0.0
          %v3502 = vmul.f32 %v3266, 0.0
          %v3503 = vmul.f32 %v3281, 0.0
          %v3504 = vmul.f32 %v3296, 0.0
          %v3505 = vmul.f32 %v3311, 0.0
          %v3506 = vmul.f32 %v3326, 0.0
          %v3507 = vmul.f32 %v3341, 0.0
          %v3508 = vmul.f32 %v3356, 0.0
          %v3509 = vmul.f32 %v3371, 0.0
          %v3510 = vmul.f32 %v3386, 0.0
          %v3511 = vmul.f32 %v3401, 0.0
          %v3512 = vmul.f32 %v3416, 0.0
          %v3513 = vadd.f32 %v3481, %v3497
          %v3514 = vadd.f32 %v3482, %v3498
          %v3515 = vadd.f32 %v3483, %v3499
          %v3516 = vadd.f32 %v3484, %v3500
          %v3517 = vadd.f32 %v3485, %v3501
          %v3518 = vadd.f32 %v3486, %v3502
          %v3519 = vadd.f32 %v3487, %v3503
          %v3520 = vadd.f32 %v3488, %v3504
          %v3521 = vadd.f32 %v3489, %v3505
          %v3522 = vadd.f32 %v3490, %v3506
          %v3523 = vadd.f32 %v3491, %v3507
          %v3524 = vadd.f32 %v3492, %v3508
          %v3525 = vadd.f32 %v3493, %v3509
          %v3526 = vadd.f32 %v3494, %v3510
          %v3527 = vadd.f32 %v3495, %v3511
          %v3528 = vadd.f32 %v3496, %v3512
          %v3529 = vadd.f32 %v3513, 0.0
          %v3530 = vadd.f32 %v3514, 0.0
          %v3531 = vadd.f32 %v3515, 0.0
          %v3532 = vadd.f32 %v3516, 0.0
          %v3533 = vadd.f32 %v3517, 0.0
          %v3534 = vadd.f32 %v3518, 0.0
          %v3535 = vadd.f32 %v3519, 0.0
          %v3536 = vadd.f32 %v3520, 0.0
          %v3537 = vadd.f32 %v3521, 0.0
          %v3538 = vadd.f32 %v3522, 0.0
          %v3539 = vadd.f32 %v3523, 0.0
          %v3540 = vadd.f32 %v3524, 0.0
          %v3541 = vadd.f32 %v3525, 0.0
          %v3542 = vadd.f32 %v3526, 0.0
          %v3543 = vadd.f32 %v3527, 0.0
          %v3544 = vadd.f32 %v3528, 0.0
          %v3545 = vpack.c.bf16 %v3514, %v3513
          %v3546 = vpack.c.bf16 %v3516, %v3515
          %v3547 = vpack.c.bf16 %v3518, %v3517
          %v3548 = vpack.c.bf16 %v3520, %v3519
          %v3549 = vpack.c.bf16 %v3522, %v3521
          %v3550 = vpack.c.bf16 %v3524, %v3523
          %v3551 = vpack.c.bf16 %v3526, %v3525
          %v3552 = vpack.c.bf16 %v3528, %v3527
          %3553 = vmatpush.bf16.msra.mxu0 %v2603
          %3554 = vmatpush.bf16.msra.mxu0 %v2600
          %3555 = vmatpush.bf16.msra.mxu0 %v2597
          %3556 = vmatpush.bf16.msra.mxu0 %v2594
          %3557 = vmatpush.bf16.msra.mxu0 %v2591
          %3558 = vmatpush.bf16.msra.mxu0 %v2588
          %3559 = vmatpush.bf16.msra.mxu0 %v2585
          %3560 = vmatpush.bf16.msra.mxu0 %v2582
          %3561 = vmatmul.bf16.gmra.mxu0 %v3545
          %v3562 = vpop.f32.mrf.mxu0
          %v3563 = vadd.f32 %v2496, %v3562
          %v3564 = vpop.f32.mrf.mxu0
          %v3565 = vadd.f32 %v2496, %v3564
          %3566 = vmatmul.bf16.gmra.mxu0 %v3546
          %v3567 = vpop.f32.mrf.mxu0
          %v3568 = vadd.f32 %v2496, %v3567
          %v3569 = vpop.f32.mrf.mxu0
          %v3570 = vadd.f32 %v2496, %v3569
          %3571 = vmatmul.bf16.gmra.mxu0 %v3547
          %v3572 = vpop.f32.mrf.mxu0
          %v3573 = vadd.f32 %v2496, %v3572
          %v3574 = vpop.f32.mrf.mxu0
          %v3575 = vadd.f32 %v2496, %v3574
          %3576 = vmatmul.bf16.gmra.mxu0 %v3548
          %v3577 = vpop.f32.mrf.mxu0
          %v3578 = vadd.f32 %v2496, %v3577
          %v3579 = vpop.f32.mrf.mxu0
          %v3580 = vadd.f32 %v2496, %v3579
          %3581 = vmatmul.bf16.gmra.mxu0 %v3549
          %v3582 = vpop.f32.mrf.mxu0
          %v3583 = vadd.f32 %v2496, %v3582
          %v3584 = vpop.f32.mrf.mxu0
          %v3585 = vadd.f32 %v2496, %v3584
          %3586 = vmatmul.bf16.gmra.mxu0 %v3550
          %v3587 = vpop.f32.mrf.mxu0
          %v3588 = vadd.f32 %v2496, %v3587
          %v3589 = vpop.f32.mrf.mxu0
          %v3590 = vadd.f32 %v2496, %v3589
          %3591 = vmatmul.bf16.gmra.mxu0 %v3551
          %v3592 = vpop.f32.mrf.mxu0
          %v3593 = vadd.f32 %v2496, %v3592
          %v3594 = vpop.f32.mrf.mxu0
          %v3595 = vadd.f32 %v2496, %v3594
          %3596 = vmatmul.bf16.gmra.mxu0 %v3552
          %v3597 = vpop.f32.mrf.mxu0
          %v3598 = vadd.f32 %v2496, %v3597
          %v3599 = vpop.f32.mrf.mxu0
          %v3600 = vadd.f32 %v2496, %v3599
          %3601 = vdwg.mxu0
          %3602 = vmatpush.bf16.msra.mxu0 %v2604
          %3603 = vmatpush.bf16.msra.mxu0 %v2601
          %3604 = vmatpush.bf16.msra.mxu0 %v2598
          %3605 = vmatpush.bf16.msra.mxu0 %v2595
          %3606 = vmatpush.bf16.msra.mxu0 %v2592
          %3607 = vmatpush.bf16.msra.mxu0 %v2589
          %3608 = vmatpush.bf16.msra.mxu0 %v2586
          %3609 = vmatpush.bf16.msra.mxu0 %v2583
          %3610 = vmatmul.bf16.gmra.mxu0 %v3545
          %v3611 = vpop.f32.mrf.mxu0
          %v3612 = vadd.f32 %v2497, %v3611
          %v3613 = vpop.f32.mrf.mxu0
          %v3614 = vadd.f32 %v2497, %v3613
          %3615 = vmatmul.bf16.gmra.mxu0 %v3546
          %v3616 = vpop.f32.mrf.mxu0
          %v3617 = vadd.f32 %v2497, %v3616
          %v3618 = vpop.f32.mrf.mxu0
          %v3619 = vadd.f32 %v2497, %v3618
          %3620 = vmatmul.bf16.gmra.mxu0 %v3547
          %v3621 = vpop.f32.mrf.mxu0
          %v3622 = vadd.f32 %v2497, %v3621
          %v3623 = vpop.f32.mrf.mxu0
          %v3624 = vadd.f32 %v2497, %v3623
          %3625 = vmatmul.bf16.gmra.mxu0 %v3548
          %v3626 = vpop.f32.mrf.mxu0
          %v3627 = vadd.f32 %v2497, %v3626
          %v3628 = vpop.f32.mrf.mxu0
          %v3629 = vadd.f32 %v2497, %v3628
          %3630 = vmatmul.bf16.gmra.mxu0 %v3549
          %v3631 = vpop.f32.mrf.mxu0
          %v3632 = vadd.f32 %v2497, %v3631
          %v3633 = vpop.f32.mrf.mxu0
          %v3634 = vadd.f32 %v2497, %v3633
          %3635 = vmatmul.bf16.gmra.mxu0 %v3550
          %v3636 = vpop.f32.mrf.mxu0
          %v3637 = vadd.f32 %v2497, %v3636
          %v3638 = vpop.f32.mrf.mxu0
          %v3639 = vadd.f32 %v2497, %v3638
          %3640 = vmatmul.bf16.gmra.mxu0 %v3551
          %v3641 = vpop.f32.mrf.mxu0
          %v3642 = vadd.f32 %v2497, %v3641
          %v3643 = vpop.f32.mrf.mxu0
          %v3644 = vadd.f32 %v2497, %v3643
          %3645 = vmatmul.bf16.gmra.mxu0 %v3552
          %v3646 = vpop.f32.mrf.mxu0
          %v3647 = vadd.f32 %v2497, %v3646
          %v3648 = vpop.f32.mrf.mxu0
          %v3649 = vadd.f32 %v2497, %v3648
          %3650 = vdwg.mxu0
          %3651 = vmatpush.bf16.msra.mxu0 %v2605
          %3652 = vmatpush.bf16.msra.mxu0 %v2602
          %3653 = vmatpush.bf16.msra.mxu0 %v2599
          %3654 = vmatpush.bf16.msra.mxu0 %v2596
          %3655 = vmatpush.bf16.msra.mxu0 %v2593
          %3656 = vmatpush.bf16.msra.mxu0 %v2590
          %3657 = vmatpush.bf16.msra.mxu0 %v2587
          %3658 = vmatpush.bf16.msra.mxu0 %v2584
          %3659 = vmatmul.bf16.gmra.mxu0 %v3545
          %v3660 = vpop.f32.mrf.mxu0
          %v3661 = vadd.f32 %v2498, %v3660
          %v3662 = vpop.f32.mrf.mxu0
          %v3663 = vadd.f32 %v2498, %v3662
          %3664 = vmatmul.bf16.gmra.mxu0 %v3546
          %v3665 = vpop.f32.mrf.mxu0
          %v3666 = vadd.f32 %v2498, %v3665
          %v3667 = vpop.f32.mrf.mxu0
          %v3668 = vadd.f32 %v2498, %v3667
          %3669 = vmatmul.bf16.gmra.mxu0 %v3547
          %v3670 = vpop.f32.mrf.mxu0
          %v3671 = vadd.f32 %v2498, %v3670
          %v3672 = vpop.f32.mrf.mxu0
          %v3673 = vadd.f32 %v2498, %v3672
          %3674 = vmatmul.bf16.gmra.mxu0 %v3548
          %v3675 = vpop.f32.mrf.mxu0
          %v3676 = vadd.f32 %v2498, %v3675
          %v3677 = vpop.f32.mrf.mxu0
          %v3678 = vadd.f32 %v2498, %v3677
          %3679 = vmatmul.bf16.gmra.mxu0 %v3549
          %v3680 = vpop.f32.mrf.mxu0
          %v3681 = vadd.f32 %v2498, %v3680
          %v3682 = vpop.f32.mrf.mxu0
          %v3683 = vadd.f32 %v2498, %v3682
          %3684 = vmatmul.bf16.gmra.mxu0 %v3550
          %v3685 = vpop.f32.mrf.mxu0
          %v3686 = vadd.f32 %v2498, %v3685
          %v3687 = vpop.f32.mrf.mxu0
          %v3688 = vadd.f32 %v2498, %v3687
          %3689 = vmatmul.bf16.gmra.mxu0 %v3551
          %v3690 = vpop.f32.mrf.mxu0
          %v3691 = vadd.f32 %v2498, %v3690
          %v3692 = vpop.f32.mrf.mxu0
          %v3693 = vadd.f32 %v2498, %v3692
          %3694 = vmatmul.bf16.gmra.mxu0 %v3552
          %v3695 = vpop.f32.mrf.mxu0
          %v3696 = vadd.f32 %v2498, %v3695
          %v3697 = vpop.f32.mrf.mxu0
          %v3698 = vadd.f32 %v2498, %v3697
          %3699 = vdwg.mxu0
          %v3700 = vadd.f32 %v2158, %v3563
          %v3701 = vadd.f32 %v2160, %v3565
          %v3702 = vadd.f32 %v2163, %v3568
          %v3703 = vadd.f32 %v2165, %v3570
          %v3704 = vadd.f32 %v2168, %v3573
          %v3705 = vadd.f32 %v2170, %v3575
          %v3706 = vadd.f32 %v2173, %v3578
          %v3707 = vadd.f32 %v2175, %v3580
          %v3708 = vadd.f32 %v2178, %v3583
          %v3709 = vadd.f32 %v2180, %v3585
          %v3710 = vadd.f32 %v2183, %v3588
          %v3711 = vadd.f32 %v2185, %v3590
          %v3712 = vadd.f32 %v2188, %v3593
          %v3713 = vadd.f32 %v2190, %v3595
          %v3714 = vadd.f32 %v2193, %v3598
          %v3715 = vadd.f32 %v2195, %v3600
          %v3716 = vxor.u32 %v3700, 2147483648
          %v3717 = vxor.u32 %v3701, 2147483648
          %v3718 = vxor.u32 %v3702, 2147483648
          %v3719 = vxor.u32 %v3703, 2147483648
          %v3720 = vxor.u32 %v3704, 2147483648
          %v3721 = vxor.u32 %v3705, 2147483648
          %v3722 = vxor.u32 %v3706, 2147483648
          %v3723 = vxor.u32 %v3707, 2147483648
          %v3724 = vxor.u32 %v3708, 2147483648
          %v3725 = vxor.u32 %v3709, 2147483648
          %v3726 = vxor.u32 %v3710, 2147483648
          %v3727 = vxor.u32 %v3711, 2147483648
          %v3728 = vxor.u32 %v3712, 2147483648
          %v3729 = vxor.u32 %v3713, 2147483648
          %v3730 = vxor.u32 %v3714, 2147483648
          %v3731 = vxor.u32 %v3715, 2147483648
          %v3732 = vmul.f32 %v3716, 1.442695
          %v3733 = vpow.pop %v3732
          %v3734 = vmul.f32 %v3717, 1.442695
          %v3735 = vpow.pop %v3734
          %v3736 = vmul.f32 %v3718, 1.442695
          %v3737 = vpow.pop %v3736
          %v3738 = vmul.f32 %v3719, 1.442695
          %v3739 = vpow.pop %v3738
          %v3740 = vmul.f32 %v3720, 1.442695
          %v3741 = vpow.pop %v3740
          %v3742 = vmul.f32 %v3721, 1.442695
          %v3743 = vpow.pop %v3742
          %v3744 = vmul.f32 %v3722, 1.442695
          %v3745 = vpow.pop %v3744
          %v3746 = vmul.f32 %v3723, 1.442695
          %v3747 = vpow.pop %v3746
          %v3748 = vmul.f32 %v3724, 1.442695
          %v3749 = vpow.pop %v3748
          %v3750 = vmul.f32 %v3725, 1.442695
          %v3751 = vpow.pop %v3750
          %v3752 = vmul.f32 %v3726, 1.442695
          %v3753 = vpow.pop %v3752
          %v3754 = vmul.f32 %v3727, 1.442695
          %v3755 = vpow.pop %v3754
          %v3756 = vmul.f32 %v3728, 1.442695
          %v3757 = vpow.pop %v3756
          %v3758 = vmul.f32 %v3729, 1.442695
          %v3759 = vpow.pop %v3758
          %v3760 = vmul.f32 %v3730, 1.442695
          %v3761 = vpow.pop %v3760
          %v3762 = vmul.f32 %v3731, 1.442695
          %v3763 = vpow.pop %v3762
          %v3764 = vadd.f32 %v3733, 1.0
          %v3765 = vadd.f32 %v3735, 1.0
          %v3766 = vadd.f32 %v3737, 1.0
          %v3767 = vadd.f32 %v3739, 1.0
          %v3768 = vadd.f32 %v3741, 1.0
          %v3769 = vadd.f32 %v3743, 1.0
          %v3770 = vadd.f32 %v3745, 1.0
          %v3771 = vadd.f32 %v3747, 1.0
          %v3772 = vadd.f32 %v3749, 1.0
          %v3773 = vadd.f32 %v3751, 1.0
          %v3774 = vadd.f32 %v3753, 1.0
          %v3775 = vadd.f32 %v3755, 1.0
          %v3776 = vadd.f32 %v3757, 1.0
          %v3777 = vadd.f32 %v3759, 1.0
          %v3778 = vadd.f32 %v3761, 1.0
          %v3779 = vadd.f32 %v3763, 1.0
          %v3780 = vrcp.pop %v3764
          %v3781 = vmul.f32 %v3764, %v3780
          %v3782 = vsub.f32 1.0, %v3781
          %v3783 = vmul.f32 %v3780, %v3782
          %v3784 = vadd.f32 %v3780, %v3783
          %vm3785 = vweird.f32 %v3764
          %vm3786 = vweird.f32 %v3780
          %vm3787 = vmor %vm3785, %vm3786
          %v3788 = vsel %vm3787, %v3780, %v3784
          %v3789 = vand.u32 2147483647, %v3764
          %vm3790 = vcmp.eq.f32.partialorder %v3789, 8.507059e+37
          %v3791 = vand.u32 %v3764, 2147483648
          %v3792 = vor.u32 1.1754944e-38, %v3791
          %v3793 = vsel %vm3790, %v3792, %v3788
          %v3794 = vmul.f32 1.0, %v3793
          %v3795 = vrcp.pop %v3765
          %v3796 = vmul.f32 %v3765, %v3795
          %v3797 = vsub.f32 1.0, %v3796
          %v3798 = vmul.f32 %v3795, %v3797
          %v3799 = vadd.f32 %v3795, %v3798
          %vm3800 = vweird.f32 %v3765
          %vm3801 = vweird.f32 %v3795
          %vm3802 = vmor %vm3800, %vm3801
          %v3803 = vsel %vm3802, %v3795, %v3799
          %v3804 = vand.u32 2147483647, %v3765
          %vm3805 = vcmp.eq.f32.partialorder %v3804, 8.507059e+37
          %v3806 = vand.u32 %v3765, 2147483648
          %v3807 = vor.u32 1.1754944e-38, %v3806
          %v3808 = vsel %vm3805, %v3807, %v3803
          %v3809 = vmul.f32 1.0, %v3808
          %v3810 = vrcp.pop %v3766
          %v3811 = vmul.f32 %v3766, %v3810
          %v3812 = vsub.f32 1.0, %v3811
          %v3813 = vmul.f32 %v3810, %v3812
          %v3814 = vadd.f32 %v3810, %v3813
          %vm3815 = vweird.f32 %v3766
          %vm3816 = vweird.f32 %v3810
          %vm3817 = vmor %vm3815, %vm3816
          %v3818 = vsel %vm3817, %v3810, %v3814
          %v3819 = vand.u32 2147483647, %v3766
          %vm3820 = vcmp.eq.f32.partialorder %v3819, 8.507059e+37
          %v3821 = vand.u32 %v3766, 2147483648
          %v3822 = vor.u32 1.1754944e-38, %v3821
          %v3823 = vsel %vm3820, %v3822, %v3818
          %v3824 = vmul.f32 1.0, %v3823
          %v3825 = vrcp.pop %v3767
          %v3826 = vmul.f32 %v3767, %v3825
          %v3827 = vsub.f32 1.0, %v3826
          %v3828 = vmul.f32 %v3825, %v3827
          %v3829 = vadd.f32 %v3825, %v3828
          %vm3830 = vweird.f32 %v3767
          %vm3831 = vweird.f32 %v3825
          %vm3832 = vmor %vm3830, %vm3831
          %v3833 = vsel %vm3832, %v3825, %v3829
          %v3834 = vand.u32 2147483647, %v3767
          %vm3835 = vcmp.eq.f32.partialorder %v3834, 8.507059e+37
          %v3836 = vand.u32 %v3767, 2147483648
          %v3837 = vor.u32 1.1754944e-38, %v3836
          %v3838 = vsel %vm3835, %v3837, %v3833
          %v3839 = vmul.f32 1.0, %v3838
          %v3840 = vrcp.pop %v3768
          %v3841 = vmul.f32 %v3768, %v3840
          %v3842 = vsub.f32 1.0, %v3841
          %v3843 = vmul.f32 %v3840, %v3842
          %v3844 = vadd.f32 %v3840, %v3843
          %vm3845 = vweird.f32 %v3768
          %vm3846 = vweird.f32 %v3840
          %vm3847 = vmor %vm3845, %vm3846
          %v3848 = vsel %vm3847, %v3840, %v3844
          %v3849 = vand.u32 2147483647, %v3768
          %vm3850 = vcmp.eq.f32.partialorder %v3849, 8.507059e+37
          %v3851 = vand.u32 %v3768, 2147483648
          %v3852 = vor.u32 1.1754944e-38, %v3851
          %v3853 = vsel %vm3850, %v3852, %v3848
          %v3854 = vmul.f32 1.0, %v3853
          %v3855 = vrcp.pop %v3769
          %v3856 = vmul.f32 %v3769, %v3855
          %v3857 = vsub.f32 1.0, %v3856
          %v3858 = vmul.f32 %v3855, %v3857
          %v3859 = vadd.f32 %v3855, %v3858
          %vm3860 = vweird.f32 %v3769
          %vm3861 = vweird.f32 %v3855
          %vm3862 = vmor %vm3860, %vm3861
          %v3863 = vsel %vm3862, %v3855, %v3859
          %v3864 = vand.u32 2147483647, %v3769
          %vm3865 = vcmp.eq.f32.partialorder %v3864, 8.507059e+37
          %v3866 = vand.u32 %v3769, 2147483648
          %v3867 = vor.u32 1.1754944e-38, %v3866
          %v3868 = vsel %vm3865, %v3867, %v3863
          %v3869 = vmul.f32 1.0, %v3868
          %v3870 = vrcp.pop %v3770
          %v3871 = vmul.f32 %v3770, %v3870
          %v3872 = vsub.f32 1.0, %v3871
          %v3873 = vmul.f32 %v3870, %v3872
          %v3874 = vadd.f32 %v3870, %v3873
          %vm3875 = vweird.f32 %v3770
          %vm3876 = vweird.f32 %v3870
          %vm3877 = vmor %vm3875, %vm3876
          %v3878 = vsel %vm3877, %v3870, %v3874
          %v3879 = vand.u32 2147483647, %v3770
          %vm3880 = vcmp.eq.f32.partialorder %v3879, 8.507059e+37
          %v3881 = vand.u32 %v3770, 2147483648
          %v3882 = vor.u32 1.1754944e-38, %v3881
          %v3883 = vsel %vm3880, %v3882, %v3878
          %v3884 = vmul.f32 1.0, %v3883
          %v3885 = vrcp.pop %v3771
          %v3886 = vmul.f32 %v3771, %v3885
          %v3887 = vsub.f32 1.0, %v3886
          %v3888 = vmul.f32 %v3885, %v3887
          %v3889 = vadd.f32 %v3885, %v3888
          %vm3890 = vweird.f32 %v3771
          %vm3891 = vweird.f32 %v3885
          %vm3892 = vmor %vm3890, %vm3891
          %v3893 = vsel %vm3892, %v3885, %v3889
          %v3894 = vand.u32 2147483647, %v3771
          %vm3895 = vcmp.eq.f32.partialorder %v3894, 8.507059e+37
          %v3896 = vand.u32 %v3771, 2147483648
          %v3897 = vor.u32 1.1754944e-38, %v3896
          %v3898 = vsel %vm3895, %v3897, %v3893
          %v3899 = vmul.f32 1.0, %v3898
          %v3900 = vrcp.pop %v3772
          %v3901 = vmul.f32 %v3772, %v3900
          %v3902 = vsub.f32 1.0, %v3901
          %v3903 = vmul.f32 %v3900, %v3902
          %v3904 = vadd.f32 %v3900, %v3903
          %vm3905 = vweird.f32 %v3772
          %vm3906 = vweird.f32 %v3900
          %vm3907 = vmor %vm3905, %vm3906
          %v3908 = vsel %vm3907, %v3900, %v3904
          %v3909 = vand.u32 2147483647, %v3772
          %vm3910 = vcmp.eq.f32.partialorder %v3909, 8.507059e+37
          %v3911 = vand.u32 %v3772, 2147483648
          %v3912 = vor.u32 1.1754944e-38, %v3911
          %v3913 = vsel %vm3910, %v3912, %v3908
          %v3914 = vmul.f32 1.0, %v3913
          %v3915 = vrcp.pop %v3773
          %v3916 = vmul.f32 %v3773, %v3915
          %v3917 = vsub.f32 1.0, %v3916
          %v3918 = vmul.f32 %v3915, %v3917
          %v3919 = vadd.f32 %v3915, %v3918
          %vm3920 = vweird.f32 %v3773
          %vm3921 = vweird.f32 %v3915
          %vm3922 = vmor %vm3920, %vm3921
          %v3923 = vsel %vm3922, %v3915, %v3919
          %v3924 = vand.u32 2147483647, %v3773
          %vm3925 = vcmp.eq.f32.partialorder %v3924, 8.507059e+37
          %v3926 = vand.u32 %v3773, 2147483648
          %v3927 = vor.u32 1.1754944e-38, %v3926
          %v3928 = vsel %vm3925, %v3927, %v3923
          %v3929 = vmul.f32 1.0, %v3928
          %v3930 = vrcp.pop %v3774
          %v3931 = vmul.f32 %v3774, %v3930
          %v3932 = vsub.f32 1.0, %v3931
          %v3933 = vmul.f32 %v3930, %v3932
          %v3934 = vadd.f32 %v3930, %v3933
          %vm3935 = vweird.f32 %v3774
          %vm3936 = vweird.f32 %v3930
          %vm3937 = vmor %vm3935, %vm3936
          %v3938 = vsel %vm3937, %v3930, %v3934
          %v3939 = vand.u32 2147483647, %v3774
          %vm3940 = vcmp.eq.f32.partialorder %v3939, 8.507059e+37
          %v3941 = vand.u32 %v3774, 2147483648
          %v3942 = vor.u32 1.1754944e-38, %v3941
          %v3943 = vsel %vm3940, %v3942, %v3938
          %v3944 = vmul.f32 1.0, %v3943
          %v3945 = vrcp.pop %v3775
          %v3946 = vmul.f32 %v3775, %v3945
          %v3947 = vsub.f32 1.0, %v3946
          %v3948 = vmul.f32 %v3945, %v3947
          %v3949 = vadd.f32 %v3945, %v3948
          %vm3950 = vweird.f32 %v3775
          %vm3951 = vweird.f32 %v3945
          %vm3952 = vmor %vm3950, %vm3951
          %v3953 = vsel %vm3952, %v3945, %v3949
          %v3954 = vand.u32 2147483647, %v3775
          %vm3955 = vcmp.eq.f32.partialorder %v3954, 8.507059e+37
          %v3956 = vand.u32 %v3775, 2147483648
          %v3957 = vor.u32 1.1754944e-38, %v3956
          %v3958 = vsel %vm3955, %v3957, %v3953
          %v3959 = vmul.f32 1.0, %v3958
          %v3960 = vrcp.pop %v3776
          %v3961 = vmul.f32 %v3776, %v3960
          %v3962 = vsub.f32 1.0, %v3961
          %v3963 = vmul.f32 %v3960, %v3962
          %v3964 = vadd.f32 %v3960, %v3963
          %vm3965 = vweird.f32 %v3776
          %vm3966 = vweird.f32 %v3960
          %vm3967 = vmor %vm3965, %vm3966
          %v3968 = vsel %vm3967, %v3960, %v3964
          %v3969 = vand.u32 2147483647, %v3776
          %vm3970 = vcmp.eq.f32.partialorder %v3969, 8.507059e+37
          %v3971 = vand.u32 %v3776, 2147483648
          %v3972 = vor.u32 1.1754944e-38, %v3971
          %v3973 = vsel %vm3970, %v3972, %v3968
          %v3974 = vmul.f32 1.0, %v3973
          %v3975 = vrcp.pop %v3777
          %v3976 = vmul.f32 %v3777, %v3975
          %v3977 = vsub.f32 1.0, %v3976
          %v3978 = vmul.f32 %v3975, %v3977
          %v3979 = vadd.f32 %v3975, %v3978
          %vm3980 = vweird.f32 %v3777
          %vm3981 = vweird.f32 %v3975
          %vm3982 = vmor %vm3980, %vm3981
          %v3983 = vsel %vm3982, %v3975, %v3979
          %v3984 = vand.u32 2147483647, %v3777
          %vm3985 = vcmp.eq.f32.partialorder %v3984, 8.507059e+37
          %v3986 = vand.u32 %v3777, 2147483648
          %v3987 = vor.u32 1.1754944e-38, %v3986
          %v3988 = vsel %vm3985, %v3987, %v3983
          %v3989 = vmul.f32 1.0, %v3988
          %v3990 = vrcp.pop %v3778
          %v3991 = vmul.f32 %v3778, %v3990
          %v3992 = vsub.f32 1.0, %v3991
          %v3993 = vmul.f32 %v3990, %v3992
          %v3994 = vadd.f32 %v3990, %v3993
          %vm3995 = vweird.f32 %v3778
          %vm3996 = vweird.f32 %v3990
          %vm3997 = vmor %vm3995, %vm3996
          %v3998 = vsel %vm3997, %v3990, %v3994
          %v3999 = vand.u32 2147483647, %v3778
          %vm4000 = vcmp.eq.f32.partialorder %v3999, 8.507059e+37
          %v4001 = vand.u32 %v3778, 2147483648
          %v4002 = vor.u32 1.1754944e-38, %v4001
          %v4003 = vsel %vm4000, %v4002, %v3998
          %v4004 = vmul.f32 1.0, %v4003
          %v4005 = vrcp.pop %v3779
          %v4006 = vmul.f32 %v3779, %v4005
          %v4007 = vsub.f32 1.0, %v4006
          %v4008 = vmul.f32 %v4005, %v4007
          %v4009 = vadd.f32 %v4005, %v4008
          %vm4010 = vweird.f32 %v3779
          %vm4011 = vweird.f32 %v4005
          %vm4012 = vmor %vm4010, %vm4011
          %v4013 = vsel %vm4012, %v4005, %v4009
          %v4014 = vand.u32 2147483647, %v3779
          %vm4015 = vcmp.eq.f32.partialorder %v4014, 8.507059e+37
          %v4016 = vand.u32 %v3779, 2147483648
          %v4017 = vor.u32 1.1754944e-38, %v4016
          %v4018 = vsel %vm4015, %v4017, %v4013
          %v4019 = vmul.f32 1.0, %v4018
          %v4020 = vadd.f32 %v2287, %v3612
          %v4021 = vadd.f32 %v2289, %v3614
          %v4022 = vadd.f32 %v2292, %v3617
          %v4023 = vadd.f32 %v2294, %v3619
          %v4024 = vadd.f32 %v2297, %v3622
          %v4025 = vadd.f32 %v2299, %v3624
          %v4026 = vadd.f32 %v2302, %v3627
          %v4027 = vadd.f32 %v2304, %v3629
          %v4028 = vadd.f32 %v2307, %v3632
          %v4029 = vadd.f32 %v2309, %v3634
          %v4030 = vadd.f32 %v2312, %v3637
          %v4031 = vadd.f32 %v2314, %v3639
          %v4032 = vadd.f32 %v2317, %v3642
          %v4033 = vadd.f32 %v2319, %v3644
          %v4034 = vadd.f32 %v2322, %v3647
          %v4035 = vadd.f32 %v2324, %v3649
          %v4036 = vxor.u32 %v4020, 2147483648
          %v4037 = vxor.u32 %v4021, 2147483648
          %v4038 = vxor.u32 %v4022, 2147483648
          %v4039 = vxor.u32 %v4023, 2147483648
          %v4040 = vxor.u32 %v4024, 2147483648
          %v4041 = vxor.u32 %v4025, 2147483648
          %v4042 = vxor.u32 %v4026, 2147483648
          %v4043 = vxor.u32 %v4027, 2147483648
          %v4044 = vxor.u32 %v4028, 2147483648
          %v4045 = vxor.u32 %v4029, 2147483648
          %v4046 = vxor.u32 %v4030, 2147483648
          %v4047 = vxor.u32 %v4031, 2147483648
          %v4048 = vxor.u32 %v4032, 2147483648
          %v4049 = vxor.u32 %v4033, 2147483648
          %v4050 = vxor.u32 %v4034, 2147483648
          %v4051 = vxor.u32 %v4035, 2147483648
          %v4052 = vmul.f32 %v4036, 1.442695
          %v4053 = vpow.pop %v4052
          %v4054 = vmul.f32 %v4037, 1.442695
          %v4055 = vpow.pop %v4054
          %v4056 = vmul.f32 %v4038, 1.442695
          %v4057 = vpow.pop %v4056
          %v4058 = vmul.f32 %v4039, 1.442695
          %v4059 = vpow.pop %v4058
          %v4060 = vmul.f32 %v4040, 1.442695
          %v4061 = vpow.pop %v4060
          %v4062 = vmul.f32 %v4041, 1.442695
          %v4063 = vpow.pop %v4062
          %v4064 = vmul.f32 %v4042, 1.442695
          %v4065 = vpow.pop %v4064
          %v4066 = vmul.f32 %v4043, 1.442695
          %v4067 = vpow.pop %v4066
          %v4068 = vmul.f32 %v4044, 1.442695
          %v4069 = vpow.pop %v4068
          %v4070 = vmul.f32 %v4045, 1.442695
          %v4071 = vpow.pop %v4070
          %v4072 = vmul.f32 %v4046, 1.442695
          %v4073 = vpow.pop %v4072
          %v4074 = vmul.f32 %v4047, 1.442695
          %v4075 = vpow.pop %v4074
          %v4076 = vmul.f32 %v4048, 1.442695
          %v4077 = vpow.pop %v4076
          %v4078 = vmul.f32 %v4049, 1.442695
          %v4079 = vpow.pop %v4078
          %v4080 = vmul.f32 %v4050, 1.442695
          %v4081 = vpow.pop %v4080
          %v4082 = vmul.f32 %v4051, 1.442695
          %v4083 = vpow.pop %v4082
          %v4084 = vadd.f32 %v4053, 1.0
          %v4085 = vadd.f32 %v4055, 1.0
          %v4086 = vadd.f32 %v4057, 1.0
          %v4087 = vadd.f32 %v4059, 1.0
          %v4088 = vadd.f32 %v4061, 1.0
          %v4089 = vadd.f32 %v4063, 1.0
          %v4090 = vadd.f32 %v4065, 1.0
          %v4091 = vadd.f32 %v4067, 1.0
          %v4092 = vadd.f32 %v4069, 1.0
          %v4093 = vadd.f32 %v4071, 1.0
          %v4094 = vadd.f32 %v4073, 1.0
          %v4095 = vadd.f32 %v4075, 1.0
          %v4096 = vadd.f32 %v4077, 1.0
          %v4097 = vadd.f32 %v4079, 1.0
          %v4098 = vadd.f32 %v4081, 1.0
          %v4099 = vadd.f32 %v4083, 1.0
          %v4100 = vrcp.pop %v4084
          %v4101 = vmul.f32 %v4084, %v4100
          %v4102 = vsub.f32 1.0, %v4101
          %v4103 = vmul.f32 %v4100, %v4102
          %v4104 = vadd.f32 %v4100, %v4103
          %vm4105 = vweird.f32 %v4084
          %vm4106 = vweird.f32 %v4100
          %vm4107 = vmor %vm4105, %vm4106
          %v4108 = vsel %vm4107, %v4100, %v4104
          %v4109 = vand.u32 2147483647, %v4084
          %vm4110 = vcmp.eq.f32.partialorder %v4109, 8.507059e+37
          %v4111 = vand.u32 %v4084, 2147483648
          %v4112 = vor.u32 1.1754944e-38, %v4111
          %v4113 = vsel %vm4110, %v4112, %v4108
          %v4114 = vmul.f32 1.0, %v4113
          %v4115 = vrcp.pop %v4085
          %v4116 = vmul.f32 %v4085, %v4115
          %v4117 = vsub.f32 1.0, %v4116
          %v4118 = vmul.f32 %v4115, %v4117
          %v4119 = vadd.f32 %v4115, %v4118
          %vm4120 = vweird.f32 %v4085
          %vm4121 = vweird.f32 %v4115
          %vm4122 = vmor %vm4120, %vm4121
          %v4123 = vsel %vm4122, %v4115, %v4119
          %v4124 = vand.u32 2147483647, %v4085
          %vm4125 = vcmp.eq.f32.partialorder %v4124, 8.507059e+37
          %v4126 = vand.u32 %v4085, 2147483648
          %v4127 = vor.u32 1.1754944e-38, %v4126
          %v4128 = vsel %vm4125, %v4127, %v4123
          %v4129 = vmul.f32 1.0, %v4128
          %v4130 = vrcp.pop %v4086
          %v4131 = vmul.f32 %v4086, %v4130
          %v4132 = vsub.f32 1.0, %v4131
          %v4133 = vmul.f32 %v4130, %v4132
          %v4134 = vadd.f32 %v4130, %v4133
          %vm4135 = vweird.f32 %v4086
          %vm4136 = vweird.f32 %v4130
          %vm4137 = vmor %vm4135, %vm4136
          %v4138 = vsel %vm4137, %v4130, %v4134
          %v4139 = vand.u32 2147483647, %v4086
          %vm4140 = vcmp.eq.f32.partialorder %v4139, 8.507059e+37
          %v4141 = vand.u32 %v4086, 2147483648
          %v4142 = vor.u32 1.1754944e-38, %v4141
          %v4143 = vsel %vm4140, %v4142, %v4138
          %v4144 = vmul.f32 1.0, %v4143
          %v4145 = vrcp.pop %v4087
          %v4146 = vmul.f32 %v4087, %v4145
          %v4147 = vsub.f32 1.0, %v4146
          %v4148 = vmul.f32 %v4145, %v4147
          %v4149 = vadd.f32 %v4145, %v4148
          %vm4150 = vweird.f32 %v4087
          %vm4151 = vweird.f32 %v4145
          %vm4152 = vmor %vm4150, %vm4151
          %v4153 = vsel %vm4152, %v4145, %v4149
          %v4154 = vand.u32 2147483647, %v4087
          %vm4155 = vcmp.eq.f32.partialorder %v4154, 8.507059e+37
          %v4156 = vand.u32 %v4087, 2147483648
          %v4157 = vor.u32 1.1754944e-38, %v4156
          %v4158 = vsel %vm4155, %v4157, %v4153
          %v4159 = vmul.f32 1.0, %v4158
          %v4160 = vrcp.pop %v4088
          %v4161 = vmul.f32 %v4088, %v4160
          %v4162 = vsub.f32 1.0, %v4161
          %v4163 = vmul.f32 %v4160, %v4162
          %v4164 = vadd.f32 %v4160, %v4163
          %vm4165 = vweird.f32 %v4088
          %vm4166 = vweird.f32 %v4160
          %vm4167 = vmor %vm4165, %vm4166
          %v4168 = vsel %vm4167, %v4160, %v4164
          %v4169 = vand.u32 2147483647, %v4088
          %vm4170 = vcmp.eq.f32.partialorder %v4169, 8.507059e+37
          %v4171 = vand.u32 %v4088, 2147483648
          %v4172 = vor.u32 1.1754944e-38, %v4171
          %v4173 = vsel %vm4170, %v4172, %v4168
          %v4174 = vmul.f32 1.0, %v4173
          %v4175 = vrcp.pop %v4089
          %v4176 = vmul.f32 %v4089, %v4175
          %v4177 = vsub.f32 1.0, %v4176
          %v4178 = vmul.f32 %v4175, %v4177
          %v4179 = vadd.f32 %v4175, %v4178
          %vm4180 = vweird.f32 %v4089
          %vm4181 = vweird.f32 %v4175
          %vm4182 = vmor %vm4180, %vm4181
          %v4183 = vsel %vm4182, %v4175, %v4179
          %v4184 = vand.u32 2147483647, %v4089
          %vm4185 = vcmp.eq.f32.partialorder %v4184, 8.507059e+37
          %v4186 = vand.u32 %v4089, 2147483648
          %v4187 = vor.u32 1.1754944e-38, %v4186
          %v4188 = vsel %vm4185, %v4187, %v4183
          %v4189 = vmul.f32 1.0, %v4188
          %v4190 = vrcp.pop %v4090
          %v4191 = vmul.f32 %v4090, %v4190
          %v4192 = vsub.f32 1.0, %v4191
          %v4193 = vmul.f32 %v4190, %v4192
          %v4194 = vadd.f32 %v4190, %v4193
          %vm4195 = vweird.f32 %v4090
          %vm4196 = vweird.f32 %v4190
          %vm4197 = vmor %vm4195, %vm4196
          %v4198 = vsel %vm4197, %v4190, %v4194
          %v4199 = vand.u32 2147483647, %v4090
          %vm4200 = vcmp.eq.f32.partialorder %v4199, 8.507059e+37
          %v4201 = vand.u32 %v4090, 2147483648
          %v4202 = vor.u32 1.1754944e-38, %v4201
          %v4203 = vsel %vm4200, %v4202, %v4198
          %v4204 = vmul.f32 1.0, %v4203
          %v4205 = vrcp.pop %v4091
          %v4206 = vmul.f32 %v4091, %v4205
          %v4207 = vsub.f32 1.0, %v4206
          %v4208 = vmul.f32 %v4205, %v4207
          %v4209 = vadd.f32 %v4205, %v4208
          %vm4210 = vweird.f32 %v4091
          %vm4211 = vweird.f32 %v4205
          %vm4212 = vmor %vm4210, %vm4211
          %v4213 = vsel %vm4212, %v4205, %v4209
          %v4214 = vand.u32 2147483647, %v4091
          %vm4215 = vcmp.eq.f32.partialorder %v4214, 8.507059e+37
          %v4216 = vand.u32 %v4091, 2147483648
          %v4217 = vor.u32 1.1754944e-38, %v4216
          %v4218 = vsel %vm4215, %v4217, %v4213
          %v4219 = vmul.f32 1.0, %v4218
          %v4220 = vrcp.pop %v4092
          %v4221 = vmul.f32 %v4092, %v4220
          %v4222 = vsub.f32 1.0, %v4221
          %v4223 = vmul.f32 %v4220, %v4222
          %v4224 = vadd.f32 %v4220, %v4223
          %vm4225 = vweird.f32 %v4092
          %vm4226 = vweird.f32 %v4220
          %vm4227 = vmor %vm4225, %vm4226
          %v4228 = vsel %vm4227, %v4220, %v4224
          %v4229 = vand.u32 2147483647, %v4092
          %vm4230 = vcmp.eq.f32.partialorder %v4229, 8.507059e+37
          %v4231 = vand.u32 %v4092, 2147483648
          %v4232 = vor.u32 1.1754944e-38, %v4231
          %v4233 = vsel %vm4230, %v4232, %v4228
          %v4234 = vmul.f32 1.0, %v4233
          %v4235 = vrcp.pop %v4093
          %v4236 = vmul.f32 %v4093, %v4235
          %v4237 = vsub.f32 1.0, %v4236
          %v4238 = vmul.f32 %v4235, %v4237
          %v4239 = vadd.f32 %v4235, %v4238
          %vm4240 = vweird.f32 %v4093
          %vm4241 = vweird.f32 %v4235
          %vm4242 = vmor %vm4240, %vm4241
          %v4243 = vsel %vm4242, %v4235, %v4239
          %v4244 = vand.u32 2147483647, %v4093
          %vm4245 = vcmp.eq.f32.partialorder %v4244, 8.507059e+37
          %v4246 = vand.u32 %v4093, 2147483648
          %v4247 = vor.u32 1.1754944e-38, %v4246
          %v4248 = vsel %vm4245, %v4247, %v4243
          %v4249 = vmul.f32 1.0, %v4248
          %v4250 = vrcp.pop %v4094
          %v4251 = vmul.f32 %v4094, %v4250
          %v4252 = vsub.f32 1.0, %v4251
          %v4253 = vmul.f32 %v4250, %v4252
          %v4254 = vadd.f32 %v4250, %v4253
          %vm4255 = vweird.f32 %v4094
          %vm4256 = vweird.f32 %v4250
          %vm4257 = vmor %vm4255, %vm4256
          %v4258 = vsel %vm4257, %v4250, %v4254
          %v4259 = vand.u32 2147483647, %v4094
          %vm4260 = vcmp.eq.f32.partialorder %v4259, 8.507059e+37
          %v4261 = vand.u32 %v4094, 2147483648
          %v4262 = vor.u32 1.1754944e-38, %v4261
          %v4263 = vsel %vm4260, %v4262, %v4258
          %v4264 = vmul.f32 1.0, %v4263
          %v4265 = vrcp.pop %v4095
          %v4266 = vmul.f32 %v4095, %v4265
          %v4267 = vsub.f32 1.0, %v4266
          %v4268 = vmul.f32 %v4265, %v4267
          %v4269 = vadd.f32 %v4265, %v4268
          %vm4270 = vweird.f32 %v4095
          %vm4271 = vweird.f32 %v4265
          %vm4272 = vmor %vm4270, %vm4271
          %v4273 = vsel %vm4272, %v4265, %v4269
          %v4274 = vand.u32 2147483647, %v4095
          %vm4275 = vcmp.eq.f32.partialorder %v4274, 8.507059e+37
          %v4276 = vand.u32 %v4095, 2147483648
          %v4277 = vor.u32 1.1754944e-38, %v4276
          %v4278 = vsel %vm4275, %v4277, %v4273
          %v4279 = vmul.f32 1.0, %v4278
          %v4280 = vrcp.pop %v4096
          %v4281 = vmul.f32 %v4096, %v4280
          %v4282 = vsub.f32 1.0, %v4281
          %v4283 = vmul.f32 %v4280, %v4282
          %v4284 = vadd.f32 %v4280, %v4283
          %vm4285 = vweird.f32 %v4096
          %vm4286 = vweird.f32 %v4280
          %vm4287 = vmor %vm4285, %vm4286
          %v4288 = vsel %vm4287, %v4280, %v4284
          %v4289 = vand.u32 2147483647, %v4096
          %vm4290 = vcmp.eq.f32.partialorder %v4289, 8.507059e+37
          %v4291 = vand.u32 %v4096, 2147483648
          %v4292 = vor.u32 1.1754944e-38, %v4291
          %v4293 = vsel %vm4290, %v4292, %v4288
          %v4294 = vmul.f32 1.0, %v4293
          %v4295 = vrcp.pop %v4097
          %v4296 = vmul.f32 %v4097, %v4295
          %v4297 = vsub.f32 1.0, %v4296
          %v4298 = vmul.f32 %v4295, %v4297
          %v4299 = vadd.f32 %v4295, %v4298
          %vm4300 = vweird.f32 %v4097
          %vm4301 = vweird.f32 %v4295
          %vm4302 = vmor %vm4300, %vm4301
          %v4303 = vsel %vm4302, %v4295, %v4299
          %v4304 = vand.u32 2147483647, %v4097
          %vm4305 = vcmp.eq.f32.partialorder %v4304, 8.507059e+37
          %v4306 = vand.u32 %v4097, 2147483648
          %v4307 = vor.u32 1.1754944e-38, %v4306
          %v4308 = vsel %vm4305, %v4307, %v4303
          %v4309 = vmul.f32 1.0, %v4308
          %v4310 = vrcp.pop %v4098
          %v4311 = vmul.f32 %v4098, %v4310
          %v4312 = vsub.f32 1.0, %v4311
          %v4313 = vmul.f32 %v4310, %v4312
          %v4314 = vadd.f32 %v4310, %v4313
          %vm4315 = vweird.f32 %v4098
          %vm4316 = vweird.f32 %v4310
          %vm4317 = vmor %vm4315, %vm4316
          %v4318 = vsel %vm4317, %v4310, %v4314
          %v4319 = vand.u32 2147483647, %v4098
          %vm4320 = vcmp.eq.f32.partialorder %v4319, 8.507059e+37
          %v4321 = vand.u32 %v4098, 2147483648
          %v4322 = vor.u32 1.1754944e-38, %v4321
          %v4323 = vsel %vm4320, %v4322, %v4318
          %v4324 = vmul.f32 1.0, %v4323
          %v4325 = vrcp.pop %v4099
          %v4326 = vmul.f32 %v4099, %v4325
          %v4327 = vsub.f32 1.0, %v4326
          %v4328 = vmul.f32 %v4325, %v4327
          %v4329 = vadd.f32 %v4325, %v4328
          %vm4330 = vweird.f32 %v4099
          %vm4331 = vweird.f32 %v4325
          %vm4332 = vmor %vm4330, %vm4331
          %v4333 = vsel %vm4332, %v4325, %v4329
          %v4334 = vand.u32 2147483647, %v4099
          %vm4335 = vcmp.eq.f32.partialorder %v4334, 8.507059e+37
          %v4336 = vand.u32 %v4099, 2147483648
          %v4337 = vor.u32 1.1754944e-38, %v4336
          %v4338 = vsel %vm4335, %v4337, %v4333
          %v4339 = vmul.f32 1.0, %v4338
          %v4340 = vmul.f32 %v3794, %v3661
          %v4341 = vmul.f32 %v3809, %v3663
          %v4342 = vmul.f32 %v3824, %v3666
          %v4343 = vmul.f32 %v3839, %v3668
          %v4344 = vmul.f32 %v3854, %v3671
          %v4345 = vmul.f32 %v3869, %v3673
          %v4346 = vmul.f32 %v3884, %v3676
          %v4347 = vmul.f32 %v3899, %v3678
          %v4348 = vmul.f32 %v3914, %v3681
          %v4349 = vmul.f32 %v3929, %v3683
          %v4350 = vmul.f32 %v3944, %v3686
          %v4351 = vmul.f32 %v3959, %v3688
          %v4352 = vmul.f32 %v3974, %v3691
          %v4353 = vmul.f32 %v3989, %v3693
          %v4354 = vmul.f32 %v4004, %v3696
          %v4355 = vmul.f32 %v4019, %v3698
          %v4356 = vadd.f32 %v2416, %v4340
          %v4357 = vadd.f32 %v2418, %v4341
          %v4358 = vadd.f32 %v2421, %v4342
          %v4359 = vadd.f32 %v2423, %v4343
          %v4360 = vadd.f32 %v2426, %v4344
          %v4361 = vadd.f32 %v2428, %v4345
          %v4362 = vadd.f32 %v2431, %v4346
          %v4363 = vadd.f32 %v2433, %v4347
          %v4364 = vadd.f32 %v2436, %v4348
          %v4365 = vadd.f32 %v2438, %v4349
          %v4366 = vadd.f32 %v2441, %v4350
          %v4367 = vadd.f32 %v2443, %v4351
          %v4368 = vadd.f32 %v2446, %v4352
          %v4369 = vadd.f32 %v2448, %v4353
          %v4370 = vadd.f32 %v2451, %v4354
          %v4371 = vadd.f32 %v2453, %v4355
          %v4372 = vtanh.pop %v4356
          %v4373 = vtanh.pop %v4357
          %v4374 = vtanh.pop %v4358
          %v4375 = vtanh.pop %v4359
          %v4376 = vtanh.pop %v4360
          %v4377 = vtanh.pop %v4361
          %v4378 = vtanh.pop %v4362
          %v4379 = vtanh.pop %v4363
          %v4380 = vtanh.pop %v4364
          %v4381 = vtanh.pop %v4365
          %v4382 = vtanh.pop %v4366
          %v4383 = vtanh.pop %v4367
          %v4384 = vtanh.pop %v4368
          %v4385 = vtanh.pop %v4369
          %v4386 = vtanh.pop %v4370
          %v4387 = vtanh.pop %v4371
          %v4388 = vsub.f32 1.0, %v4114
          %v4389 = vsub.f32 1.0, %v4129
          %v4390 = vsub.f32 1.0, %v4144
          %v4391 = vsub.f32 1.0, %v4159
          %v4392 = vsub.f32 1.0, %v4174
          %v4393 = vsub.f32 1.0, %v4189
          %v4394 = vsub.f32 1.0, %v4204
          %v4395 = vsub.f32 1.0, %v4219
          %v4396 = vsub.f32 1.0, %v4234
          %v4397 = vsub.f32 1.0, %v4249
          %v4398 = vsub.f32 1.0, %v4264
          %v4399 = vsub.f32 1.0, %v4279
          %v4400 = vsub.f32 1.0, %v4294
          %v4401 = vsub.f32 1.0, %v4309
          %v4402 = vsub.f32 1.0, %v4324
          %v4403 = vsub.f32 1.0, %v4339
          %v4404 = vmul.f32 %v4388, %v4372
          %v4405 = vmul.f32 %v4389, %v4373
          %v4406 = vmul.f32 %v4390, %v4374
          %v4407 = vmul.f32 %v4391, %v4375
          %v4408 = vmul.f32 %v4392, %v4376
          %v4409 = vmul.f32 %v4393, %v4377
          %v4410 = vmul.f32 %v4394, %v4378
          %v4411 = vmul.f32 %v4395, %v4379
          %v4412 = vmul.f32 %v4396, %v4380
          %v4413 = vmul.f32 %v4397, %v4381
          %v4414 = vmul.f32 %v4398, %v4382
          %v4415 = vmul.f32 %v4399, %v4383
          %v4416 = vmul.f32 %v4400, %v4384
          %v4417 = vmul.f32 %v4401, %v4385
          %v4418 = vmul.f32 %v4402, %v4386
          %v4419 = vmul.f32 %v4403, %v4387
          %v4420 = vmul.f32 %v4114, %v3513
          %v4421 = vmul.f32 %v4129, %v3514
          %v4422 = vmul.f32 %v4144, %v3515
          %v4423 = vmul.f32 %v4159, %v3516
          %v4424 = vmul.f32 %v4174, %v3517
          %v4425 = vmul.f32 %v4189, %v3518
          %v4426 = vmul.f32 %v4204, %v3519
          %v4427 = vmul.f32 %v4219, %v3520
          %v4428 = vmul.f32 %v4234, %v3521
          %v4429 = vmul.f32 %v4249, %v3522
          %v4430 = vmul.f32 %v4264, %v3523
          %v4431 = vmul.f32 %v4279, %v3524
          %v4432 = vmul.f32 %v4294, %v3525
          %v4433 = vmul.f32 %v4309, %v3526
          %v4434 = vmul.f32 %v4324, %v3527
          %v4435 = vmul.f32 %v4339, %v3528
          %v4436 = vadd.f32 %v4404, %v4420
          %v4437 = vadd.f32 %v4405, %v4421
          %v4438 = vadd.f32 %v4406, %v4422
          %v4439 = vadd.f32 %v4407, %v4423
          %v4440 = vadd.f32 %v4408, %v4424
          %v4441 = vadd.f32 %v4409, %v4425
          %v4442 = vadd.f32 %v4410, %v4426
          %v4443 = vadd.f32 %v4411, %v4427
          %v4444 = vadd.f32 %v4412, %v4428
          %v4445 = vadd.f32 %v4413, %v4429
          %v4446 = vadd.f32 %v4414, %v4430
          %v4447 = vadd.f32 %v4415, %v4431
          %v4448 = vadd.f32 %v4416, %v4432
          %v4449 = vadd.f32 %v4417, %v4433
          %v4450 = vadd.f32 %v4418, %v4434
          %v4451 = vadd.f32 %v4419, %v4435
          %v4452 = vadd.f32 %v3529, %v4436
          %v4453 = vadd.f32 %v3530, %v4437
          %v4454 = vadd.f32 %v3531, %v4438
          %v4455 = vadd.f32 %v3532, %v4439
          %v4456 = vadd.f32 %v3533, %v4440
          %v4457 = vadd.f32 %v3534, %v4441
          %v4458 = vadd.f32 %v3535, %v4442
          %v4459 = vadd.f32 %v3536, %v4443
          %v4460 = vadd.f32 %v3537, %v4444
          %v4461 = vadd.f32 %v3538, %v4445
          %v4462 = vadd.f32 %v3539, %v4446
          %v4463 = vadd.f32 %v3540, %v4447
          %v4464 = vadd.f32 %v3541, %v4448
          %v4465 = vadd.f32 %v3542, %v4449
          %v4466 = vadd.f32 %v3543, %v4450
          %v4467 = vadd.f32 %v3544, %v4451
          %v4468 = vpack.c.bf16 %v4437, %v4436
          %v4469 = vpack.c.bf16 %v4439, %v4438
          %v4470 = vpack.c.bf16 %v4441, %v4440
          %v4471 = vpack.c.bf16 %v4443, %v4442
          %v4472 = vpack.c.bf16 %v4445, %v4444
          %v4473 = vpack.c.bf16 %v4447, %v4446
          %v4474 = vpack.c.bf16 %v4449, %v4448
          %v4475 = vpack.c.bf16 %v4451, %v4450
          %4476 = vmatpush.bf16.msra.mxu0 %v2603
          %4477 = vmatpush.bf16.msra.mxu0 %v2600
          %4478 = vmatpush.bf16.msra.mxu0 %v2597
          %4479 = vmatpush.bf16.msra.mxu0 %v2594
          %4480 = vmatpush.bf16.msra.mxu0 %v2591
          %4481 = vmatpush.bf16.msra.mxu0 %v2588
          %4482 = vmatpush.bf16.msra.mxu0 %v2585
          %4483 = vmatpush.bf16.msra.mxu0 %v2582
          %4484 = vmatmul.bf16.gmra.mxu0 %v4468
          %v4485 = vpop.f32.mrf.mxu0
          %v4486 = vadd.f32 %v2496, %v4485
          %v4487 = vpop.f32.mrf.mxu0
          %v4488 = vadd.f32 %v2496, %v4487
          %4489 = vmatmul.bf16.gmra.mxu0 %v4469
          %v4490 = vpop.f32.mrf.mxu0
          %v4491 = vadd.f32 %v2496, %v4490
          %v4492 = vpop.f32.mrf.mxu0
          %v4493 = vadd.f32 %v2496, %v4492
          %4494 = vmatmul.bf16.gmra.mxu0 %v4470
          %v4495 = vpop.f32.mrf.mxu0
          %v4496 = vadd.f32 %v2496, %v4495
          %v4497 = vpop.f32.mrf.mxu0
          %v4498 = vadd.f32 %v2496, %v4497
          %4499 = vmatmul.bf16.gmra.mxu0 %v4471
          %v4500 = vpop.f32.mrf.mxu0
          %v4501 = vadd.f32 %v2496, %v4500
          %v4502 = vpop.f32.mrf.mxu0
          %v4503 = vadd.f32 %v2496, %v4502
          %4504 = vmatmul.bf16.gmra.mxu0 %v4472
          %v4505 = vpop.f32.mrf.mxu0
          %v4506 = vadd.f32 %v2496, %v4505
          %v4507 = vpop.f32.mrf.mxu0
          %v4508 = vadd.f32 %v2496, %v4507
          %4509 = vmatmul.bf16.gmra.mxu0 %v4473
          %v4510 = vpop.f32.mrf.mxu0
          %v4511 = vadd.f32 %v2496, %v4510
          %v4512 = vpop.f32.mrf.mxu0
          %v4513 = vadd.f32 %v2496, %v4512
          %4514 = vmatmul.bf16.gmra.mxu0 %v4474
          %v4515 = vpop.f32.mrf.mxu0
          %v4516 = vadd.f32 %v2496, %v4515
          %v4517 = vpop.f32.mrf.mxu0
          %v4518 = vadd.f32 %v2496, %v4517
          %4519 = vmatmul.bf16.gmra.mxu0 %v4475
          %v4520 = vpop.f32.mrf.mxu0
          %v4521 = vadd.f32 %v2496, %v4520
          %v4522 = vpop.f32.mrf.mxu0
          %v4523 = vadd.f32 %v2496, %v4522
          %4524 = vdwg.mxu0
          %4525 = vmatpush.bf16.msra.mxu0 %v2604
          %4526 = vmatpush.bf16.msra.mxu0 %v2601
          %4527 = vmatpush.bf16.msra.mxu0 %v2598
          %4528 = vmatpush.bf16.msra.mxu0 %v2595
          %4529 = vmatpush.bf16.msra.mxu0 %v2592
          %4530 = vmatpush.bf16.msra.mxu0 %v2589
          %4531 = vmatpush.bf16.msra.mxu0 %v2586
          %4532 = vmatpush.bf16.msra.mxu0 %v2583
          %4533 = vmatmul.bf16.gmra.mxu0 %v4468
          %v4534 = vpop.f32.mrf.mxu0
          %v4535 = vadd.f32 %v2497, %v4534
          %v4536 = vpop.f32.mrf.mxu0
          %v4537 = vadd.f32 %v2497, %v4536
          %4538 = vmatmul.bf16.gmra.mxu0 %v4469
          %v4539 = vpop.f32.mrf.mxu0
          %v4540 = vadd.f32 %v2497, %v4539
          %v4541 = vpop.f32.mrf.mxu0
          %v4542 = vadd.f32 %v2497, %v4541
          %4543 = vmatmul.bf16.gmra.mxu0 %v4470
          %v4544 = vpop.f32.mrf.mxu0
          %v4545 = vadd.f32 %v2497, %v4544
          %v4546 = vpop.f32.mrf.mxu0
          %v4547 = vadd.f32 %v2497, %v4546
          %4548 = vmatmul.bf16.gmra.mxu0 %v4471
          %v4549 = vpop.f32.mrf.mxu0
          %v4550 = vadd.f32 %v2497, %v4549
          %v4551 = vpop.f32.mrf.mxu0
          %v4552 = vadd.f32 %v2497, %v4551
          %4553 = vmatmul.bf16.gmra.mxu0 %v4472
          %v4554 = vpop.f32.mrf.mxu0
          %v4555 = vadd.f32 %v2497, %v4554
          %v4556 = vpop.f32.mrf.mxu0
          %v4557 = vadd.f32 %v2497, %v4556
          %4558 = vmatmul.bf16.gmra.mxu0 %v4473
          %v4559 = vpop.f32.mrf.mxu0
          %v4560 = vadd.f32 %v2497, %v4559
          %v4561 = vpop.f32.mrf.mxu0
          %v4562 = vadd.f32 %v2497, %v4561
          %4563 = vmatmul.bf16.gmra.mxu0 %v4474
          %v4564 = vpop.f32.mrf.mxu0
          %v4565 = vadd.f32 %v2497, %v4564
          %v4566 = vpop.f32.mrf.mxu0
          %v4567 = vadd.f32 %v2497, %v4566
          %4568 = vmatmul.bf16.gmra.mxu0 %v4475
          %v4569 = vpop.f32.mrf.mxu0
          %v4570 = vadd.f32 %v2497, %v4569
          %v4571 = vpop.f32.mrf.mxu0
          %v4572 = vadd.f32 %v2497, %v4571
          %4573 = vdwg.mxu0
          %4574 = vmatpush.bf16.msra.mxu0 %v2605
          %4575 = vmatpush.bf16.msra.mxu0 %v2602
          %4576 = vmatpush.bf16.msra.mxu0 %v2599
          %4577 = vmatpush.bf16.msra.mxu0 %v2596
          %4578 = vmatpush.bf16.msra.mxu0 %v2593
          %4579 = vmatpush.bf16.msra.mxu0 %v2590
          %4580 = vmatpush.bf16.msra.mxu0 %v2587
          %4581 = vmatpush.bf16.msra.mxu0 %v2584
          %4582 = vmatmul.bf16.gmra.mxu0 %v4468
          %v4583 = vpop.f32.mrf.mxu0
          %v4584 = vadd.f32 %v2498, %v4583
          %v4585 = vpop.f32.mrf.mxu0
          %v4586 = vadd.f32 %v2498, %v4585
          %4587 = vmatmul.bf16.gmra.mxu0 %v4469
          %v4588 = vpop.f32.mrf.mxu0
          %v4589 = vadd.f32 %v2498, %v4588
          %v4590 = vpop.f32.mrf.mxu0
          %v4591 = vadd.f32 %v2498, %v4590
          %4592 = vmatmul.bf16.gmra.mxu0 %v4470
          %v4593 = vpop.f32.mrf.mxu0
          %v4594 = vadd.f32 %v2498, %v4593
          %v4595 = vpop.f32.mrf.mxu0
          %v4596 = vadd.f32 %v2498, %v4595
          %4597 = vmatmul.bf16.gmra.mxu0 %v4471
          %v4598 = vpop.f32.mrf.mxu0
          %v4599 = vadd.f32 %v2498, %v4598
          %v4600 = vpop.f32.mrf.mxu0
          %v4601 = vadd.f32 %v2498, %v4600
          %4602 = vmatmul.bf16.gmra.mxu0 %v4472
          %v4603 = vpop.f32.mrf.mxu0
          %v4604 = vadd.f32 %v2498, %v4603
          %v4605 = vpop.f32.mrf.mxu0
          %v4606 = vadd.f32 %v2498, %v4605
          %4607 = vmatmul.bf16.gmra.mxu0 %v4473
          %v4608 = vpop.f32.mrf.mxu0
          %v4609 = vadd.f32 %v2498, %v4608
          %v4610 = vpop.f32.mrf.mxu0
          %v4611 = vadd.f32 %v2498, %v4610
          %4612 = vmatmul.bf16.gmra.mxu0 %v4474
          %v4613 = vpop.f32.mrf.mxu0
          %v4614 = vadd.f32 %v2498, %v4613
          %v4615 = vpop.f32.mrf.mxu0
          %v4616 = vadd.f32 %v2498, %v4615
          %4617 = vmatmul.bf16.gmra.mxu0 %v4475
          %v4618 = vpop.f32.mrf.mxu0
          %v4619 = vadd.f32 %v2498, %v4618
          %v4620 = vpop.f32.mrf.mxu0
          %v4621 = vadd.f32 %v2498, %v4620
          %4622 = vdwg.mxu0
          %v4623 = vadd.f32 %v2198, %v4486
          %v4624 = vadd.f32 %v2200, %v4488
          %v4625 = vadd.f32 %v2203, %v4491
          %v4626 = vadd.f32 %v2205, %v4493
          %v4627 = vadd.f32 %v2208, %v4496
          %v4628 = vadd.f32 %v2210, %v4498
          %v4629 = vadd.f32 %v2213, %v4501
          %v4630 = vadd.f32 %v2215, %v4503
          %v4631 = vadd.f32 %v2218, %v4506
          %v4632 = vadd.f32 %v2220, %v4508
          %v4633 = vadd.f32 %v2223, %v4511
          %v4634 = vadd.f32 %v2225, %v4513
          %v4635 = vadd.f32 %v2228, %v4516
          %v4636 = vadd.f32 %v2230, %v4518
          %v4637 = vadd.f32 %v2233, %v4521
          %v4638 = vadd.f32 %v2235, %v4523
          %v4639 = vxor.u32 %v4623, 2147483648
          %v4640 = vxor.u32 %v4624, 2147483648
          %v4641 = vxor.u32 %v4625, 2147483648
          %v4642 = vxor.u32 %v4626, 2147483648
          %v4643 = vxor.u32 %v4627, 2147483648
          %v4644 = vxor.u32 %v4628, 2147483648
          %v4645 = vxor.u32 %v4629, 2147483648
          %v4646 = vxor.u32 %v4630, 2147483648
          %v4647 = vxor.u32 %v4631, 2147483648
          %v4648 = vxor.u32 %v4632, 2147483648
          %v4649 = vxor.u32 %v4633, 2147483648
          %v4650 = vxor.u32 %v4634, 2147483648
          %v4651 = vxor.u32 %v4635, 2147483648
          %v4652 = vxor.u32 %v4636, 2147483648
          %v4653 = vxor.u32 %v4637, 2147483648
          %v4654 = vxor.u32 %v4638, 2147483648
          %v4655 = vmul.f32 %v4639, 1.442695
          %v4656 = vpow.pop %v4655
          %v4657 = vmul.f32 %v4640, 1.442695
          %v4658 = vpow.pop %v4657
          %v4659 = vmul.f32 %v4641, 1.442695
          %v4660 = vpow.pop %v4659
          %v4661 = vmul.f32 %v4642, 1.442695
          %v4662 = vpow.pop %v4661
          %v4663 = vmul.f32 %v4643, 1.442695
          %v4664 = vpow.pop %v4663
          %v4665 = vmul.f32 %v4644, 1.442695
          %v4666 = vpow.pop %v4665
          %v4667 = vmul.f32 %v4645, 1.442695
          %v4668 = vpow.pop %v4667
          %v4669 = vmul.f32 %v4646, 1.442695
          %v4670 = vpow.pop %v4669
          %v4671 = vmul.f32 %v4647, 1.442695
          %v4672 = vpow.pop %v4671
          %v4673 = vmul.f32 %v4648, 1.442695
          %v4674 = vpow.pop %v4673
          %v4675 = vmul.f32 %v4649, 1.442695
          %v4676 = vpow.pop %v4675
          %v4677 = vmul.f32 %v4650, 1.442695
          %v4678 = vpow.pop %v4677
          %v4679 = vmul.f32 %v4651, 1.442695
          %v4680 = vpow.pop %v4679
          %v4681 = vmul.f32 %v4652, 1.442695
          %v4682 = vpow.pop %v4681
          %v4683 = vmul.f32 %v4653, 1.442695
          %v4684 = vpow.pop %v4683
          %v4685 = vmul.f32 %v4654, 1.442695
          %v4686 = vpow.pop %v4685
          %v4687 = vadd.f32 %v4656, 1.0
          %v4688 = vadd.f32 %v4658, 1.0
          %v4689 = vadd.f32 %v4660, 1.0
          %v4690 = vadd.f32 %v4662, 1.0
          %v4691 = vadd.f32 %v4664, 1.0
          %v4692 = vadd.f32 %v4666, 1.0
          %v4693 = vadd.f32 %v4668, 1.0
          %v4694 = vadd.f32 %v4670, 1.0
          %v4695 = vadd.f32 %v4672, 1.0
          %v4696 = vadd.f32 %v4674, 1.0
          %v4697 = vadd.f32 %v4676, 1.0
          %v4698 = vadd.f32 %v4678, 1.0
          %v4699 = vadd.f32 %v4680, 1.0
          %v4700 = vadd.f32 %v4682, 1.0
          %v4701 = vadd.f32 %v4684, 1.0
          %v4702 = vadd.f32 %v4686, 1.0
          %v4703 = vrcp.pop %v4687
          %v4704 = vmul.f32 %v4687, %v4703
          %v4705 = vsub.f32 1.0, %v4704
          %v4706 = vmul.f32 %v4703, %v4705
          %v4707 = vadd.f32 %v4703, %v4706
          %vm4708 = vweird.f32 %v4687
          %vm4709 = vweird.f32 %v4703
          %vm4710 = vmor %vm4708, %vm4709
          %v4711 = vsel %vm4710, %v4703, %v4707
          %v4712 = vand.u32 2147483647, %v4687
          %vm4713 = vcmp.eq.f32.partialorder %v4712, 8.507059e+37
          %v4714 = vand.u32 %v4687, 2147483648
          %v4715 = vor.u32 1.1754944e-38, %v4714
          %v4716 = vsel %vm4713, %v4715, %v4711
          %v4717 = vmul.f32 1.0, %v4716
          %v4718 = vrcp.pop %v4688
          %v4719 = vmul.f32 %v4688, %v4718
          %v4720 = vsub.f32 1.0, %v4719
          %v4721 = vmul.f32 %v4718, %v4720
          %v4722 = vadd.f32 %v4718, %v4721
          %vm4723 = vweird.f32 %v4688
          %vm4724 = vweird.f32 %v4718
          %vm4725 = vmor %vm4723, %vm4724
          %v4726 = vsel %vm4725, %v4718, %v4722
          %v4727 = vand.u32 2147483647, %v4688
          %vm4728 = vcmp.eq.f32.partialorder %v4727, 8.507059e+37
          %v4729 = vand.u32 %v4688, 2147483648
          %v4730 = vor.u32 1.1754944e-38, %v4729
          %v4731 = vsel %vm4728, %v4730, %v4726
          %v4732 = vmul.f32 1.0, %v4731
          %v4733 = vrcp.pop %v4689
          %v4734 = vmul.f32 %v4689, %v4733
          %v4735 = vsub.f32 1.0, %v4734
          %v4736 = vmul.f32 %v4733, %v4735
          %v4737 = vadd.f32 %v4733, %v4736
          %vm4738 = vweird.f32 %v4689
          %vm4739 = vweird.f32 %v4733
          %vm4740 = vmor %vm4738, %vm4739
          %v4741 = vsel %vm4740, %v4733, %v4737
          %v4742 = vand.u32 2147483647, %v4689
          %vm4743 = vcmp.eq.f32.partialorder %v4742, 8.507059e+37
          %v4744 = vand.u32 %v4689, 2147483648
          %v4745 = vor.u32 1.1754944e-38, %v4744
          %v4746 = vsel %vm4743, %v4745, %v4741
          %v4747 = vmul.f32 1.0, %v4746
          %v4748 = vrcp.pop %v4690
          %v4749 = vmul.f32 %v4690, %v4748
          %v4750 = vsub.f32 1.0, %v4749
          %v4751 = vmul.f32 %v4748, %v4750
          %v4752 = vadd.f32 %v4748, %v4751
          %vm4753 = vweird.f32 %v4690
          %vm4754 = vweird.f32 %v4748
          %vm4755 = vmor %vm4753, %vm4754
          %v4756 = vsel %vm4755, %v4748, %v4752
          %v4757 = vand.u32 2147483647, %v4690
          %vm4758 = vcmp.eq.f32.partialorder %v4757, 8.507059e+37
          %v4759 = vand.u32 %v4690, 2147483648
          %v4760 = vor.u32 1.1754944e-38, %v4759
          %v4761 = vsel %vm4758, %v4760, %v4756
          %v4762 = vmul.f32 1.0, %v4761
          %v4763 = vrcp.pop %v4691
          %v4764 = vmul.f32 %v4691, %v4763
          %v4765 = vsub.f32 1.0, %v4764
          %v4766 = vmul.f32 %v4763, %v4765
          %v4767 = vadd.f32 %v4763, %v4766
          %vm4768 = vweird.f32 %v4691
          %vm4769 = vweird.f32 %v4763
          %vm4770 = vmor %vm4768, %vm4769
          %v4771 = vsel %vm4770, %v4763, %v4767
          %v4772 = vand.u32 2147483647, %v4691
          %vm4773 = vcmp.eq.f32.partialorder %v4772, 8.507059e+37
          %v4774 = vand.u32 %v4691, 2147483648
          %v4775 = vor.u32 1.1754944e-38, %v4774
          %v4776 = vsel %vm4773, %v4775, %v4771
          %v4777 = vmul.f32 1.0, %v4776
          %v4778 = vrcp.pop %v4692
          %v4779 = vmul.f32 %v4692, %v4778
          %v4780 = vsub.f32 1.0, %v4779
          %v4781 = vmul.f32 %v4778, %v4780
          %v4782 = vadd.f32 %v4778, %v4781
          %vm4783 = vweird.f32 %v4692
          %vm4784 = vweird.f32 %v4778
          %vm4785 = vmor %vm4783, %vm4784
          %v4786 = vsel %vm4785, %v4778, %v4782
          %v4787 = vand.u32 2147483647, %v4692
          %vm4788 = vcmp.eq.f32.partialorder %v4787, 8.507059e+37
          %v4789 = vand.u32 %v4692, 2147483648
          %v4790 = vor.u32 1.1754944e-38, %v4789
          %v4791 = vsel %vm4788, %v4790, %v4786
          %v4792 = vmul.f32 1.0, %v4791
          %v4793 = vrcp.pop %v4693
          %v4794 = vmul.f32 %v4693, %v4793
          %v4795 = vsub.f32 1.0, %v4794
          %v4796 = vmul.f32 %v4793, %v4795
          %v4797 = vadd.f32 %v4793, %v4796
          %vm4798 = vweird.f32 %v4693
          %vm4799 = vweird.f32 %v4793
          %vm4800 = vmor %vm4798, %vm4799
          %v4801 = vsel %vm4800, %v4793, %v4797
          %v4802 = vand.u32 2147483647, %v4693
          %vm4803 = vcmp.eq.f32.partialorder %v4802, 8.507059e+37
          %v4804 = vand.u32 %v4693, 2147483648
          %v4805 = vor.u32 1.1754944e-38, %v4804
          %v4806 = vsel %vm4803, %v4805, %v4801
          %v4807 = vmul.f32 1.0, %v4806
          %v4808 = vrcp.pop %v4694
          %v4809 = vmul.f32 %v4694, %v4808
          %v4810 = vsub.f32 1.0, %v4809
          %v4811 = vmul.f32 %v4808, %v4810
          %v4812 = vadd.f32 %v4808, %v4811
          %vm4813 = vweird.f32 %v4694
          %vm4814 = vweird.f32 %v4808
          %vm4815 = vmor %vm4813, %vm4814
          %v4816 = vsel %vm4815, %v4808, %v4812
          %v4817 = vand.u32 2147483647, %v4694
          %vm4818 = vcmp.eq.f32.partialorder %v4817, 8.507059e+37
          %v4819 = vand.u32 %v4694, 2147483648
          %v4820 = vor.u32 1.1754944e-38, %v4819
          %v4821 = vsel %vm4818, %v4820, %v4816
          %v4822 = vmul.f32 1.0, %v4821
          %v4823 = vrcp.pop %v4695
          %v4824 = vmul.f32 %v4695, %v4823
          %v4825 = vsub.f32 1.0, %v4824
          %v4826 = vmul.f32 %v4823, %v4825
          %v4827 = vadd.f32 %v4823, %v4826
          %vm4828 = vweird.f32 %v4695
          %vm4829 = vweird.f32 %v4823
          %vm4830 = vmor %vm4828, %vm4829
          %v4831 = vsel %vm4830, %v4823, %v4827
          %v4832 = vand.u32 2147483647, %v4695
          %vm4833 = vcmp.eq.f32.partialorder %v4832, 8.507059e+37
          %v4834 = vand.u32 %v4695, 2147483648
          %v4835 = vor.u32 1.1754944e-38, %v4834
          %v4836 = vsel %vm4833, %v4835, %v4831
          %v4837 = vmul.f32 1.0, %v4836
          %v4838 = vrcp.pop %v4696
          %v4839 = vmul.f32 %v4696, %v4838
          %v4840 = vsub.f32 1.0, %v4839
          %v4841 = vmul.f32 %v4838, %v4840
          %v4842 = vadd.f32 %v4838, %v4841
          %vm4843 = vweird.f32 %v4696
          %vm4844 = vweird.f32 %v4838
          %vm4845 = vmor %vm4843, %vm4844
          %v4846 = vsel %vm4845, %v4838, %v4842
          %v4847 = vand.u32 2147483647, %v4696
          %vm4848 = vcmp.eq.f32.partialorder %v4847, 8.507059e+37
          %v4849 = vand.u32 %v4696, 2147483648
          %v4850 = vor.u32 1.1754944e-38, %v4849
          %v4851 = vsel %vm4848, %v4850, %v4846
          %v4852 = vmul.f32 1.0, %v4851
          %v4853 = vrcp.pop %v4697
          %v4854 = vmul.f32 %v4697, %v4853
          %v4855 = vsub.f32 1.0, %v4854
          %v4856 = vmul.f32 %v4853, %v4855
          %v4857 = vadd.f32 %v4853, %v4856
          %vm4858 = vweird.f32 %v4697
          %vm4859 = vweird.f32 %v4853
          %vm4860 = vmor %vm4858, %vm4859
          %v4861 = vsel %vm4860, %v4853, %v4857
          %v4862 = vand.u32 2147483647, %v4697
          %vm4863 = vcmp.eq.f32.partialorder %v4862, 8.507059e+37
          %v4864 = vand.u32 %v4697, 2147483648
          %v4865 = vor.u32 1.1754944e-38, %v4864
          %v4866 = vsel %vm4863, %v4865, %v4861
          %v4867 = vmul.f32 1.0, %v4866
          %v4868 = vrcp.pop %v4698
          %v4869 = vmul.f32 %v4698, %v4868
          %v4870 = vsub.f32 1.0, %v4869
          %v4871 = vmul.f32 %v4868, %v4870
          %v4872 = vadd.f32 %v4868, %v4871
          %vm4873 = vweird.f32 %v4698
          %vm4874 = vweird.f32 %v4868
          %vm4875 = vmor %vm4873, %vm4874
          %v4876 = vsel %vm4875, %v4868, %v4872
          %v4877 = vand.u32 2147483647, %v4698
          %vm4878 = vcmp.eq.f32.partialorder %v4877, 8.507059e+37
          %v4879 = vand.u32 %v4698, 2147483648
          %v4880 = vor.u32 1.1754944e-38, %v4879
          %v4881 = vsel %vm4878, %v4880, %v4876
          %v4882 = vmul.f32 1.0, %v4881
          %v4883 = vrcp.pop %v4699
          %v4884 = vmul.f32 %v4699, %v4883
          %v4885 = vsub.f32 1.0, %v4884
          %v4886 = vmul.f32 %v4883, %v4885
          %v4887 = vadd.f32 %v4883, %v4886
          %vm4888 = vweird.f32 %v4699
          %vm4889 = vweird.f32 %v4883
          %vm4890 = vmor %vm4888, %vm4889
          %v4891 = vsel %vm4890, %v4883, %v4887
          %v4892 = vand.u32 2147483647, %v4699
          %vm4893 = vcmp.eq.f32.partialorder %v4892, 8.507059e+37
          %v4894 = vand.u32 %v4699, 2147483648
          %v4895 = vor.u32 1.1754944e-38, %v4894
          %v4896 = vsel %vm4893, %v4895, %v4891
          %v4897 = vmul.f32 1.0, %v4896
          %v4898 = vrcp.pop %v4700
          %v4899 = vmul.f32 %v4700, %v4898
          %v4900 = vsub.f32 1.0, %v4899
          %v4901 = vmul.f32 %v4898, %v4900
          %v4902 = vadd.f32 %v4898, %v4901
          %vm4903 = vweird.f32 %v4700
          %vm4904 = vweird.f32 %v4898
          %vm4905 = vmor %vm4903, %vm4904
          %v4906 = vsel %vm4905, %v4898, %v4902
          %v4907 = vand.u32 2147483647, %v4700
          %vm4908 = vcmp.eq.f32.partialorder %v4907, 8.507059e+37
          %v4909 = vand.u32 %v4700, 2147483648
          %v4910 = vor.u32 1.1754944e-38, %v4909
          %v4911 = vsel %vm4908, %v4910, %v4906
          %v4912 = vmul.f32 1.0, %v4911
          %v4913 = vrcp.pop %v4701
          %v4914 = vmul.f32 %v4701, %v4913
          %v4915 = vsub.f32 1.0, %v4914
          %v4916 = vmul.f32 %v4913, %v4915
          %v4917 = vadd.f32 %v4913, %v4916
          %vm4918 = vweird.f32 %v4701
          %vm4919 = vweird.f32 %v4913
          %vm4920 = vmor %vm4918, %vm4919
          %v4921 = vsel %vm4920, %v4913, %v4917
          %v4922 = vand.u32 2147483647, %v4701
          %vm4923 = vcmp.eq.f32.partialorder %v4922, 8.507059e+37
          %v4924 = vand.u32 %v4701, 2147483648
          %v4925 = vor.u32 1.1754944e-38, %v4924
          %v4926 = vsel %vm4923, %v4925, %v4921
          %v4927 = vmul.f32 1.0, %v4926
          %v4928 = vrcp.pop %v4702
          %v4929 = vmul.f32 %v4702, %v4928
          %v4930 = vsub.f32 1.0, %v4929
          %v4931 = vmul.f32 %v4928, %v4930
          %v4932 = vadd.f32 %v4928, %v4931
          %vm4933 = vweird.f32 %v4702
          %vm4934 = vweird.f32 %v4928
          %vm4935 = vmor %vm4933, %vm4934
          %v4936 = vsel %vm4935, %v4928, %v4932
          %v4937 = vand.u32 2147483647, %v4702
          %vm4938 = vcmp.eq.f32.partialorder %v4937, 8.507059e+37
          %v4939 = vand.u32 %v4702, 2147483648
          %v4940 = vor.u32 1.1754944e-38, %v4939
          %v4941 = vsel %vm4938, %v4940, %v4936
          %v4942 = vmul.f32 1.0, %v4941
          %v4943 = vadd.f32 %v2327, %v4535
          %v4944 = vadd.f32 %v2329, %v4537
          %v4945 = vadd.f32 %v2332, %v4540
          %v4946 = vadd.f32 %v2334, %v4542
          %v4947 = vadd.f32 %v2337, %v4545
          %v4948 = vadd.f32 %v2339, %v4547
          %v4949 = vadd.f32 %v2342, %v4550
          %v4950 = vadd.f32 %v2344, %v4552
          %v4951 = vadd.f32 %v2347, %v4555
          %v4952 = vadd.f32 %v2349, %v4557
          %v4953 = vadd.f32 %v2352, %v4560
          %v4954 = vadd.f32 %v2354, %v4562
          %v4955 = vadd.f32 %v2357, %v4565
          %v4956 = vadd.f32 %v2359, %v4567
          %v4957 = vadd.f32 %v2362, %v4570
          %v4958 = vadd.f32 %v2364, %v4572
          %v4959 = vxor.u32 %v4943, 2147483648
          %v4960 = vxor.u32 %v4944, 2147483648
          %v4961 = vxor.u32 %v4945, 2147483648
          %v4962 = vxor.u32 %v4946, 2147483648
          %v4963 = vxor.u32 %v4947, 2147483648
          %v4964 = vxor.u32 %v4948, 2147483648
          %v4965 = vxor.u32 %v4949, 2147483648
          %v4966 = vxor.u32 %v4950, 2147483648
          %v4967 = vxor.u32 %v4951, 2147483648
          %v4968 = vxor.u32 %v4952, 2147483648
          %v4969 = vxor.u32 %v4953, 2147483648
          %v4970 = vxor.u32 %v4954, 2147483648
          %v4971 = vxor.u32 %v4955, 2147483648
          %v4972 = vxor.u32 %v4956, 2147483648
          %v4973 = vxor.u32 %v4957, 2147483648
          %v4974 = vxor.u32 %v4958, 2147483648
          %v4975 = vmul.f32 %v4959, 1.442695
          %v4976 = vpow.pop %v4975
          %v4977 = vmul.f32 %v4960, 1.442695
          %v4978 = vpow.pop %v4977
          %v4979 = vmul.f32 %v4961, 1.442695
          %v4980 = vpow.pop %v4979
          %v4981 = vmul.f32 %v4962, 1.442695
          %v4982 = vpow.pop %v4981
          %v4983 = vmul.f32 %v4963, 1.442695
          %v4984 = vpow.pop %v4983
          %v4985 = vmul.f32 %v4964, 1.442695
          %v4986 = vpow.pop %v4985
          %v4987 = vmul.f32 %v4965, 1.442695
          %v4988 = vpow.pop %v4987
          %v4989 = vmul.f32 %v4966, 1.442695
          %v4990 = vpow.pop %v4989
          %v4991 = vmul.f32 %v4967, 1.442695
          %v4992 = vpow.pop %v4991
          %v4993 = vmul.f32 %v4968, 1.442695
          %v4994 = vpow.pop %v4993
          %v4995 = vmul.f32 %v4969, 1.442695
          %v4996 = vpow.pop %v4995
          %v4997 = vmul.f32 %v4970, 1.442695
          %v4998 = vpow.pop %v4997
          %v4999 = vmul.f32 %v4971, 1.442695
          %v5000 = vpow.pop %v4999
          %v5001 = vmul.f32 %v4972, 1.442695
          %v5002 = vpow.pop %v5001
          %v5003 = vmul.f32 %v4973, 1.442695
          %v5004 = vpow.pop %v5003
          %v5005 = vmul.f32 %v4974, 1.442695
          %v5006 = vpow.pop %v5005
          %v5007 = vadd.f32 %v4976, 1.0
          %v5008 = vadd.f32 %v4978, 1.0
          %v5009 = vadd.f32 %v4980, 1.0
          %v5010 = vadd.f32 %v4982, 1.0
          %v5011 = vadd.f32 %v4984, 1.0
          %v5012 = vadd.f32 %v4986, 1.0
          %v5013 = vadd.f32 %v4988, 1.0
          %v5014 = vadd.f32 %v4990, 1.0
          %v5015 = vadd.f32 %v4992, 1.0
          %v5016 = vadd.f32 %v4994, 1.0
          %v5017 = vadd.f32 %v4996, 1.0
          %v5018 = vadd.f32 %v4998, 1.0
          %v5019 = vadd.f32 %v5000, 1.0
          %v5020 = vadd.f32 %v5002, 1.0
          %v5021 = vadd.f32 %v5004, 1.0
          %v5022 = vadd.f32 %v5006, 1.0
          %v5023 = vrcp.pop %v5007
          %v5024 = vmul.f32 %v5007, %v5023
          %v5025 = vsub.f32 1.0, %v5024
          %v5026 = vmul.f32 %v5023, %v5025
          %v5027 = vadd.f32 %v5023, %v5026
          %vm5028 = vweird.f32 %v5007
          %vm5029 = vweird.f32 %v5023
          %vm5030 = vmor %vm5028, %vm5029
          %v5031 = vsel %vm5030, %v5023, %v5027
          %v5032 = vand.u32 2147483647, %v5007
          %vm5033 = vcmp.eq.f32.partialorder %v5032, 8.507059e+37
          %v5034 = vand.u32 %v5007, 2147483648
          %v5035 = vor.u32 1.1754944e-38, %v5034
          %v5036 = vsel %vm5033, %v5035, %v5031
          %v5037 = vmul.f32 1.0, %v5036
          %v5038 = vrcp.pop %v5008
          %v5039 = vmul.f32 %v5008, %v5038
          %v5040 = vsub.f32 1.0, %v5039
          %v5041 = vmul.f32 %v5038, %v5040
          %v5042 = vadd.f32 %v5038, %v5041
          %vm5043 = vweird.f32 %v5008
          %vm5044 = vweird.f32 %v5038
          %vm5045 = vmor %vm5043, %vm5044
          %v5046 = vsel %vm5045, %v5038, %v5042
          %v5047 = vand.u32 2147483647, %v5008
          %vm5048 = vcmp.eq.f32.partialorder %v5047, 8.507059e+37
          %v5049 = vand.u32 %v5008, 2147483648
          %v5050 = vor.u32 1.1754944e-38, %v5049
          %v5051 = vsel %vm5048, %v5050, %v5046
          %v5052 = vmul.f32 1.0, %v5051
          %v5053 = vrcp.pop %v5009
          %v5054 = vmul.f32 %v5009, %v5053
          %v5055 = vsub.f32 1.0, %v5054
          %v5056 = vmul.f32 %v5053, %v5055
          %v5057 = vadd.f32 %v5053, %v5056
          %vm5058 = vweird.f32 %v5009
          %vm5059 = vweird.f32 %v5053
          %vm5060 = vmor %vm5058, %vm5059
          %v5061 = vsel %vm5060, %v5053, %v5057
          %v5062 = vand.u32 2147483647, %v5009
          %vm5063 = vcmp.eq.f32.partialorder %v5062, 8.507059e+37
          %v5064 = vand.u32 %v5009, 2147483648
          %v5065 = vor.u32 1.1754944e-38, %v5064
          %v5066 = vsel %vm5063, %v5065, %v5061
          %v5067 = vmul.f32 1.0, %v5066
          %v5068 = vrcp.pop %v5010
          %v5069 = vmul.f32 %v5010, %v5068
          %v5070 = vsub.f32 1.0, %v5069
          %v5071 = vmul.f32 %v5068, %v5070
          %v5072 = vadd.f32 %v5068, %v5071
          %vm5073 = vweird.f32 %v5010
          %vm5074 = vweird.f32 %v5068
          %vm5075 = vmor %vm5073, %vm5074
          %v5076 = vsel %vm5075, %v5068, %v5072
          %v5077 = vand.u32 2147483647, %v5010
          %vm5078 = vcmp.eq.f32.partialorder %v5077, 8.507059e+37
          %v5079 = vand.u32 %v5010, 2147483648
          %v5080 = vor.u32 1.1754944e-38, %v5079
          %v5081 = vsel %vm5078, %v5080, %v5076
          %v5082 = vmul.f32 1.0, %v5081
          %v5083 = vrcp.pop %v5011
          %v5084 = vmul.f32 %v5011, %v5083
          %v5085 = vsub.f32 1.0, %v5084
          %v5086 = vmul.f32 %v5083, %v5085
          %v5087 = vadd.f32 %v5083, %v5086
          %vm5088 = vweird.f32 %v5011
          %vm5089 = vweird.f32 %v5083
          %vm5090 = vmor %vm5088, %vm5089
          %v5091 = vsel %vm5090, %v5083, %v5087
          %v5092 = vand.u32 2147483647, %v5011
          %vm5093 = vcmp.eq.f32.partialorder %v5092, 8.507059e+37
          %v5094 = vand.u32 %v5011, 2147483648
          %v5095 = vor.u32 1.1754944e-38, %v5094
          %v5096 = vsel %vm5093, %v5095, %v5091
          %v5097 = vmul.f32 1.0, %v5096
          %v5098 = vrcp.pop %v5012
          %v5099 = vmul.f32 %v5012, %v5098
          %v5100 = vsub.f32 1.0, %v5099
          %v5101 = vmul.f32 %v5098, %v5100
          %v5102 = vadd.f32 %v5098, %v5101
          %vm5103 = vweird.f32 %v5012
          %vm5104 = vweird.f32 %v5098
          %vm5105 = vmor %vm5103, %vm5104
          %v5106 = vsel %vm5105, %v5098, %v5102
          %v5107 = vand.u32 2147483647, %v5012
          %vm5108 = vcmp.eq.f32.partialorder %v5107, 8.507059e+37
          %v5109 = vand.u32 %v5012, 2147483648
          %v5110 = vor.u32 1.1754944e-38, %v5109
          %v5111 = vsel %vm5108, %v5110, %v5106
          %v5112 = vmul.f32 1.0, %v5111
          %v5113 = vrcp.pop %v5013
          %v5114 = vmul.f32 %v5013, %v5113
          %v5115 = vsub.f32 1.0, %v5114
          %v5116 = vmul.f32 %v5113, %v5115
          %v5117 = vadd.f32 %v5113, %v5116
          %vm5118 = vweird.f32 %v5013
          %vm5119 = vweird.f32 %v5113
          %vm5120 = vmor %vm5118, %vm5119
          %v5121 = vsel %vm5120, %v5113, %v5117
          %v5122 = vand.u32 2147483647, %v5013
          %vm5123 = vcmp.eq.f32.partialorder %v5122, 8.507059e+37
          %v5124 = vand.u32 %v5013, 2147483648
          %v5125 = vor.u32 1.1754944e-38, %v5124
          %v5126 = vsel %vm5123, %v5125, %v5121
          %v5127 = vmul.f32 1.0, %v5126
          %v5128 = vrcp.pop %v5014
          %v5129 = vmul.f32 %v5014, %v5128
          %v5130 = vsub.f32 1.0, %v5129
          %v5131 = vmul.f32 %v5128, %v5130
          %v5132 = vadd.f32 %v5128, %v5131
          %vm5133 = vweird.f32 %v5014
          %vm5134 = vweird.f32 %v5128
          %vm5135 = vmor %vm5133, %vm5134
          %v5136 = vsel %vm5135, %v5128, %v5132
          %v5137 = vand.u32 2147483647, %v5014
          %vm5138 = vcmp.eq.f32.partialorder %v5137, 8.507059e+37
          %v5139 = vand.u32 %v5014, 2147483648
          %v5140 = vor.u32 1.1754944e-38, %v5139
          %v5141 = vsel %vm5138, %v5140, %v5136
          %v5142 = vmul.f32 1.0, %v5141
          %v5143 = vrcp.pop %v5015
          %v5144 = vmul.f32 %v5015, %v5143
          %v5145 = vsub.f32 1.0, %v5144
          %v5146 = vmul.f32 %v5143, %v5145
          %v5147 = vadd.f32 %v5143, %v5146
          %vm5148 = vweird.f32 %v5015
          %vm5149 = vweird.f32 %v5143
          %vm5150 = vmor %vm5148, %vm5149
          %v5151 = vsel %vm5150, %v5143, %v5147
          %v5152 = vand.u32 2147483647, %v5015
          %vm5153 = vcmp.eq.f32.partialorder %v5152, 8.507059e+37
          %v5154 = vand.u32 %v5015, 2147483648
          %v5155 = vor.u32 1.1754944e-38, %v5154
          %v5156 = vsel %vm5153, %v5155, %v5151
          %v5157 = vmul.f32 1.0, %v5156
          %v5158 = vrcp.pop %v5016
          %v5159 = vmul.f32 %v5016, %v5158
          %v5160 = vsub.f32 1.0, %v5159
          %v5161 = vmul.f32 %v5158, %v5160
          %v5162 = vadd.f32 %v5158, %v5161
          %vm5163 = vweird.f32 %v5016
          %vm5164 = vweird.f32 %v5158
          %vm5165 = vmor %vm5163, %vm5164
          %v5166 = vsel %vm5165, %v5158, %v5162
          %v5167 = vand.u32 2147483647, %v5016
          %vm5168 = vcmp.eq.f32.partialorder %v5167, 8.507059e+37
          %v5169 = vand.u32 %v5016, 2147483648
          %v5170 = vor.u32 1.1754944e-38, %v5169
          %v5171 = vsel %vm5168, %v5170, %v5166
          %v5172 = vmul.f32 1.0, %v5171
          %v5173 = vrcp.pop %v5017
          %v5174 = vmul.f32 %v5017, %v5173
          %v5175 = vsub.f32 1.0, %v5174
          %v5176 = vmul.f32 %v5173, %v5175
          %v5177 = vadd.f32 %v5173, %v5176
          %vm5178 = vweird.f32 %v5017
          %vm5179 = vweird.f32 %v5173
          %vm5180 = vmor %vm5178, %vm5179
          %v5181 = vsel %vm5180, %v5173, %v5177
          %v5182 = vand.u32 2147483647, %v5017
          %vm5183 = vcmp.eq.f32.partialorder %v5182, 8.507059e+37
          %v5184 = vand.u32 %v5017, 2147483648
          %v5185 = vor.u32 1.1754944e-38, %v5184
          %v5186 = vsel %vm5183, %v5185, %v5181
          %v5187 = vmul.f32 1.0, %v5186
          %v5188 = vrcp.pop %v5018
          %v5189 = vmul.f32 %v5018, %v5188
          %v5190 = vsub.f32 1.0, %v5189
          %v5191 = vmul.f32 %v5188, %v5190
          %v5192 = vadd.f32 %v5188, %v5191
          %vm5193 = vweird.f32 %v5018
          %vm5194 = vweird.f32 %v5188
          %vm5195 = vmor %vm5193, %vm5194
          %v5196 = vsel %vm5195, %v5188, %v5192
          %v5197 = vand.u32 2147483647, %v5018
          %vm5198 = vcmp.eq.f32.partialorder %v5197, 8.507059e+37
          %v5199 = vand.u32 %v5018, 2147483648
          %v5200 = vor.u32 1.1754944e-38, %v5199
          %v5201 = vsel %vm5198, %v5200, %v5196
          %v5202 = vmul.f32 1.0, %v5201
          %v5203 = vrcp.pop %v5019
          %v5204 = vmul.f32 %v5019, %v5203
          %v5205 = vsub.f32 1.0, %v5204
          %v5206 = vmul.f32 %v5203, %v5205
          %v5207 = vadd.f32 %v5203, %v5206
          %vm5208 = vweird.f32 %v5019
          %vm5209 = vweird.f32 %v5203
          %vm5210 = vmor %vm5208, %vm5209
          %v5211 = vsel %vm5210, %v5203, %v5207
          %v5212 = vand.u32 2147483647, %v5019
          %vm5213 = vcmp.eq.f32.partialorder %v5212, 8.507059e+37
          %v5214 = vand.u32 %v5019, 2147483648
          %v5215 = vor.u32 1.1754944e-38, %v5214
          %v5216 = vsel %vm5213, %v5215, %v5211
          %v5217 = vmul.f32 1.0, %v5216
          %v5218 = vrcp.pop %v5020
          %v5219 = vmul.f32 %v5020, %v5218
          %v5220 = vsub.f32 1.0, %v5219
          %v5221 = vmul.f32 %v5218, %v5220
          %v5222 = vadd.f32 %v5218, %v5221
          %vm5223 = vweird.f32 %v5020
          %vm5224 = vweird.f32 %v5218
          %vm5225 = vmor %vm5223, %vm5224
          %v5226 = vsel %vm5225, %v5218, %v5222
          %v5227 = vand.u32 2147483647, %v5020
          %vm5228 = vcmp.eq.f32.partialorder %v5227, 8.507059e+37
          %v5229 = vand.u32 %v5020, 2147483648
          %v5230 = vor.u32 1.1754944e-38, %v5229
          %v5231 = vsel %vm5228, %v5230, %v5226
          %v5232 = vmul.f32 1.0, %v5231
          %v5233 = vrcp.pop %v5021
          %v5234 = vmul.f32 %v5021, %v5233
          %v5235 = vsub.f32 1.0, %v5234
          %v5236 = vmul.f32 %v5233, %v5235
          %v5237 = vadd.f32 %v5233, %v5236
          %vm5238 = vweird.f32 %v5021
          %vm5239 = vweird.f32 %v5233
          %vm5240 = vmor %vm5238, %vm5239
          %v5241 = vsel %vm5240, %v5233, %v5237
          %v5242 = vand.u32 2147483647, %v5021
          %vm5243 = vcmp.eq.f32.partialorder %v5242, 8.507059e+37
          %v5244 = vand.u32 %v5021, 2147483648
          %v5245 = vor.u32 1.1754944e-38, %v5244
          %v5246 = vsel %vm5243, %v5245, %v5241
          %v5247 = vmul.f32 1.0, %v5246
          %v5248 = vrcp.pop %v5022
          %v5249 = vmul.f32 %v5022, %v5248
          %v5250 = vsub.f32 1.0, %v5249
          %v5251 = vmul.f32 %v5248, %v5250
          %v5252 = vadd.f32 %v5248, %v5251
          %vm5253 = vweird.f32 %v5022
          %vm5254 = vweird.f32 %v5248
          %vm5255 = vmor %vm5253, %vm5254
          %v5256 = vsel %vm5255, %v5248, %v5252
          %v5257 = vand.u32 2147483647, %v5022
          %vm5258 = vcmp.eq.f32.partialorder %v5257, 8.507059e+37
          %v5259 = vand.u32 %v5022, 2147483648
          %v5260 = vor.u32 1.1754944e-38, %v5259
          %v5261 = vsel %vm5258, %v5260, %v5256
          %v5262 = vmul.f32 1.0, %v5261
          %v5263 = vmul.f32 %v4717, %v4584
          %v5264 = vmul.f32 %v4732, %v4586
          %v5265 = vmul.f32 %v4747, %v4589
          %v5266 = vmul.f32 %v4762, %v4591
          %v5267 = vmul.f32 %v4777, %v4594
          %v5268 = vmul.f32 %v4792, %v4596
          %v5269 = vmul.f32 %v4807, %v4599
          %v5270 = vmul.f32 %v4822, %v4601
          %v5271 = vmul.f32 %v4837, %v4604
          %v5272 = vmul.f32 %v4852, %v4606
          %v5273 = vmul.f32 %v4867, %v4609
          %v5274 = vmul.f32 %v4882, %v4611
          %v5275 = vmul.f32 %v4897, %v4614
          %v5276 = vmul.f32 %v4912, %v4616
          %v5277 = vmul.f32 %v4927, %v4619
          %v5278 = vmul.f32 %v4942, %v4621
          %v5279 = vadd.f32 %v2456, %v5263
          %v5280 = vadd.f32 %v2458, %v5264
          %v5281 = vadd.f32 %v2461, %v5265
          %v5282 = vadd.f32 %v2463, %v5266
          %v5283 = vadd.f32 %v2466, %v5267
          %v5284 = vadd.f32 %v2468, %v5268
          %v5285 = vadd.f32 %v2471, %v5269
          %v5286 = vadd.f32 %v2473, %v5270
          %v5287 = vadd.f32 %v2476, %v5271
          %v5288 = vadd.f32 %v2478, %v5272
          %v5289 = vadd.f32 %v2481, %v5273
          %v5290 = vadd.f32 %v2483, %v5274
          %v5291 = vadd.f32 %v2486, %v5275
          %v5292 = vadd.f32 %v2488, %v5276
          %v5293 = vadd.f32 %v2491, %v5277
          %v5294 = vadd.f32 %v2493, %v5278
          %v5295 = vtanh.pop %v5279
          %v5296 = vtanh.pop %v5280
          %v5297 = vtanh.pop %v5281
          %v5298 = vtanh.pop %v5282
          %v5299 = vtanh.pop %v5283
          %v5300 = vtanh.pop %v5284
          %v5301 = vtanh.pop %v5285
          %v5302 = vtanh.pop %v5286
          %v5303 = vtanh.pop %v5287
          %v5304 = vtanh.pop %v5288
          %v5305 = vtanh.pop %v5289
          %v5306 = vtanh.pop %v5290
          %v5307 = vtanh.pop %v5291
          %v5308 = vtanh.pop %v5292
          %v5309 = vtanh.pop %v5293
          %v5310 = vtanh.pop %v5294
          %v5311 = vsub.f32 1.0, %v5037
          %v5312 = vsub.f32 1.0, %v5052
          %v5313 = vsub.f32 1.0, %v5067
          %v5314 = vsub.f32 1.0, %v5082
          %v5315 = vsub.f32 1.0, %v5097
          %v5316 = vsub.f32 1.0, %v5112
          %v5317 = vsub.f32 1.0, %v5127
          %v5318 = vsub.f32 1.0, %v5142
          %v5319 = vsub.f32 1.0, %v5157
          %v5320 = vsub.f32 1.0, %v5172
          %v5321 = vsub.f32 1.0, %v5187
          %v5322 = vsub.f32 1.0, %v5202
          %v5323 = vsub.f32 1.0, %v5217
          %v5324 = vsub.f32 1.0, %v5232
          %v5325 = vsub.f32 1.0, %v5247
          %v5326 = vsub.f32 1.0, %v5262
          %v5327 = vmul.f32 %v5311, %v5295
          %v5328 = vmul.f32 %v5312, %v5296
          %v5329 = vmul.f32 %v5313, %v5297
          %v5330 = vmul.f32 %v5314, %v5298
          %v5331 = vmul.f32 %v5315, %v5299
          %v5332 = vmul.f32 %v5316, %v5300
          %v5333 = vmul.f32 %v5317, %v5301
          %v5334 = vmul.f32 %v5318, %v5302
          %v5335 = vmul.f32 %v5319, %v5303
          %v5336 = vmul.f32 %v5320, %v5304
          %v5337 = vmul.f32 %v5321, %v5305
          %v5338 = vmul.f32 %v5322, %v5306
          %v5339 = vmul.f32 %v5323, %v5307
          %v5340 = vmul.f32 %v5324, %v5308
          %v5341 = vmul.f32 %v5325, %v5309
          %v5342 = vmul.f32 %v5326, %v5310
          %v5343 = vmul.f32 %v5037, %v4436
          %v5344 = vmul.f32 %v5052, %v4437
          %v5345 = vmul.f32 %v5067, %v4438
          %v5346 = vmul.f32 %v5082, %v4439
          %v5347 = vmul.f32 %v5097, %v4440
          %v5348 = vmul.f32 %v5112, %v4441
          %v5349 = vmul.f32 %v5127, %v4442
          %v5350 = vmul.f32 %v5142, %v4443
          %v5351 = vmul.f32 %v5157, %v4444
          %v5352 = vmul.f32 %v5172, %v4445
          %v5353 = vmul.f32 %v5187, %v4446
          %v5354 = vmul.f32 %v5202, %v4447
          %v5355 = vmul.f32 %v5217, %v4448
          %v5356 = vmul.f32 %v5232, %v4449
          %v5357 = vmul.f32 %v5247, %v4450
          %v5358 = vmul.f32 %v5262, %v4451
          %v5359 = vadd.f32 %v5327, %v5343
          %v5360 = vadd.f32 %v5328, %v5344
          %v5361 = vadd.f32 %v5329, %v5345
          %v5362 = vadd.f32 %v5330, %v5346
          %v5363 = vadd.f32 %v5331, %v5347
          %v5364 = vadd.f32 %v5332, %v5348
          %v5365 = vadd.f32 %v5333, %v5349
          %v5366 = vadd.f32 %v5334, %v5350
          %v5367 = vadd.f32 %v5335, %v5351
          %v5368 = vadd.f32 %v5336, %v5352
          %v5369 = vadd.f32 %v5337, %v5353
          %v5370 = vadd.f32 %v5338, %v5354
          %v5371 = vadd.f32 %v5339, %v5355
          %v5372 = vadd.f32 %v5340, %v5356
          %v5373 = vadd.f32 %v5341, %v5357
          %v5374 = vadd.f32 %v5342, %v5358
          %v5375 = vadd.f32 %v4452, %v5359
          %v5376 = vadd.f32 %v4453, %v5360
          %v5377 = vadd.f32 %v4454, %v5361
          %v5378 = vadd.f32 %v4455, %v5362
          %v5379 = vadd.f32 %v4456, %v5363
          %v5380 = vadd.f32 %v4457, %v5364
          %v5381 = vadd.f32 %v4458, %v5365
          %v5382 = vadd.f32 %v4459, %v5366
          %v5383 = vadd.f32 %v4460, %v5367
          %v5384 = vadd.f32 %v4461, %v5368
          %v5385 = vadd.f32 %v4462, %v5369
          %v5386 = vadd.f32 %v4463, %v5370
          %v5387 = vadd.f32 %v4464, %v5371
          %v5388 = vadd.f32 %v4465, %v5372
          %v5389 = vadd.f32 %v4466, %v5373
          %v5390 = vadd.f32 %v4467, %v5374
          %v5391 = vpack.c.bf16 %v5375, %v5375
          %v5392 = vpack.c.bf16 %v5376, %v5376
          %v5393 = vpack.c.bf16 %v5377, %v5377
          %v5394 = vpack.c.bf16 %v5378, %v5378
          %v5395 = vpack.c.bf16 %v5379, %v5379
          %v5396 = vpack.c.bf16 %v5380, %v5380
          %v5397 = vpack.c.bf16 %v5381, %v5381
          %v5398 = vpack.c.bf16 %v5382, %v5382
          %v5399 = vpack.c.bf16 %v5383, %v5383
          %v5400 = vpack.c.bf16 %v5384, %v5384
          %v5401 = vpack.c.bf16 %v5385, %v5385
          %v5402 = vpack.c.bf16 %v5386, %v5386
          %v5403 = vpack.c.bf16 %v5387, %v5387
          %v5404 = vpack.c.bf16 %v5388, %v5388
          %v5405 = vpack.c.bf16 %v5389, %v5389
          %v5406 = vpack.c.bf16 %v5390, %v5390
          %s5407 = smul.addr %s502, 4
          %s5408 = scalar_lea.vmem [#allocation4], %s5407
          %5409 = vst [vmem:[%s5408] sm:$0xf] %v5391
          %5410 = vst [vmem:[%s5408 + $0x4] sm:$0xf] %v5392
          %5411 = vst [vmem:[%s5408 + $0x8] sm:$0xf] %v5393
          %5412 = vst [vmem:[%s5408 + $0xc] sm:$0xf] %v5394
          %5413 = vst [vmem:[%s5408 + $0x10] sm:$0xf] %v5395
          %5414 = vst [vmem:[%s5408 + $0x14] sm:$0xf] %v5396
          %5415 = vst [vmem:[%s5408 + $0x18] sm:$0xf] %v5397
          %5416 = vst [vmem:[%s5408 + $0x1c] sm:$0xf] %v5398
          %5417 = vst [vmem:[%s5408 + $0x20] sm:$0xf] %v5399
          %5418 = vst [vmem:[%s5408 + $0x24] sm:$0xf] %v5400
          %5419 = vst [vmem:[%s5408 + $0x28] sm:$0xf] %v5401
          %5420 = vst [vmem:[%s5408 + $0x2c] sm:$0xf] %v5402
          %5421 = vst [vmem:[%s5408 + $0x30] sm:$0xf] %v5403
          %5422 = vst [vmem:[%s5408 + $0x34] sm:$0xf] %v5404
          %5423 = vst [vmem:[%s5408 + $0x38] sm:$0xf] %v5405
          %5424 = vst [vmem:[%s5408 + $0x3c] sm:$0xf] %v5406
          %p5425 = scmp.eq.s32.totalorder %s27, 2
          // Predicated region
          $region74: #{tpu_custom_call.1} parent=70 // pred_check
            %p5426 = pneg %p5425
          $region75: #{tpu_custom_call.1} parent=70 // pred_check_branch
            %5428 = sbr.rel (%p5426) target = $region77
          $region76: #{tpu_custom_call.1} parent=70 // pred_region
            %s5429 = scalar_lea.vmem [#allocation13], %s437
            %5430 = vst [vmem:[%s5429] sm:$0xff] %v5375
            %5431 = vst [vmem:[%s5429 + $0x8] sm:$0xff] %v5376
            %5432 = vst [vmem:[%s5429 + $0x10] sm:$0xff] %v5377
            %5433 = vst [vmem:[%s5429 + $0x18] sm:$0xff] %v5378
            %5434 = vst [vmem:[%s5429 + $0x20] sm:$0xff] %v5379
            %5435 = vst [vmem:[%s5429 + $0x28] sm:$0xff] %v5380
            %5436 = vst [vmem:[%s5429 + $0x30] sm:$0xff] %v5381
            %5437 = vst [vmem:[%s5429 + $0x38] sm:$0xff] %v5382
            %5438 = vst [vmem:[%s5429 + $0x40] sm:$0xff] %v5383
            %5439 = vst [vmem:[%s5429 + $0x48] sm:$0xff] %v5384
            %5440 = vst [vmem:[%s5429 + $0x50] sm:$0xff] %v5385
            %5441 = vst [vmem:[%s5429 + $0x58] sm:$0xff] %v5386
            %5442 = vst [vmem:[%s5429 + $0x60] sm:$0xff] %v5387
            %5443 = vst [vmem:[%s5429 + $0x68] sm:$0xff] %v5388
            %5444 = vst [vmem:[%s5429 + $0x70] sm:$0xff] %v5389
            %5445 = vst [vmem:[%s5429 + $0x78] sm:$0xff] %v5390
          $region77: #{tpu_custom_call.1} parent=70 // pred_fallthru
            _
        $region71: #{tpu_custom_call.1} parent=35 // loop_footer
          %s436 = sadd.s32 1, %s432
        $region72: #{tpu_custom_call.1} parent=35 // loop_footer_branch
          %431 = sbr.rel target = $region68
        $region73: #{tpu_custom_call.1} parent=35 // loop_exit
          _
        %v5446 = vld [vmem:[#allocation4] sm:$0xf]
        %v5447 = vld [vmem:[#allocation4 + $0x4] sm:$0xf]
        %v5448 = vld [vmem:[#allocation4 + $0x8] sm:$0xf]
        %v5449 = vld [vmem:[#allocation4 + $0xc] sm:$0xf]
        %v5450 = vld [vmem:[#allocation4 + $0x10] sm:$0xf]
        %v5451 = vld [vmem:[#allocation4 + $0x14] sm:$0xf]
        %v5452 = vld [vmem:[#allocation4 + $0x18] sm:$0xf]
        %v5453 = vld [vmem:[#allocation4 + $0x1c] sm:$0xf]
        %v5454 = vld [vmem:[#allocation4 + $0x20] sm:$0xf]
        %v5455 = vld [vmem:[#allocation4 + $0x24] sm:$0xf]
        %v5456 = vld [vmem:[#allocation4 + $0x28] sm:$0xf]
        %v5457 = vld [vmem:[#allocation4 + $0x2c] sm:$0xf]
        %v5458 = vld [vmem:[#allocation4 + $0x30] sm:$0xf]
        %v5459 = vld [vmem:[#allocation4 + $0x34] sm:$0xf]
        %v5460 = vld [vmem:[#allocation4 + $0x38] sm:$0xf]
        %v5461 = vld [vmem:[#allocation4 + $0x3c] sm:$0xf]
        %v5462 = vld [vmem:[#allocation4 + $0x40] sm:$0xf]
        %v5463 = vld [vmem:[#allocation4 + $0x44] sm:$0xf]
        %v5464 = vld [vmem:[#allocation4 + $0x48] sm:$0xf]
        %v5465 = vld [vmem:[#allocation4 + $0x4c] sm:$0xf]
        %v5466 = vld [vmem:[#allocation4 + $0x50] sm:$0xf]
        %v5467 = vld [vmem:[#allocation4 + $0x54] sm:$0xf]
        %v5468 = vld [vmem:[#allocation4 + $0x58] sm:$0xf]
        %v5469 = vld [vmem:[#allocation4 + $0x5c] sm:$0xf]
        %v5470 = vld [vmem:[#allocation4 + $0x60] sm:$0xf]
        %v5471 = vld [vmem:[#allocation4 + $0x64] sm:$0xf]
        %v5472 = vld [vmem:[#allocation4 + $0x68] sm:$0xf]
        %v5473 = vld [vmem:[#allocation4 + $0x6c] sm:$0xf]
        %v5474 = vld [vmem:[#allocation4 + $0x70] sm:$0xf]
        %v5475 = vld [vmem:[#allocation4 + $0x74] sm:$0xf]
        %v5476 = vld [vmem:[#allocation4 + $0x78] sm:$0xf]
        %v5477 = vld [vmem:[#allocation4 + $0x7c] sm:$0xf]
        %v5478 = vld [vmem:[#allocation4 + $0x80] sm:$0xf]
        %v5479 = vld [vmem:[#allocation4 + $0x84] sm:$0xf]
        %v5480 = vld [vmem:[#allocation4 + $0x88] sm:$0xf]
        %v5481 = vld [vmem:[#allocation4 + $0x8c] sm:$0xf]
        %v5482 = vld [vmem:[#allocation4 + $0x90] sm:$0xf]
        %v5483 = vld [vmem:[#allocation4 + $0x94] sm:$0xf]
        %v5484 = vld [vmem:[#allocation4 + $0x98] sm:$0xf]
        %v5485 = vld [vmem:[#allocation4 + $0x9c] sm:$0xf]
        %v5486 = vld [vmem:[#allocation4 + $0xa0] sm:$0xf]
        %v5487 = vld [vmem:[#allocation4 + $0xa4] sm:$0xf]
        %v5488 = vld [vmem:[#allocation4 + $0xa8] sm:$0xf]
        %v5489 = vld [vmem:[#allocation4 + $0xac] sm:$0xf]
        %v5490 = vld [vmem:[#allocation4 + $0xb0] sm:$0xf]
        %v5491 = vld [vmem:[#allocation4 + $0xb4] sm:$0xf]
        %v5492 = vld [vmem:[#allocation4 + $0xb8] sm:$0xf]
        %v5493 = vld [vmem:[#allocation4 + $0xbc] sm:$0xf]
        %v5494 = vld [vmem:[#allocation4 + $0xc0] sm:$0xf]
        %v5495 = vld [vmem:[#allocation4 + $0xc4] sm:$0xf]
        %v5496 = vld [vmem:[#allocation4 + $0xc8] sm:$0xf]
        %v5497 = vld [vmem:[#allocation4 + $0xcc] sm:$0xf]
        %v5498 = vld [vmem:[#allocation4 + $0xd0] sm:$0xf]
        %v5499 = vld [vmem:[#allocation4 + $0xd4] sm:$0xf]
        %v5500 = vld [vmem:[#allocation4 + $0xd8] sm:$0xf]
        %v5501 = vld [vmem:[#allocation4 + $0xdc] sm:$0xf]
        %v5502 = vld [vmem:[#allocation4 + $0xe0] sm:$0xf]
        %v5503 = vld [vmem:[#allocation4 + $0xe4] sm:$0xf]
        %v5504 = vld [vmem:[#allocation4 + $0xe8] sm:$0xf]
        %v5505 = vld [vmem:[#allocation4 + $0xec] sm:$0xf]
        %v5506 = vld [vmem:[#allocation4 + $0xf0] sm:$0xf]
        %v5507 = vld [vmem:[#allocation4 + $0xf4] sm:$0xf]
        %v5508 = vld [vmem:[#allocation4 + $0xf8] sm:$0xf]
        %v5509 = vld [vmem:[#allocation4 + $0xfc] sm:$0xf]
        %5510 = vst [vmem:[#allocation3] sm:$0xf] %v5446
        %5511 = vst [vmem:[#allocation3 + $0x4] sm:$0xf] %v5447
        %5512 = vst [vmem:[#allocation3 + $0x8] sm:$0xf] %v5448
        %5513 = vst [vmem:[#allocation3 + $0xc] sm:$0xf] %v5449
        %5514 = vst [vmem:[#allocation3 + $0x10] sm:$0xf] %v5450
        %5515 = vst [vmem:[#allocation3 + $0x14] sm:$0xf] %v5451
        %5516 = vst [vmem:[#allocation3 + $0x18] sm:$0xf] %v5452
        %5517 = vst [vmem:[#allocation3 + $0x1c] sm:$0xf] %v5453
        %5518 = vst [vmem:[#allocation3 + $0x20] sm:$0xf] %v5454
        %5519 = vst [vmem:[#allocation3 + $0x24] sm:$0xf] %v5455
        %5520 = vst [vmem:[#allocation3 + $0x28] sm:$0xf] %v5456
        %5521 = vst [vmem:[#allocation3 + $0x2c] sm:$0xf] %v5457
        %5522 = vst [vmem:[#allocation3 + $0x30] sm:$0xf] %v5458
        %5523 = vst [vmem:[#allocation3 + $0x34] sm:$0xf] %v5459
        %5524 = vst [vmem:[#allocation3 + $0x38] sm:$0xf] %v5460
        %5525 = vst [vmem:[#allocation3 + $0x3c] sm:$0xf] %v5461
        %5526 = vst [vmem:[#allocation3 + $0x40] sm:$0xf] %v5462
        %5527 = vst [vmem:[#allocation3 + $0x44] sm:$0xf] %v5463
        %5528 = vst [vmem:[#allocation3 + $0x48] sm:$0xf] %v5464
        %5529 = vst [vmem:[#allocation3 + $0x4c] sm:$0xf] %v5465
        %5530 = vst [vmem:[#allocation3 + $0x50] sm:$0xf] %v5466
        %5531 = vst [vmem:[#allocation3 + $0x54] sm:$0xf] %v5467
        %5532 = vst [vmem:[#allocation3 + $0x58] sm:$0xf] %v5468
        %5533 = vst [vmem:[#allocation3 + $0x5c] sm:$0xf] %v5469
        %5534 = vst [vmem:[#allocation3 + $0x60] sm:$0xf] %v5470
        %5535 = vst [vmem:[#allocation3 + $0x64] sm:$0xf] %v5471
        %5536 = vst [vmem:[#allocation3 + $0x68] sm:$0xf] %v5472
        %5537 = vst [vmem:[#allocation3 + $0x6c] sm:$0xf] %v5473
        %5538 = vst [vmem:[#allocation3 + $0x70] sm:$0xf] %v5474
        %5539 = vst [vmem:[#allocation3 + $0x74] sm:$0xf] %v5475
        %5540 = vst [vmem:[#allocation3 + $0x78] sm:$0xf] %v5476
        %5541 = vst [vmem:[#allocation3 + $0x7c] sm:$0xf] %v5477
        %5542 = vst [vmem:[#allocation3 + $0x80] sm:$0xf] %v5478
        %5543 = vst [vmem:[#allocation3 + $0x84] sm:$0xf] %v5479
        %5544 = vst [vmem:[#allocation3 + $0x88] sm:$0xf] %v5480
        %5545 = vst [vmem:[#allocation3 + $0x8c] sm:$0xf] %v5481
        %5546 = vst [vmem:[#allocation3 + $0x90] sm:$0xf] %v5482
        %5547 = vst [vmem:[#allocation3 + $0x94] sm:$0xf] %v5483
        %5548 = vst [vmem:[#allocation3 + $0x98] sm:$0xf] %v5484
        %5549 = vst [vmem:[#allocation3 + $0x9c] sm:$0xf] %v5485
        %5550 = vst [vmem:[#allocation3 + $0xa0] sm:$0xf] %v5486
        %5551 = vst [vmem:[#allocation3 + $0xa4] sm:$0xf] %v5487
        %5552 = vst [vmem:[#allocation3 + $0xa8] sm:$0xf] %v5488
        %5553 = vst [vmem:[#allocation3 + $0xac] sm:$0xf] %v5489
        %5554 = vst [vmem:[#allocation3 + $0xb0] sm:$0xf] %v5490
        %5555 = vst [vmem:[#allocation3 + $0xb4] sm:$0xf] %v5491
        %5556 = vst [vmem:[#allocation3 + $0xb8] sm:$0xf] %v5492
        %5557 = vst [vmem:[#allocation3 + $0xbc] sm:$0xf] %v5493
        %5558 = vst [vmem:[#allocation3 + $0xc0] sm:$0xf] %v5494
        %5559 = vst [vmem:[#allocation3 + $0xc4] sm:$0xf] %v5495
        %5560 = vst [vmem:[#allocation3 + $0xc8] sm:$0xf] %v5496
        %5561 = vst [vmem:[#allocation3 + $0xcc] sm:$0xf] %v5497
        %5562 = vst [vmem:[#allocation3 + $0xd0] sm:$0xf] %v5498
        %5563 = vst [vmem:[#allocation3 + $0xd4] sm:$0xf] %v5499
        %5564 = vst [vmem:[#allocation3 + $0xd8] sm:$0xf] %v5500
        %5565 = vst [vmem:[#allocation3 + $0xdc] sm:$0xf] %v5501
        %5566 = vst [vmem:[#allocation3 + $0xe0] sm:$0xf] %v5502
        %5567 = vst [vmem:[#allocation3 + $0xe4] sm:$0xf] %v5503
        %5568 = vst [vmem:[#allocation3 + $0xe8] sm:$0xf] %v5504
        %5569 = vst [vmem:[#allocation3 + $0xec] sm:$0xf] %v5505
        %5570 = vst [vmem:[#allocation3 + $0xf0] sm:$0xf] %v5506
        %5571 = vst [vmem:[#allocation3 + $0xf4] sm:$0xf] %v5507
        %5572 = vst [vmem:[#allocation3 + $0xf8] sm:$0xf] %v5508
        %5573 = vst [vmem:[#allocation3 + $0xfc] sm:$0xf] %v5509
        // Predicated region
        $region78: #{tpu_custom_call.1} parent=35 // pred_check
          %p5574 = pneg %p144
        $region79: #{tpu_custom_call.1} parent=35 // pred_check_branch
          %5576 = sbr.rel (%p5574) target = $region81
        $region80: #{tpu_custom_call.1} parent=35 // pred_region
          %5578 = vsyncadd [#allocation7], 0
          %s5579 = sshll.u32 [#allocation13], 4
          %s5580 = int_to_ptr.vmem [resolvable:$true] %s5579
          %s5581 = sshll.u32 %s6, 4
          %s5582 = int_to_ptr.hbm [resolvable:$true] %s5581
          %5587 = dma.vmem_to_hbm [thread:$0]  %s5580, 8192, %s5582, [#allocation7], 128, 128, 8
        $region81: #{tpu_custom_call.1} parent=35 // pred_fallthru
          _
        // Predicated region
        $region82: #{tpu_custom_call.1} parent=35 // pred_check
          %p5588 = pneg %p144
        $region83: #{tpu_custom_call.1} parent=35 // pred_check_branch
          %5590 = sbr.rel (%p5588) target = $region85
        $region84: #{tpu_custom_call.1} parent=35 // pred_region
          %5592 = dma.done [#allocation7], 8192
        $region85: #{tpu_custom_call.1} parent=35 // pred_fallthru
          _
      $region36: #{tpu_custom_call.1} parent=5 // pred_fallthru
        _
      %p5593 = scmp.le.s32.totalorder 2, %s22
      // Predicated region
      $region86: #{tpu_custom_call.1} parent=5 // pred_check
        %p5594 = pneg %p5593
      $region87: #{tpu_custom_call.1} parent=5 // pred_check_branch
        %5596 = sbr.rel (%p5594) target = $region89
      $region88: #{tpu_custom_call.1} parent=5 // pred_region
        %s5597 = ssub.s32 %s22, 2
      $region89: #{tpu_custom_call.1} parent=5 // pred_fallthru
        _
    $region6: #{tpu_custom_call.1} parent=1 // loop_footer
      %s26 = sadd.s32 1, %s22
    $region7: #{tpu_custom_call.1} parent=1 // loop_footer_branch
      %21 = sbr.rel target = $region3
    $region8: #{tpu_custom_call.1} parent=1 // loop_exit
      _
    %5598 = vsyncpa [#allocation6], 1
    %s5599 = scalar_lea.sflag [#allocation6], 1
    %5600 = vsyncpa %s5599, 1
    %5601 = vsyncpa [#allocation9], 1
    %s5602 = scalar_lea.sflag [#allocation9], 1
    %5603 = vsyncpa %s5602, 1
    %5604 = vsyncpa [#allocation12], 1
    %s5605 = scalar_lea.sflag [#allocation12], 1
    %5606 = vsyncpa %s5605, 1
    %5607 = vsyncpa [#allocation7], 1
    %s5608 = scalar_lea.sflag [#allocation7], 1
    %5609 = vsyncpa %s5608, 1

</llo_original>
